<compile_context>
chip_gen: v6e
topology: v6e:2x2x1
jax: 0.10.0
libtpu: 0.0.40
codegen_flags: <defaults>
</compile_context>

<pallas_src>
import numpy as np
import jax
import jax.numpy as jnp
from jax import lax
from jax.experimental import pallas as pl
from jax.experimental.pallas import tpu as pltpu

EPS = 1e-5
EXPANSION = 4


# --------------------------------------------------------------------------
# Small helpers
# --------------------------------------------------------------------------
def _round_up(x, m):
    return ((x + m - 1) // m) * m


def _pick_tile(dim, preferred, floor):
    """Largest power-of-two tile <= preferred that divides dim, else the full dim."""
    t = preferred
    while t >= floor:
        if dim % t == 0:
            return t
        t //= 2
    return dim


def _choose_m_tile(M, pref=512):
    """Return (tm, padded_M).  Keeps the MXU M-dimension large even when M has
    awkward factors (7x7 / 14x14 stages): prefer a large (>=256, mult-of-8)
    divisor of M; otherwise pad M with zero rows up to a multiple of pref."""
    m8 = _round_up(M, 8)
    if m8 <= pref:
        return m8, m8                       # single tile, tiny pad at most
    p = (min(pref, m8) // 8) * 8
    for t in range(p, 255, -8):             # largest mult-of-8 divisor >= 256
        if M % t == 0:
            return t, M
    return p, _round_up(M, p)


_VMEM_LIMIT = None


def _vmem_limit_bytes():
    """Generation-aware scoped-VMEM limit: ~75% of physical VMEM.
    -> ~48 MiB on v7x (64 MiB physical), ~96 MiB on v5e/v6e (128 MiB)."""
    cap = 128 * 1024 * 1024
    try:
        info = pltpu.get_tpu_info()
        cap = int(getattr(info, "vmem_capacity_bytes", cap)) or cap
    except Exception:
        pass
    return int(cap * 3 // 4)


def _compiler_params(dim_sem):
    global _VMEM_LIMIT
    if _VMEM_LIMIT is None:
        _VMEM_LIMIT = _vmem_limit_bytes()
    return pltpu.CompilerParams(dimension_semantics=dim_sem,
                                vmem_limit_bytes=_VMEM_LIMIT)


def _cost(flops, bytes_accessed):
    return pl.CostEstimate(flops=int(flops), transcendentals=0,
                           bytes_accessed=int(bytes_accessed))


def _fold_bn(bn):
    gamma, beta, mean, var = bn
    scale = (gamma / jnp.sqrt(var + EPS)).astype(jnp.float32)
    shift = (beta - mean * scale).astype(jnp.float32)
    return scale.reshape(1, -1), shift.reshape(1, -1)


# --------------------------------------------------------------------------
# Kernel family 1: tiled fused matmul (optional BN+ReLU prologue/epilogue,
#                  optional fused residual add), bf16 MXU / f32 accumulate.
# --------------------------------------------------------------------------
def _fused_matmul(a, b, *, pre=None, post=None, residual=None,
                  out_dtype=jnp.float32, tm=512, tn=512, tk=512):
    """out = [relu(. * post_s + post_b)] ( [relu(a*pre_s+pre_b)] @ b ) [+ residual]"""
    M, K = a.shape
    K2, Nc = b.shape
    assert K2 == K
    tm, Mp = _choose_m_tile(M, tm)
    tn = _pick_tile(Nc, tn, 128)
    tk = _pick_tile(K, tk, 128)
    if Mp != M:
        a = jnp.pad(a, ((0, Mp - M), (0, 0)))
        if residual is not None:
            residual = jnp.pad(residual, ((0, Mp - M), (0, 0)))
    grid = (Mp // tm, Nc // tn, K // tk)

    has_pre = pre is not None
    has_post = post is not None
    has_res = residual is not None

    in_specs = [pl.BlockSpec((tm, tk), lambda i, j, k: (i, k)),
                pl.BlockSpec((tk, tn), lambda i, j, k: (k, j))]
    args = [a, b]
    if has_pre:
        in_specs += [pl.BlockSpec((1, tk), lambda i, j, k: (0, k)),
                     pl.BlockSpec((1, tk), lambda i, j, k: (0, k))]
        args += [pre[0], pre[1]]
    if has_post:
        in_specs += [pl.BlockSpec((1, tn), lambda i, j, k: (0, j)),
                     pl.BlockSpec((1, tn), lambda i, j, k: (0, j))]
        args += [post[0], post[1]]
    if has_res:
        in_specs += [pl.BlockSpec((tm, tn), lambda i, j, k: (i, j))]
        args += [residual]

    def kernel(*refs):
        a_ref, b_ref = refs[0], refs[1]
        idx = 2
        if has_pre:
            pres_ref, preb_ref = refs[idx], refs[idx + 1]
            idx += 2
        if has_post:
            posts_ref, postb_ref = refs[idx], refs[idx + 1]
            idx += 2
        if has_res:
            res_ref = refs[idx]
            idx += 1
        out_ref, acc_ref = refs[idx], refs[idx + 1]

        @pl.when(pl.program_id(2) == 0)
        def _init():
            acc_ref[...] = jnp.zeros_like(acc_ref)

        av = a_ref[...]
        if has_pre:
            av = jnp.maximum(av.astype(jnp.float32) * pres_ref[...] + preb_ref[...], 0.0)
        acc_ref[...] += jnp.dot(av.astype(jnp.bfloat16), b_ref[...],
                                preferred_element_type=jnp.float32)

        @pl.when(pl.program_id(2) == pl.num_programs(2) - 1)
        def _fin():
            z = acc_ref[...]
            if has_post:
                z = jnp.maximum(z * posts_ref[...] + postb_ref[...], 0.0)
            if has_res:
                z = z + res_ref[...].astype(jnp.float32)
            out_ref[...] = z.astype(out_dtype)

    # bytes_accessed including re-streaming: A re-read Nc/tn times, B re-read Mp/tm times.
    bytes_acc = (int(a.size) * a.dtype.itemsize * (Nc // tn)
                 + int(b.size) * b.dtype.itemsize * (Mp // tm)
                 + sum(int(v.size) * v.dtype.itemsize for v in args[2:])
                 + Mp * Nc * jnp.dtype(out_dtype).itemsize)
    out = pl.pallas_call(
        kernel,
        grid=grid,
        in_specs=in_specs,
        out_specs=pl.BlockSpec((tm, tn), lambda i, j, k: (i, j)),
        out_shape=jax.ShapeDtypeStruct((Mp, Nc), out_dtype),
        scratch_shapes=[pltpu.VMEM((tm, tn), jnp.float32)],
        compiler_params=_compiler_params(("parallel", "parallel", "arbitrary")),
        cost_estimate=_cost(2 * Mp * K * Nc, bytes_acc),
    )(*args)
    return out[:M] if Mp != M else out


def _fused_matmul_2out(a, b1, b2, *, pre, post1, out1_dtype=jnp.bfloat16,
                       out2_dtype=jnp.float32, tm=512, tk=512):
    """Merged conv1 + (unstrided) 1x1 shortcut over the same relu(bn1(x)) read:
         av   = relu(a*pre_s+pre_b)
         out1 = relu((av @ b1)*post1_s + post1_b)   (conv1 -> bn2 -> relu)
         out2 = av @ b2                              (shortcut conv, raw)
    Separate weights / accumulators keep every store lane-tile aligned."""
    M, K = a.shape
    n1, n2 = b1.shape[1], b2.shape[1]
    tm, Mp = _choose_m_tile(M, tm)
    tk = _pick_tile(K, tk, 128)
    if Mp != M:
        a = jnp.pad(a, ((0, Mp - M), (0, 0)))
    grid = (Mp // tm, K // tk)

    def kernel(a_ref, b1_ref, b2_ref, pres_ref, preb_ref, posts_ref, postb_ref,
               out1_ref, out2_ref, acc1_ref, acc2_ref):
        @pl.when(pl.program_id(1) == 0)
        def _init():
            acc1_ref[...] = jnp.zeros_like(acc1_ref)
            acc2_ref[...] = jnp.zeros_like(acc2_ref)

        av = jnp.maximum(a_ref[...].astype(jnp.float32) * pres_ref[...] + preb_ref[...], 0.0)
        av = av.astype(jnp.bfloat16)
        acc1_ref[...] += jnp.dot(av, b1_ref[...], preferred_element_type=jnp.float32)
        acc2_ref[...] += jnp.dot(av, b2_ref[...], preferred_element_type=jnp.float32)

        @pl.when(pl.program_id(1) == pl.num_programs(1) - 1)
        def _fin():
            z1 = jnp.maximum(acc1_ref[...] * posts_ref[...] + postb_ref[...], 0.0)
            out1_ref[...] = z1.astype(out1_dtype)
            out2_ref[...] = acc2_ref[...].astype(out2_dtype)

    args = [a, b1, b2, pre[0], pre[1], post1[0], post1[1]]
    bytes_acc = (int(a.size) * a.dtype.itemsize
                 + (int(b1.size) * b1.dtype.itemsize
                    + int(b2.size) * b2.dtype.itemsize) * (Mp // tm)
                 + sum(int(v.size) * v.dtype.itemsize for v in args[3:])
                 + Mp * n1 * jnp.dtype(out1_dtype).itemsize
                 + Mp * n2 * jnp.dtype(out2_dtype).itemsize)
    out1, out2 = pl.pallas_call(
        kernel,
        grid=grid,
        in_specs=[pl.BlockSpec((tm, tk), lambda i, k: (i, k)),
                  pl.BlockSpec((tk, n1), lambda i, k: (k, 0)),
                  pl.BlockSpec((tk, n2), lambda i, k: (k, 0)),
                  pl.BlockSpec((1, tk), lambda i, k: (0, k)),
                  pl.BlockSpec((1, tk), lambda i, k: (0, k)),
                  pl.BlockSpec((1, n1), lambda i, k: (0, 0)),
                  pl.BlockSpec((1, n1), lambda i, k: (0, 0))],
        out_specs=[pl.BlockSpec((tm, n1), lambda i, k: (i, 0)),
                   pl.BlockSpec((tm, n2), lambda i, k: (i, 0))],
        out_shape=[jax.ShapeDtypeStruct((Mp, n1), out1_dtype),
                   jax.ShapeDtypeStruct((Mp, n2), out2_dtype)],
        scratch_shapes=[pltpu.VMEM((tm, n1), jnp.float32),
                        pltpu.VMEM((tm, n2), jnp.float32)],
        compiler_params=_compiler_params(("parallel", "arbitrary")),
        cost_estimate=_cost(2 * Mp * K * (n1 + n2), bytes_acc),
    )(*args)
    if Mp != M:
        out1, out2 = out1[:M], out2[:M]
    return out1, out2


# --------------------------------------------------------------------------
# Kernel family 2: spatial conv (KHxKW, stride s) — one grid step per batch
#                  element; weight VMEM-resident, input image read once,
#                  per-tap matmuls use M = Ho*Wo, stride folded into a grouped
#                  (H/s, s, W/s, s*C) layout so no strided slicing is needed.
# --------------------------------------------------------------------------
def _conv_spatial(x, w, *, stride, padding, pre=None, post=None,
                  out_dtype=jnp.bfloat16):
    """x: (N,H,W,C) NHWC; w: (KH,KW,C,D) bf16; pre/post: folded BN (scale, shift)."""
    N, H, W, C = x.shape
    KH, KW, C2, D = w.shape
    assert C2 == C
    s = stride
    has_pre = pre is not None
    has_post = post is not None
    # Zero padding must be applied to an already-ReLU'd activation (the PyTorch
    # module pads relu(bn2(.))); a BN prologue over padded zeros would corrupt it.
    assert not (padding and has_pre)
    if padding:
        x = jnp.pad(x, ((0, 0), (padding, padding), (padding, padding), (0, 0)))
    Hin, Win = x.shape[1], x.shape[2]
    Ho = (Hin - KH) // s + 1
    Wo = (Win - KW) // s + 1
    # Grouped (stride-folded) layout: pad H/W so every tap's row/col set lives at a
    # fixed within-group offset; alignment-pad rows/cols are never read by any tap.
    Hg = max(-(-Hin // s), (KH - 1) // s + Ho)
    Gw = max(-(-Win // s), (KW - 1) // s + Wo)
    Hp, Wp = Hg * s, Gw * s
    if (Hp, Wp) != (Hin, Win):
        x = jnp.pad(x, ((0, 0), (0, Hp - Hin), (0, Wp - Win), (0, 0)))
    xg = x.reshape(N, Hg, s, Gw, s * C)

    in_specs = [pl.BlockSpec((1, Hg, s, Gw, s * C), lambda n: (n, 0, 0, 0, 0)),
                pl.BlockSpec((KH, KW, C, D), lambda n: (0, 0, 0, 0))]   # resident weight
    args = [xg, w]
    if has_pre:
        in_specs += [pl.BlockSpec((1, C), lambda n: (0, 0)),
                     pl.BlockSpec((1, C), lambda n: (0, 0))]
        args += [pre[0], pre[1]]
    if has_post:
        in_specs += [pl.BlockSpec((1, D), lambda n: (0, 0)),
                     pl.BlockSpec((1, D), lambda n: (0, 0))]
        args += [post[0], post[1]]

    def kernel(*refs):
        x_ref, w_ref = refs[0], refs[1]
        idx = 2
        if has_pre:
            pres_ref, preb_ref = refs[idx], refs[idx + 1]
            idx += 2
        if has_post:
            posts_ref, postb_ref = refs[idx], refs[idx + 1]
            idx += 2
        out_ref, acc_ref = refs[idx], refs[idx + 1]

        first = True
        for ky in range(KH):                       # KH folded into the kernel:
            gy0, ry = ky // s, ky % s              # each input row is read once from HBM.
            rows = x_ref[:, gy0:gy0 + Ho, ry:ry + 1, :, :].reshape(Ho, Gw, s * C)
            for kx in range(KW):
                gx0, cx0 = kx // s, (kx % s) * C
                a = rows[:, gx0:gx0 + Wo, cx0:cx0 + C].reshape(Ho * Wo, C)
                if has_pre:                        # fused ReLU(BN) prologue
                    a = jnp.maximum(a.astype(jnp.float32) * pres_ref[...]
                                    + preb_ref[...], 0.0)
                contrib = jnp.dot(a.astype(jnp.bfloat16), w_ref[ky, kx],
                                  preferred_element_type=jnp.float32)
                if first:
                    acc_ref[...] = contrib
                    first = False
                else:
                    acc_ref[...] += contrib

        z = acc_ref[...]
        if has_post:                               # fused ReLU(BN) epilogue
            z = jnp.maximum(z * posts_ref[...] + postb_ref[...], 0.0)
        out_ref[...] = z.reshape(1, Ho, Wo, D).astype(out_dtype)

    bytes_acc = (int(xg.size) * xg.dtype.itemsize          # activations read once
                 + int(w.size) * w.dtype.itemsize          # weight read once (resident)
                 + sum(int(v.size) * v.dtype.itemsize for v in args[2:])
                 + N * Ho * Wo * D * jnp.dtype(out_dtype).itemsize)
    return pl.pallas_call(
        kernel,
        grid=(N,),
        in_specs=in_specs,
        out_specs=pl.BlockSpec((1, Ho, Wo, D), lambda n: (n, 0, 0, 0)),
        out_shape=jax.ShapeDtypeStruct((N, Ho, Wo, D), out_dtype),
        scratch_shapes=[pltpu.VMEM((Ho * Wo, D), jnp.float32)],
        compiler_params=_compiler_params(("parallel",)),
        cost_estimate=_cost(2 * N * Ho * Wo * KH * KW * C * D, bytes_acc),
    )(*args)


# --------------------------------------------------------------------------
# PreActBottleneck forward
# --------------------------------------------------------------------------
def preact_bottleneck_nhwc(x, params, stride):
    """Pre-activation bottleneck, channels-last. x: (N, H, W, Cin) float32.
    (A full network would keep activations NHWC/bf16 between blocks; the kernels
    already upcast to f32 before any BN prologue so bf16 inputs also work.)"""
    N, H, W, Cin = x.shape
    planes = params["w1"].shape[1]
    Cout = EXPANSION * planes
    s1 = _fold_bn(params["bn1"])
    s2 = _fold_bn(params["bn2"])
    s3 = _fold_bn(params["bn3"])
    w1 = params["w1"].astype(jnp.bfloat16)                 # (Cin, planes)
    w2 = params["w2"].astype(jnp.bfloat16)                 # (3, 3, planes, planes)
    w3 = params["w3"].astype(jnp.bfloat16)                 # (planes, Cout)
    has_sc = (stride != 1) or (Cin != Cout)

    x2 = x.reshape(N * H * W, Cin)

    if has_sc and stride == 1:
        # conv1 and the shortcut read the same relu(bn1(x)): one fused kernel,
        # two outputs; bn2+relu applied only to the conv1 output.
        w_sc = params["w_sc"].astype(jnp.bfloat16)         # (Cin, Cout)
        h1_2d, sc2d = _fused_matmul_2out(x2, w1, w_sc, pre=s1, post1=s2,
                                         out1_dtype=jnp.bfloat16,
                                         out2_dtype=jnp.float32)
        h1 = h1_2d.reshape(N, H, W, planes)
    else:
        # h1 = relu(bn2(conv1(relu(bn1(x))))) in one fused matmul (bf16 out).
        h1_2d = _fused_matmul(x2, w1, pre=s1, post=s2, out_dtype=jnp.bfloat16)
        h1 = h1_2d.reshape(N, H, W, planes)
        if has_sc:   # stride != 1: strided 1x1 shortcut, stride folded into the layout
            w_sc = params["w_sc"].astype(jnp.bfloat16).reshape(1, 1, Cin, Cout)
            sc4 = _conv_spatial(x, w_sc, stride=stride, padding=0,
                                pre=s1, post=None, out_dtype=jnp.float32)
            sc2d = sc4.reshape(-1, Cout)
        else:        # identity shortcut (pre-BN x, as in the PyTorch module)
            sc2d = x2

    # conv2: 3x3, stride, pad=1, with bn3+relu fused as epilogue; no im2col in HBM,
    # weight VMEM-resident, input read once per image.
    h2_4 = _conv_spatial(h1, w2, stride=stride, padding=1,
                         pre=None, post=s3, out_dtype=jnp.bfloat16)
    Ho, Wo = h2_4.shape[1], h2_4.shape[2]
    h2 = h2_4.reshape(N * Ho * Wo, planes)

    assert sc2d.shape == (N * Ho * Wo, Cout)
    # conv3 with the residual add fused into the finalize step.
    # TODO(synk): for inter-block use, out_dtype=bf16 here halves the writeback
    # stream; kept f32 to match the f32 reference tolerance in this script.
    y2 = _fused_matmul(h2, w3, pre=None, post=None, residual=sc2d,
                       out_dtype=jnp.float32)
    return y2.reshape(N, Ho, Wo, Cout)


def preact_bottleneck(x_nchw, params, stride):
    # Thin NCHW wrapper for PyTorch layout parity.  A full network should keep
    # activations NHWC and call preact_bottleneck_nhwc directly so the layout
    # transposes are paid once per network, not once per block.
    x = jnp.transpose(x_nchw, (0, 2, 3, 1)).astype(jnp.float32)
    y = preact_bottleneck_nhwc(x, params, stride)
    return jnp.transpose(y, (0, 3, 1, 2))


# --------------------------------------------------------------------------
# Pure-JAX f32 reference for validation
# --------------------------------------------------------------------------
def reference_forward(x_nchw, params, stride):
    dn = ("NHWC", "HWIO", "NHWC")

    def bnr(x, p):
        g, b, m, v = p
        return jnp.maximum((x - m) / jnp.sqrt(v + EPS) * g + b, 0.0)

    x = jnp.transpose(x_nchw, (0, 2, 3, 1)).astype(jnp.float32)
    in_planes = x.shape[-1]
    planes = params["w1"].shape[1]
    out = bnr(x, params["bn1"])
    if stride != 1 or in_planes != EXPANSION * planes:
        sc = lax.conv_general_dilated(out, params["w_sc"][None, None],
                                      (stride, stride), "VALID",
                                      dimension_numbers=dn)
    else:
        sc = x
    h = lax.conv_general_dilated(out, params["w1"][None, None], (1, 1), "VALID",
                                 dimension_numbers=dn)
    h = bnr(h, params["bn2"])
    h = lax.conv_general_dilated(h, params["w2"], (stride, stride),
                                 ((1, 1), (1, 1)), dimension_numbers=dn)
    h = bnr(h, params["bn3"])
    h = lax.conv_general_dilated(h, params["w3"][None, None], (1, 1), "VALID",
                                 dimension_numbers=dn)
    return jnp.transpose(h + sc, (0, 3, 1, 2))


# --------------------------------------------------------------------------
# Deterministic parameter construction
# --------------------------------------------------------------------------
def make_params(key, in_planes, planes, stride):
    keys = jax.random.split(key, 16)

    def bn(kg, kb, km, kv, c):
        gamma = jax.random.uniform(kg, (c,), jnp.float32, 0.5, 1.5)
        beta = 0.1 * jax.random.normal(kb, (c,), jnp.float32)
        mean = 0.1 * jax.random.normal(km, (c,), jnp.float32)
        var = jax.random.uniform(kv, (c,), jnp.float32, 0.5, 1.5)
        return (gamma, beta, mean, var)

    out_planes = EXPANSION * planes
    params = {
        "bn1": bn(keys[0], keys[1], keys[2], keys[3], in_planes),
        "w1": 0.1 * jax.random.normal(keys[4], (in_planes, planes), jnp.float32),
        "bn2": bn(keys[5], keys[6], keys[7], keys[8], planes),
        "w2": 0.1 * jax.random.normal(keys[9], (3, 3, planes, planes), jnp.float32),
        "bn3": bn(keys[10], keys[11], keys[12], keys[13], planes),
        "w3": 0.1 * jax.random.normal(keys[14], (planes, out_planes), jnp.float32),
    }
    if stride != 1 or in_planes != out_planes:
        params["w_sc"] = 0.1 * jax.random.normal(
            keys[15], (in_planes, out_planes), jnp.float32)
    return params


if __name__ == "__main__":
    key = jax.random.PRNGKey(0)

    # (N, in_planes, H, W, planes, stride) -- exercises all three shortcut paths:
    configs = [
        (2, 16, 16, 16, 8, 2),   # strided 1x1 shortcut (stride folded into layout)
        (2, 16, 16, 16, 8, 1),   # channel-changing shortcut, merged with conv1
        (2, 32, 16, 16, 8, 1),   # identity shortcut
    ]
    fwd = jax.jit(preact_bottleneck, static_argnums=2)
    for idx, (N, in_planes, H, W, planes, stride) in enumerate(configs):
        k_x, k_p = jax.random.split(jax.random.fold_in(key, idx))
        x = jax.random.normal(k_x, (N, in_planes, H, W), jnp.float32)  # NCHW like PyTorch
        params = make_params(k_p, in_planes, planes, stride)

        y = jax.block_until_ready(fwd(x, params, stride))
        y_ref = jax.block_until_ready(reference_forward(x, params, stride))

        Ho = (H + 2 - 3) // stride + 1
        assert y.shape == (N, EXPANSION * planes, Ho, Ho), y.shape
        # bf16 MXU operands vs. the f32 reference -> slightly loosened tolerance.
        np.testing.assert_allclose(np.asarray(y), np.asarray(y_ref),
                                   rtol=2e-2, atol=2e-2)

    print("KERNEL_OK")
</pallas_src>

<mosaic_0001>
module attributes {stable_mosaic.version = 11 : i64} {
  func.func @kernel(%arg0: i32, %arg1: i32, %arg2: i32, %arg3: memref<512x16xf32, #tpu.memory_space<vmem>>, %arg4: memref<16x8xbf16, #tpu.memory_space<vmem>>, %arg5: memref<1x16xf32, #tpu.memory_space<vmem>>, %arg6: memref<1x16xf32, #tpu.memory_space<vmem>>, %arg7: memref<1x8xf32, #tpu.memory_space<vmem>>, %arg8: memref<1x8xf32, #tpu.memory_space<vmem>>, %arg9: memref<512x8xbf16, #tpu.memory_space<vmem>>, %arg10: memref<512x8xf32, #tpu.memory_space<vmem>>) attributes {dimension_semantics = [#tpu.dimension_semantics<parallel>, #tpu.dimension_semantics<parallel>, #tpu.dimension_semantics<arbitrary>], iteration_bounds = array<i64: 1, 1, 1>, scalar_prefetch = 0 : i64, scratch_operands = 1 : i64, tpu.core_type = #tpu.core_type<tc>, window_params = [{transform_indices = @transform_0, window_bounds = array<i64: 512, 16>}, {transform_indices = @transform_1, window_bounds = array<i64: 16, 8>}, {transform_indices = @transform_2, window_bounds = array<i64: 1, 16>}, {transform_indices = @transform_3, window_bounds = array<i64: 1, 16>}, {transform_indices = @transform_4, window_bounds = array<i64: 1, 8>}, {transform_indices = @transform_5, window_bounds = array<i64: 1, 8>}, {transform_indices = @transform_6, window_bounds = array<i64: 512, 8>}]} {
    %c0_i32 = arith.constant 0 : i32
    %0 = arith.cmpi eq, %arg2, %c0_i32 : i32
    %1 = arith.extui %0 : i1 to i32
    %c0_i32_0 = arith.constant 0 : i32
    %2 = arith.cmpi ne, %1, %c0_i32_0 : i32
    scf.if %2 {
      %cst_15 = arith.constant 0.000000e+00 : f32
      %21 = vector.broadcast %cst_15 : f32 to vector<512x8xf32>
      %c0_16 = arith.constant 0 : index
      %c0_17 = arith.constant 0 : index
      %22 = vector.load %arg10[%c0_16, %c0_17] : memref<512x8xf32, #tpu.memory_space<vmem>>, vector<512x8xf32>
      tpu.vector_store %arg10[%c0_16, %c0_17], %21 {strides = array<i32>} : memref<512x8xf32, #tpu.memory_space<vmem>>, vector<512x8xf32>,
    } else {
    }
    %c0 = arith.constant 0 : index
    %c0_1 = arith.constant 0 : index
    %3 = vector.load %arg3[%c0, %c0_1] : memref<512x16xf32, #tpu.memory_space<vmem>>, vector<512x16xf32>
    %c0_2 = arith.constant 0 : index
    %c0_3 = arith.constant 0 : index
    %4 = vector.load %arg5[%c0_2, %c0_3] : memref<1x16xf32, #tpu.memory_space<vmem>>, vector<1x16xf32>
    %5 = vector.broadcast %4 : vector<1x16xf32> to vector<512x16xf32>
    %6 = arith.mulf %3, %5 : vector<512x16xf32>
    %c0_4 = arith.constant 0 : index
    %c0_5 = arith.constant 0 : index
    %7 = vector.load %arg6[%c0_4, %c0_5] : memref<1x16xf32, #tpu.memory_space<vmem>>, vector<1x16xf32>
    %8 = vector.broadcast %7 : vector<1x16xf32> to vector<512x16xf32>
    %9 = arith.addf %6, %8 : vector<512x16xf32>
    %cst = arith.constant 0.000000e+00 : f32
    %10 = vector.broadcast %cst : f32 to vector<512x16xf32>
    %11 = arith.maximumf %9, %10 : vector<512x16xf32>
    %c0_6 = arith.constant 0 : index
    %c0_7 = arith.constant 0 : index
    %12 = vector.load %arg10[%c0_6, %c0_7] : memref<512x8xf32, #tpu.memory_space<vmem>>, vector<512x8xf32>
    %13 = arith.truncf %11 : vector<512x16xf32> to vector<512x16xbf16>
    %c0_8 = arith.constant 0 : index
    %c0_9 = arith.constant 0 : index
    %14 = vector.load %arg4[%c0_8, %c0_9] : memref<16x8xbf16, #tpu.memory_space<vmem>>, vector<16x8xbf16>
    %cst_10 = arith.constant dense<0.000000e+00> : vector<512x8xf32>
    %15 = tpu.matmul %13, %14, %cst_10 {dimension_numbers = #tpu.dot_dimension_numbers<[1], [0], [0], [1], [0, 0, 1, 1], [], []>} : vector<512x16xbf16>, vector<16x8xbf16>, vector<512x8xf32> -> vector<512x8xf32>
    %16 = arith.addf %12, %15 : vector<512x8xf32>
    %c0_11 = arith.constant 0 : index
    %c0_12 = arith.constant 0 : index
    %17 = vector.load %arg10[%c0_11, %c0_12] : memref<512x8xf32, #tpu.memory_space<vmem>>, vector<512x8xf32>
    tpu.vector_store %arg10[%c0_11, %c0_12], %16 {strides = array<i32>} : memref<512x8xf32, #tpu.memory_space<vmem>>, vector<512x8xf32>,
    %c0_i32_13 = arith.constant 0 : i32
    %18 = arith.cmpi eq, %arg2, %c0_i32_13 : i32
    %19 = arith.extui %18 : i1 to i32
    %c0_i32_14 = arith.constant 0 : i32
    %20 = arith.cmpi ne, %19, %c0_i32_14 : i32
    scf.if %20 {
      %c0_15 = arith.constant 0 : index
      %c0_16 = arith.constant 0 : index
      %21 = vector.load %arg10[%c0_15, %c0_16] : memref<512x8xf32, #tpu.memory_space<vmem>>, vector<512x8xf32>
      %c0_17 = arith.constant 0 : index
      %c0_18 = arith.constant 0 : index
      %22 = vector.load %arg7[%c0_17, %c0_18] : memref<1x8xf32, #tpu.memory_space<vmem>>, vector<1x8xf32>
      %23 = vector.broadcast %22 : vector<1x8xf32> to vector<512x8xf32>
      %24 = arith.mulf %21, %23 : vector<512x8xf32>
      %c0_19 = arith.constant 0 : index
      %c0_20 = arith.constant 0 : index
      %25 = vector.load %arg8[%c0_19, %c0_20] : memref<1x8xf32, #tpu.memory_space<vmem>>, vector<1x8xf32>
      %26 = vector.broadcast %25 : vector<1x8xf32> to vector<512x8xf32>
      %27 = arith.addf %24, %26 : vector<512x8xf32>
      %cst_21 = arith.constant 0.000000e+00 : f32
      %28 = vector.broadcast %cst_21 : f32 to vector<512x8xf32>
      %29 = arith.maximumf %27, %28 : vector<512x8xf32>
      %30 = arith.truncf %29 : vector<512x8xf32> to vector<512x8xbf16>
      %c0_22 = arith.constant 0 : index
      %c0_23 = arith.constant 0 : index
      %31 = vector.load %arg9[%c0_22, %c0_23] : memref<512x8xbf16, #tpu.memory_space<vmem>>, vector<512x8xbf16>
      tpu.vector_store %arg9[%c0_22, %c0_23], %30 {strides = array<i32>} : memref<512x8xbf16, #tpu.memory_space<vmem>>, vector<512x8xbf16>,
    } else {
    }
    return
  }
  func.func @transform_0(%arg0: i32, %arg1: i32, %arg2: i32) -> (i32, i32) {
    %c0_i32 = arith.constant 0 : i32
    return %arg0, %arg2 : i32, i32
  }
  func.func @transform_1(%arg0: i32, %arg1: i32, %arg2: i32) -> (i32, i32) {
    %c0_i32 = arith.constant 0 : i32
    return %arg2, %arg1 : i32, i32
  }
  func.func @transform_2(%arg0: i32, %arg1: i32, %arg2: i32) -> (i32, i32) {
    %c0_i32 = arith.constant 0 : i32
    %c0_i32_0 = arith.constant 0 : i32
    return %c0_i32, %arg2 : i32, i32
  }
  func.func @transform_3(%arg0: i32, %arg1: i32, %arg2: i32) -> (i32, i32) {
    %c0_i32 = arith.constant 0 : i32
    %c0_i32_0 = arith.constant 0 : i32
    return %c0_i32, %arg2 : i32, i32
  }
  func.func @transform_4(%arg0: i32, %arg1: i32, %arg2: i32) -> (i32, i32) {
    %c0_i32 = arith.constant 0 : i32
    %c0_i32_0 = arith.constant 0 : i32
    return %c0_i32, %arg1 : i32, i32
  }
  func.func @transform_5(%arg0: i32, %arg1: i32, %arg2: i32) -> (i32, i32) {
    %c0_i32 = arith.constant 0 : i32
    %c0_i32_0 = arith.constant 0 : i32
    return %c0_i32, %arg1 : i32, i32
  }
  func.func @transform_6(%arg0: i32, %arg1: i32, %arg2: i32) -> (i32, i32) {
    %c0_i32 = arith.constant 0 : i32
    return %arg0, %arg1 : i32, i32
  }
}

module attributes {stable_mosaic.version = 11 : i64} {
  func.func @kernel(%arg0: i32, %arg1: memref<1x9x2x9x16xbf16, #tpu.memory_space<vmem>>, %arg2: memref<3x3x8x8xbf16, #tpu.memory_space<vmem>>, %arg3: memref<1x8xf32, #tpu.memory_space<vmem>>, %arg4: memref<1x8xf32, #tpu.memory_space<vmem>>, %arg5: memref<1x8x8x8xbf16, #tpu.memory_space<vmem>>, %arg6: memref<64x8xf32, #tpu.memory_space<vmem>>) attributes {dimension_semantics = [#tpu.dimension_semantics<parallel>], iteration_bounds = array<i64: 2>, scalar_prefetch = 0 : i64, scratch_operands = 1 : i64, tpu.core_type = #tpu.core_type<tc>, window_params = [{transform_indices = @transform_0, window_bounds = array<i64: 1, 9, 2, 9, 16>}, {pipeline_mode = #tpu.pipeline_mode<synchronous>, transform_indices = @transform_1, window_bounds = array<i64: 3, 3, 8, 8>}, {pipeline_mode = #tpu.pipeline_mode<synchronous>, transform_indices = @transform_2, window_bounds = array<i64: 1, 8>}, {pipeline_mode = #tpu.pipeline_mode<synchronous>, transform_indices = @transform_3, window_bounds = array<i64: 1, 8>}, {transform_indices = @transform_4, window_bounds = array<i64: 1, 8, 8, 8>}]} {
    %c0 = arith.constant 0 : index
    %c0_0 = arith.constant 0 : index
    %c0_1 = arith.constant 0 : index
    %c0_2 = arith.constant 0 : index
    %c0_3 = arith.constant 0 : index
    %0 = vector.load %arg1[%c0, %c0_0, %c0_1, %c0_2, %c0_3] : memref<1x9x2x9x16xbf16, #tpu.memory_space<vmem>>, vector<1x8x1x9x16xbf16>
    %1 = vector.shape_cast %0 : vector<1x8x1x9x16xbf16> to vector<8x9x16xbf16>
    %2 = vector.extract_strided_slice %1 {offsets = [0, 0, 0], sizes = [8, 8, 8], strides = [1, 1, 1]} : vector<8x9x16xbf16> to vector<8x8x8xbf16>
    %3 = vector.shape_cast %2 : vector<8x8x8xbf16> to vector<64x8xbf16>
    %c0_4 = arith.constant 0 : index
    %c0_5 = arith.constant 0 : index
    %c0_6 = arith.constant 0 : index
    %c0_7 = arith.constant 0 : index
    %4 = vector.load %arg2[%c0_4, %c0_5, %c0_6, %c0_7] : memref<3x3x8x8xbf16, #tpu.memory_space<vmem>>, vector<1x1x8x8xbf16>
    %5 = vector.shape_cast %4 : vector<1x1x8x8xbf16> to vector<8x8xbf16>
    %cst = arith.constant dense<0.000000e+00> : vector<64x8xf32>
    %6 = tpu.matmul %3, %5, %cst {dimension_numbers = #tpu.dot_dimension_numbers<[1], [0], [0], [1], [0, 0, 1, 1], [], []>} : vector<64x8xbf16>, vector<8x8xbf16>, vector<64x8xf32> -> vector<64x8xf32>
    %c0_8 = arith.constant 0 : index
    %c0_9 = arith.constant 0 : index
    %7 = vector.load %arg6[%c0_8, %c0_9] : memref<64x8xf32, #tpu.memory_space<vmem>>, vector<64x8xf32>
    tpu.vector_store %arg6[%c0_8, %c0_9], %6 {strides = array<i32>} : memref<64x8xf32, #tpu.memory_space<vmem>>, vector<64x8xf32>,
    %8 = vector.extract_strided_slice %1 {offsets = [0, 0, 8], sizes = [8, 8, 8], strides = [1, 1, 1]} : vector<8x9x16xbf16> to vector<8x8x8xbf16>
    %9 = vector.shape_cast %8 : vector<8x8x8xbf16> to vector<64x8xbf16>
    %c0_10 = arith.constant 0 : index
    %c1 = arith.constant 1 : index
    %c0_11 = arith.constant 0 : index
    %c0_12 = arith.constant 0 : index
    %10 = vector.load %arg2[%c0_10, %c1, %c0_11, %c0_12] : memref<3x3x8x8xbf16, #tpu.memory_space<vmem>>, vector<1x1x8x8xbf16>
    %11 = vector.shape_cast %10 : vector<1x1x8x8xbf16> to vector<8x8xbf16>
    %cst_13 = arith.constant dense<0.000000e+00> : vector<64x8xf32>
    %12 = tpu.matmul %9, %11, %cst_13 {dimension_numbers = #tpu.dot_dimension_numbers<[1], [0], [0], [1], [0, 0, 1, 1], [], []>} : vector<64x8xbf16>, vector<8x8xbf16>, vector<64x8xf32> -> vector<64x8xf32>
    %c0_14 = arith.constant 0 : index
    %c0_15 = arith.constant 0 : index
    %13 = vector.load %arg6[%c0_14, %c0_15] : memref<64x8xf32, #tpu.memory_space<vmem>>, vector<64x8xf32>
    %14 = arith.addf %13, %12 : vector<64x8xf32>
    %c0_16 = arith.constant 0 : index
    %c0_17 = arith.constant 0 : index
    %15 = vector.load %arg6[%c0_16, %c0_17] : memref<64x8xf32, #tpu.memory_space<vmem>>, vector<64x8xf32>
    tpu.vector_store %arg6[%c0_16, %c0_17], %14 {strides = array<i32>} : memref<64x8xf32, #tpu.memory_space<vmem>>, vector<64x8xf32>,
    %16 = vector.extract_strided_slice %1 {offsets = [0, 1, 0], sizes = [8, 8, 8], strides = [1, 1, 1]} : vector<8x9x16xbf16> to vector<8x8x8xbf16>
    %17 = vector.shape_cast %16 : vector<8x8x8xbf16> to vector<64x8xbf16>
    %c0_18 = arith.constant 0 : index
    %c2 = arith.constant 2 : index
    %c0_19 = arith.constant 0 : index
    %c0_20 = arith.constant 0 : index
    %18 = vector.load %arg2[%c0_18, %c2, %c0_19, %c0_20] : memref<3x3x8x8xbf16, #tpu.memory_space<vmem>>, vector<1x1x8x8xbf16>
    %19 = vector.shape_cast %18 : vector<1x1x8x8xbf16> to vector<8x8xbf16>
    %cst_21 = arith.constant dense<0.000000e+00> : vector<64x8xf32>
    %20 = tpu.matmul %17, %19, %cst_21 {dimension_numbers = #tpu.dot_dimension_numbers<[1], [0], [0], [1], [0, 0, 1, 1], [], []>} : vector<64x8xbf16>, vector<8x8xbf16>, vector<64x8xf32> -> vector<64x8xf32>
    %c0_22 = arith.constant 0 : index
    %c0_23 = arith.constant 0 : index
    %21 = vector.load %arg6[%c0_22, %c0_23] : memref<64x8xf32, #tpu.memory_space<vmem>>, vector<64x8xf32>
    %22 = arith.addf %21, %20 : vector<64x8xf32>
    %c0_24 = arith.constant 0 : index
    %c0_25 = arith.constant 0 : index
    %23 = vector.load %arg6[%c0_24, %c0_25] : memref<64x8xf32, #tpu.memory_space<vmem>>, vector<64x8xf32>
    tpu.vector_store %arg6[%c0_24, %c0_25], %22 {strides = array<i32>} : memref<64x8xf32, #tpu.memory_space<vmem>>, vector<64x8xf32>,
    %c0_26 = arith.constant 0 : index
    %c0_27 = arith.constant 0 : index
    %c1_28 = arith.constant 1 : index
    %c0_29 = arith.constant 0 : index
    %c0_30 = arith.constant 0 : index
    %24 = vector.load %arg1[%c0_26, %c0_27, %c1_28, %c0_29, %c0_30] : memref<1x9x2x9x16xbf16, #tpu.memory_space<vmem>>, vector<1x8x1x9x16xbf16>
    %25 = vector.shape_cast %24 : vector<1x8x1x9x16xbf16> to vector<8x9x16xbf16>
    %26 = vector.extract_strided_slice %25 {offsets = [0, 0, 0], sizes = [8, 8, 8], strides = [1, 1, 1]} : vector<8x9x16xbf16> to vector<8x8x8xbf16>
    %27 = vector.shape_cast %26 : vector<8x8x8xbf16> to vector<64x8xbf16>
    %c1_31 = arith.constant 1 : index
    %c0_32 = arith.constant 0 : index
    %c0_33 = arith.constant 0 : index
    %c0_34 = arith.constant 0 : index
    %28 = vector.load %arg2[%c1_31, %c0_32, %c0_33, %c0_34] : memref<3x3x8x8xbf16, #tpu.memory_space<vmem>>, vector<1x1x8x8xbf16>
    %29 = vector.shape_cast %28 : vector<1x1x8x8xbf16> to vector<8x8xbf16>
    %cst_35 = arith.constant dense<0.000000e+00> : vector<64x8xf32>
    %30 = tpu.matmul %27, %29, %cst_35 {dimension_numbers = #tpu.dot_dimension_numbers<[1], [0], [0], [1], [0, 0, 1, 1], [], []>} : vector<64x8xbf16>, vector<8x8xbf16>, vector<64x8xf32> -> vector<64x8xf32>
    %c0_36 = arith.constant 0 : index
    %c0_37 = arith.constant 0 : index
    %31 = vector.load %arg6[%c0_36, %c0_37] : memref<64x8xf32, #tpu.memory_space<vmem>>, vector<64x8xf32>
    %32 = arith.addf %31, %30 : vector<64x8xf32>
    %c0_38 = arith.constant 0 : index
    %c0_39 = arith.constant 0 : index
    %33 = vector.load %arg6[%c0_38, %c0_39] : memref<64x8xf32, #tpu.memory_space<vmem>>, vector<64x8xf32>
    tpu.vector_store %arg6[%c0_38, %c0_39], %32 {strides = array<i32>} : memref<64x8xf32, #tpu.memory_space<vmem>>, vector<64x8xf32>,
    %34 = vector.extract_strided_slice %25 {offsets = [0, 0, 8], sizes = [8, 8, 8], strides = [1, 1, 1]} : vector<8x9x16xbf16> to vector<8x8x8xbf16>
    %35 = vector.shape_cast %34 : vector<8x8x8xbf16> to vector<64x8xbf16>
    %c1_40 = arith.constant 1 : index
    %c1_41 = arith.constant 1 : index
    %c0_42 = arith.constant 0 : index
    %c0_43 = arith.constant 0 : index
    %36 = vector.load %arg2[%c1_40, %c1_41, %c0_42, %c0_43] : memref<3x3x8x8xbf16, #tpu.memory_space<vmem>>, vector<1x1x8x8xbf16>
    %37 = vector.shape_cast %36 : vector<1x1x8x8xbf16> to vector<8x8xbf16>
    %cst_44 = arith.constant dense<0.000000e+00> : vector<64x8xf32>
    %38 = tpu.matmul %35, %37, %cst_44 {dimension_numbers = #tpu.dot_dimension_numbers<[1], [0], [0], [1], [0, 0, 1, 1], [], []>} : vector<64x8xbf16>, vector<8x8xbf16>, vector<64x8xf32> -> vector<64x8xf32>
    %c0_45 = arith.constant 0 : index
    %c0_46 = arith.constant 0 : index
    %39 = vector.load %arg6[%c0_45, %c0_46] : memref<64x8xf32, #tpu.memory_space<vmem>>, vector<64x8xf32>
    %40 = arith.addf %39, %38 : vector<64x8xf32>
    %c0_47 = arith.constant 0 : index
    %c0_48 = arith.constant 0 : index
    %41 = vector.load %arg6[%c0_47, %c0_48] : memref<64x8xf32, #tpu.memory_space<vmem>>, vector<64x8xf32>
    tpu.vector_store %arg6[%c0_47, %c0_48], %40 {strides = array<i32>} : memref<64x8xf32, #tpu.memory_space<vmem>>, vector<64x8xf32>,
    %42 = vector.extract_strided_slice %25 {offsets = [0, 1, 0], sizes = [8, 8, 8], strides = [1, 1, 1]} : vector<8x9x16xbf16> to vector<8x8x8xbf16>
    %43 = vector.shape_cast %42 : vector<8x8x8xbf16> to vector<64x8xbf16>
    %c1_49 = arith.constant 1 : index
    %c2_50 = arith.constant 2 : index
    %c0_51 = arith.constant 0 : index
    %c0_52 = arith.constant 0 : index
    %44 = vector.load %arg2[%c1_49, %c2_50, %c0_51, %c0_52] : memref<3x3x8x8xbf16, #tpu.memory_space<vmem>>, vector<1x1x8x8xbf16>
    %45 = vector.shape_cast %44 : vector<1x1x8x8xbf16> to vector<8x8xbf16>
    %cst_53 = arith.constant dense<0.000000e+00> : vector<64x8xf32>
    %46 = tpu.matmul %43, %45, %cst_53 {dimension_numbers = #tpu.dot_dimension_numbers<[1], [0], [0], [1], [0, 0, 1, 1], [], []>} : vector<64x8xbf16>, vector<8x8xbf16>, vector<64x8xf32> -> vector<64x8xf32>
    %c0_54 = arith.constant 0 : index
    %c0_55 = arith.constant 0 : index
    %47 = vector.load %arg6[%c0_54, %c0_55] : memref<64x8xf32, #tpu.memory_space<vmem>>, vector<64x8xf32>
    %48 = arith.addf %47, %46 : vector<64x8xf32>
    %c0_56 = arith.constant 0 : index
    %c0_57 = arith.constant 0 : index
    %49 = vector.load %arg6[%c0_56, %c0_57] : memref<64x8xf32, #tpu.memory_space<vmem>>, vector<64x8xf32>
    tpu.vector_store %arg6[%c0_56, %c0_57], %48 {strides = array<i32>} : memref<64x8xf32, #tpu.memory_space<vmem>>, vector<64x8xf32>,
    %c0_58 = arith.constant 0 : index
    %c1_59 = arith.constant 1 : index
    %c0_60 = arith.constant 0 : index
    %c0_61 = arith.constant 0 : index
    %c0_62 = arith.constant 0 : index
    %50 = vector.load %arg1[%c0_58, %c1_59, %c0_60, %c0_61, %c0_62] : memref<1x9x2x9x16xbf16, #tpu.memory_space<vmem>>, vector<1x8x1x9x16xbf16>
    %51 = vector.shape_cast %50 : vector<1x8x1x9x16xbf16> to vector<8x9x16xbf16>
    %52 = vector.extract_strided_slice %51 {offsets = [0, 0, 0], sizes = [8, 8, 8], strides = [1, 1, 1]} : vector<8x9x16xbf16> to vector<8x8x8xbf16>
    %53 = vector.shape_cast %52 : vector<8x8x8xbf16> to vector<64x8xbf16>
    %c2_63 = arith.constant 2 : index
    %c0_64 = arith.constant 0 : index
    %c0_65 = arith.constant 0 : index
    %c0_66 = arith.constant 0 : index
    %54 = vector.load %arg2[%c2_63, %c0_64, %c0_65, %c0_66] : memref<3x3x8x8xbf16, #tpu.memory_space<vmem>>, vector<1x1x8x8xbf16>
    %55 = vector.shape_cast %54 : vector<1x1x8x8xbf16> to vector<8x8xbf16>
    %cst_67 = arith.constant dense<0.000000e+00> : vector<64x8xf32>
    %56 = tpu.matmul %53, %55, %cst_67 {dimension_numbers = #tpu.dot_dimension_numbers<[1], [0], [0], [1], [0, 0, 1, 1], [], []>} : vector<64x8xbf16>, vector<8x8xbf16>, vector<64x8xf32> -> vector<64x8xf32>
    %c0_68 = arith.constant 0 : index
    %c0_69 = arith.constant 0 : index
    %57 = vector.load %arg6[%c0_68, %c0_69] : memref<64x8xf32, #tpu.memory_space<vmem>>, vector<64x8xf32>
    %58 = arith.addf %57, %56 : vector<64x8xf32>
    %c0_70 = arith.constant 0 : index
    %c0_71 = arith.constant 0 : index
    %59 = vector.load %arg6[%c0_70, %c0_71] : memref<64x8xf32, #tpu.memory_space<vmem>>, vector<64x8xf32>
    tpu.vector_store %arg6[%c0_70, %c0_71], %58 {strides = array<i32>} : memref<64x8xf32, #tpu.memory_space<vmem>>, vector<64x8xf32>,
    %60 = vector.extract_strided_slice %51 {offsets = [0, 0, 8], sizes = [8, 8, 8], strides = [1, 1, 1]} : vector<8x9x16xbf16> to vector<8x8x8xbf16>
    %61 = vector.shape_cast %60 : vector<8x8x8xbf16> to vector<64x8xbf16>
    %c2_72 = arith.constant 2 : index
    %c1_73 = arith.constant 1 : index
    %c0_74 = arith.constant 0 : index
    %c0_75 = arith.constant 0 : index
    %62 = vector.load %arg2[%c2_72, %c1_73, %c0_74, %c0_75] : memref<3x3x8x8xbf16, #tpu.memory_space<vmem>>, vector<1x1x8x8xbf16>
    %63 = vector.shape_cast %62 : vector<1x1x8x8xbf16> to vector<8x8xbf16>
    %cst_76 = arith.constant dense<0.000000e+00> : vector<64x8xf32>
    %64 = tpu.matmul %61, %63, %cst_76 {dimension_numbers = #tpu.dot_dimension_numbers<[1], [0], [0], [1], [0, 0, 1, 1], [], []>} : vector<64x8xbf16>, vector<8x8xbf16>, vector<64x8xf32> -> vector<64x8xf32>
    %c0_77 = arith.constant 0 : index
    %c0_78 = arith.constant 0 : index
    %65 = vector.load %arg6[%c0_77, %c0_78] : memref<64x8xf32, #tpu.memory_space<vmem>>, vector<64x8xf32>
    %66 = arith.addf %65, %64 : vector<64x8xf32>
    %c0_79 = arith.constant 0 : index
    %c0_80 = arith.constant 0 : index
    %67 = vector.load %arg6[%c0_79, %c0_80] : memref<64x8xf32, #tpu.memory_space<vmem>>, vector<64x8xf32>
    tpu.vector_store %arg6[%c0_79, %c0_80], %66 {strides = array<i32>} : memref<64x8xf32, #tpu.memory_space<vmem>>, vector<64x8xf32>,
    %68 = vector.extract_strided_slice %51 {offsets = [0, 1, 0], sizes = [8, 8, 8], strides = [1, 1, 1]} : vector<8x9x16xbf16> to vector<8x8x8xbf16>
    %69 = vector.shape_cast %68 : vector<8x8x8xbf16> to vector<64x8xbf16>
    %c2_81 = arith.constant 2 : index
    %c2_82 = arith.constant 2 : index
    %c0_83 = arith.constant 0 : index
    %c0_84 = arith.constant 0 : index
    %70 = vector.load %arg2[%c2_81, %c2_82, %c0_83, %c0_84] : memref<3x3x8x8xbf16, #tpu.memory_space<vmem>>, vector<1x1x8x8xbf16>
    %71 = vector.shape_cast %70 : vector<1x1x8x8xbf16> to vector<8x8xbf16>
    %cst_85 = arith.constant dense<0.000000e+00> : vector<64x8xf32>
    %72 = tpu.matmul %69, %71, %cst_85 {dimension_numbers = #tpu.dot_dimension_numbers<[1], [0], [0], [1], [0, 0, 1, 1], [], []>} : vector<64x8xbf16>, vector<8x8xbf16>, vector<64x8xf32> -> vector<64x8xf32>
    %c0_86 = arith.constant 0 : index
    %c0_87 = arith.constant 0 : index
    %73 = vector.load %arg6[%c0_86, %c0_87] : memref<64x8xf32, #tpu.memory_space<vmem>>, vector<64x8xf32>
    %74 = arith.addf %73, %72 : vector<64x8xf32>
    %c0_88 = arith.constant 0 : index
    %c0_89 = arith.constant 0 : index
    %75 = vector.load %arg6[%c0_88, %c0_89] : memref<64x8xf32, #tpu.memory_space<vmem>>, vector<64x8xf32>
    tpu.vector_store %arg6[%c0_88, %c0_89], %74 {strides = array<i32>} : memref<64x8xf32, #tpu.memory_space<vmem>>, vector<64x8xf32>,
    %c0_90 = arith.constant 0 : index
    %c0_91 = arith.constant 0 : index
    %76 = vector.load %arg6[%c0_90, %c0_91] : memref<64x8xf32, #tpu.memory_space<vmem>>, vector<64x8xf32>
    %c0_92 = arith.constant 0 : index
    %c0_93 = arith.constant 0 : index
    %77 = vector.load %arg3[%c0_92, %c0_93] : memref<1x8xf32, #tpu.memory_space<vmem>>, vector<1x8xf32>
    %78 = vector.broadcast %77 : vector<1x8xf32> to vector<64x8xf32>
    %79 = arith.mulf %76, %78 : vector<64x8xf32>
    %c0_94 = arith.constant 0 : index
    %c0_95 = arith.constant 0 : index
    %80 = vector.load %arg4[%c0_94, %c0_95] : memref<1x8xf32, #tpu.memory_space<vmem>>, vector<1x8xf32>
    %81 = vector.broadcast %80 : vector<1x8xf32> to vector<64x8xf32>
    %82 = arith.addf %79, %81 : vector<64x8xf32>
    %cst_96 = arith.constant 0.000000e+00 : f32
    %83 = vector.broadcast %cst_96 : f32 to vector<64x8xf32>
    %84 = arith.maximumf %82, %83 : vector<64x8xf32>
    %85 = vector.shape_cast %84 : vector<64x8xf32> to vector<1x8x8x8xf32>
    %86 = arith.truncf %85 : vector<1x8x8x8xf32> to vector<1x8x8x8xbf16>
    %c0_97 = arith.constant 0 : index
    %c0_98 = arith.constant 0 : index
    %c0_99 = arith.constant 0 : index
    %c0_100 = arith.constant 0 : index
    %87 = vector.load %arg5[%c0_97, %c0_98, %c0_99, %c0_100] : memref<1x8x8x8xbf16, #tpu.memory_space<vmem>>, vector<1x8x8x8xbf16>
    tpu.vector_store %arg5[%c0_97, %c0_98, %c0_99, %c0_100], %86 {strides = array<i32>} : memref<1x8x8x8xbf16, #tpu.memory_space<vmem>>, vector<1x8x8x8xbf16>,
    return
  }
  func.func @transform_0(%arg0: i32) -> (i32, i32, i32, i32, i32) {
    %c0_i32 = arith.constant 0 : i32
    %c0_i32_0 = arith.constant 0 : i32
    %c0_i32_1 = arith.constant 0 : i32
    %c0_i32_2 = arith.constant 0 : i32
    %c0_i32_3 = arith.constant 0 : i32
    return %arg0, %c0_i32, %c0_i32_0, %c0_i32_1, %c0_i32_2 : i32, i32, i32, i32, i32
  }
  func.func @transform_1(%arg0: i32) -> (i32, i32, i32, i32) {
    %c0_i32 = arith.constant 0 : i32
    %c0_i32_0 = arith.constant 0 : i32
    %c0_i32_1 = arith.constant 0 : i32
    %c0_i32_2 = arith.constant 0 : i32
    %c0_i32_3 = arith.constant 0 : i32
    return %c0_i32, %c0_i32_0, %c0_i32_1, %c0_i32_2 : i32, i32, i32, i32
  }
  func.func @transform_2(%arg0: i32) -> (i32, i32) {
    %c0_i32 = arith.constant 0 : i32
    %c0_i32_0 = arith.constant 0 : i32
    %c0_i32_1 = arith.constant 0 : i32
    return %c0_i32, %c0_i32_0 : i32, i32
  }
  func.func @transform_3(%arg0: i32) -> (i32, i32) {
    %c0_i32 = arith.constant 0 : i32
    %c0_i32_0 = arith.constant 0 : i32
    %c0_i32_1 = arith.constant 0 : i32
    return %c0_i32, %c0_i32_0 : i32, i32
  }
  func.func @transform_4(%arg0: i32) -> (i32, i32, i32, i32) {
    %c0_i32 = arith.constant 0 : i32
    %c0_i32_0 = arith.constant 0 : i32
    %c0_i32_1 = arith.constant 0 : i32
    %c0_i32_2 = arith.constant 0 : i32
    return %arg0, %c0_i32, %c0_i32_0, %c0_i32_1 : i32, i32, i32, i32
  }
}

module attributes {stable_mosaic.version = 11 : i64} {
  func.func @kernel(%arg0: i32, %arg1: memref<1x8x2x8x32xf32, #tpu.memory_space<vmem>>, %arg2: memref<1x1x16x32xbf16, #tpu.memory_space<vmem>>, %arg3: memref<1x16xf32, #tpu.memory_space<vmem>>, %arg4: memref<1x16xf32, #tpu.memory_space<vmem>>, %arg5: memref<1x8x8x32xf32, #tpu.memory_space<vmem>>, %arg6: memref<64x32xf32, #tpu.memory_space<vmem>>) attributes {dimension_semantics = [#tpu.dimension_semantics<parallel>], iteration_bounds = array<i64: 2>, scalar_prefetch = 0 : i64, scratch_operands = 1 : i64, tpu.core_type = #tpu.core_type<tc>, window_params = [{transform_indices = @transform_0, window_bounds = array<i64: 1, 8, 2, 8, 32>}, {pipeline_mode = #tpu.pipeline_mode<synchronous>, transform_indices = @transform_1, window_bounds = array<i64: 1, 1, 16, 32>}, {pipeline_mode = #tpu.pipeline_mode<synchronous>, transform_indices = @transform_2, window_bounds = array<i64: 1, 16>}, {pipeline_mode = #tpu.pipeline_mode<synchronous>, transform_indices = @transform_3, window_bounds = array<i64: 1, 16>}, {transform_indices = @transform_4, window_bounds = array<i64: 1, 8, 8, 32>}]} {
    %c0 = arith.constant 0 : index
    %c0_0 = arith.constant 0 : index
    %c0_1 = arith.constant 0 : index
    %c0_2 = arith.constant 0 : index
    %c0_3 = arith.constant 0 : index
    %0 = vector.load %arg1[%c0, %c0_0, %c0_1, %c0_2, %c0_3] : memref<1x8x2x8x32xf32, #tpu.memory_space<vmem>>, vector<1x8x1x8x32xf32>
    %1 = vector.shape_cast %0 : vector<1x8x1x8x32xf32> to vector<8x8x32xf32>
    %2 = vector.extract_strided_slice %1 {offsets = [0, 0, 0], sizes = [8, 8, 16], strides = [1, 1, 1]} : vector<8x8x32xf32> to vector<8x8x16xf32>
    %3 = vector.shape_cast %2 : vector<8x8x16xf32> to vector<64x16xf32>
    %c0_4 = arith.constant 0 : index
    %c0_5 = arith.constant 0 : index
    %4 = vector.load %arg3[%c0_4, %c0_5] : memref<1x16xf32, #tpu.memory_space<vmem>>, vector<1x16xf32>
    %5 = vector.broadcast %4 : vector<1x16xf32> to vector<64x16xf32>
    %6 = arith.mulf %3, %5 : vector<64x16xf32>
    %c0_6 = arith.constant 0 : index
    %c0_7 = arith.constant 0 : index
    %7 = vector.load %arg4[%c0_6, %c0_7] : memref<1x16xf32, #tpu.memory_space<vmem>>, vector<1x16xf32>
    %8 = vector.broadcast %7 : vector<1x16xf32> to vector<64x16xf32>
    %9 = arith.addf %6, %8 : vector<64x16xf32>
    %cst = arith.constant 0.000000e+00 : f32
    %10 = vector.broadcast %cst : f32 to vector<64x16xf32>
    %11 = arith.maximumf %9, %10 : vector<64x16xf32>
    %12 = arith.truncf %11 : vector<64x16xf32> to vector<64x16xbf16>
    %c0_8 = arith.constant 0 : index
    %c0_9 = arith.constant 0 : index
    %c0_10 = arith.constant 0 : index
    %c0_11 = arith.constant 0 : index
    %13 = vector.load %arg2[%c0_8, %c0_9, %c0_10, %c0_11] : memref<1x1x16x32xbf16, #tpu.memory_space<vmem>>, vector<1x1x16x32xbf16>
    %14 = vector.shape_cast %13 : vector<1x1x16x32xbf16> to vector<16x32xbf16>
    %cst_12 = arith.constant dense<0.000000e+00> : vector<64x32xf32>
    %15 = tpu.matmul %12, %14, %cst_12 {dimension_numbers = #tpu.dot_dimension_numbers<[1], [0], [0], [1], [0, 0, 1, 1], [], []>} : vector<64x16xbf16>, vector<16x32xbf16>, vector<64x32xf32> -> vector<64x32xf32>
    %c0_13 = arith.constant 0 : index
    %c0_14 = arith.constant 0 : index
    %16 = vector.load %arg6[%c0_13, %c0_14] : memref<64x32xf32, #tpu.memory_space<vmem>>, vector<64x32xf32>
    tpu.vector_store %arg6[%c0_13, %c0_14], %15 {strides = array<i32>} : memref<64x32xf32, #tpu.memory_space<vmem>>, vector<64x32xf32>,
    %c0_15 = arith.constant 0 : index
    %c0_16 = arith.constant 0 : index
    %17 = vector.load %arg6[%c0_15, %c0_16] : memref<64x32xf32, #tpu.memory_space<vmem>>, vector<64x32xf32>
    %18 = vector.shape_cast %17 : vector<64x32xf32> to vector<1x8x8x32xf32>
    %c0_17 = arith.constant 0 : index
    %c0_18 = arith.constant 0 : index
    %c0_19 = arith.constant 0 : index
    %c0_20 = arith.constant 0 : index
    %19 = vector.load %arg5[%c0_17, %c0_18, %c0_19, %c0_20] : memref<1x8x8x32xf32, #tpu.memory_space<vmem>>, vector<1x8x8x32xf32>
    tpu.vector_store %arg5[%c0_17, %c0_18, %c0_19, %c0_20], %18 {strides = array<i32>} : memref<1x8x8x32xf32, #tpu.memory_space<vmem>>, vector<1x8x8x32xf32>,
    return
  }
  func.func @transform_0(%arg0: i32) -> (i32, i32, i32, i32, i32) {
    %c0_i32 = arith.constant 0 : i32
    %c0_i32_0 = arith.constant 0 : i32
    %c0_i32_1 = arith.constant 0 : i32
    %c0_i32_2 = arith.constant 0 : i32
    %c0_i32_3 = arith.constant 0 : i32
    return %arg0, %c0_i32, %c0_i32_0, %c0_i32_1, %c0_i32_2 : i32, i32, i32, i32, i32
  }
  func.func @transform_1(%arg0: i32) -> (i32, i32, i32, i32) {
    %c0_i32 = arith.constant 0 : i32
    %c0_i32_0 = arith.constant 0 : i32
    %c0_i32_1 = arith.constant 0 : i32
    %c0_i32_2 = arith.constant 0 : i32
    %c0_i32_3 = arith.constant 0 : i32
    return %c0_i32, %c0_i32_0, %c0_i32_1, %c0_i32_2 : i32, i32, i32, i32
  }
  func.func @transform_2(%arg0: i32) -> (i32, i32) {
    %c0_i32 = arith.constant 0 : i32
    %c0_i32_0 = arith.constant 0 : i32
    %c0_i32_1 = arith.constant 0 : i32
    return %c0_i32, %c0_i32_0 : i32, i32
  }
  func.func @transform_3(%arg0: i32) -> (i32, i32) {
    %c0_i32 = arith.constant 0 : i32
    %c0_i32_0 = arith.constant 0 : i32
    %c0_i32_1 = arith.constant 0 : i32
    return %c0_i32, %c0_i32_0 : i32, i32
  }
  func.func @transform_4(%arg0: i32) -> (i32, i32, i32, i32) {
    %c0_i32 = arith.constant 0 : i32
    %c0_i32_0 = arith.constant 0 : i32
    %c0_i32_1 = arith.constant 0 : i32
    %c0_i32_2 = arith.constant 0 : i32
    return %arg0, %c0_i32, %c0_i32_0, %c0_i32_1 : i32, i32, i32, i32
  }
}

module attributes {stable_mosaic.version = 11 : i64} {
  func.func @kernel(%arg0: i32, %arg1: i32, %arg2: i32, %arg3: memref<128x8xbf16, #tpu.memory_space<vmem>>, %arg4: memref<8x32xbf16, #tpu.memory_space<vmem>>, %arg5: memref<128x32xf32, #tpu.memory_space<vmem>>, %arg6: memref<128x32xf32, #tpu.memory_space<vmem>>, %arg7: memref<128x32xf32, #tpu.memory_space<vmem>>) attributes {dimension_semantics = [#tpu.dimension_semantics<parallel>, #tpu.dimension_semantics<parallel>, #tpu.dimension_semantics<arbitrary>], iteration_bounds = array<i64: 1, 1, 1>, scalar_prefetch = 0 : i64, scratch_operands = 1 : i64, tpu.core_type = #tpu.core_type<tc>, window_params = [{transform_indices = @transform_0, window_bounds = array<i64: 128, 8>}, {transform_indices = @transform_1, window_bounds = array<i64: 8, 32>}, {transform_indices = @transform_2, window_bounds = array<i64: 128, 32>}, {transform_indices = @transform_3, window_bounds = array<i64: 128, 32>}]} {
    %c0_i32 = arith.constant 0 : i32
    %0 = arith.cmpi eq, %arg2, %c0_i32 : i32
    %1 = arith.extui %0 : i1 to i32
    %c0_i32_0 = arith.constant 0 : i32
    %2 = arith.cmpi ne, %1, %c0_i32_0 : i32
    scf.if %2 {
      %cst_10 = arith.constant 0.000000e+00 : f32
      %12 = vector.broadcast %cst_10 : f32 to vector<128x32xf32>
      %c0_11 = arith.constant 0 : index
      %c0_12 = arith.constant 0 : index
      %13 = vector.load %arg7[%c0_11, %c0_12] : memref<128x32xf32, #tpu.memory_space<vmem>>, vector<128x32xf32>
      tpu.vector_store %arg7[%c0_11, %c0_12], %12 {strides = array<i32>} : memref<128x32xf32, #tpu.memory_space<vmem>>, vector<128x32xf32>,
    } else {
    }
    %c0 = arith.constant 0 : index
    %c0_1 = arith.constant 0 : index
    %3 = vector.load %arg3[%c0, %c0_1] : memref<128x8xbf16, #tpu.memory_space<vmem>>, vector<128x8xbf16>
    %c0_2 = arith.constant 0 : index
    %c0_3 = arith.constant 0 : index
    %4 = vector.load %arg7[%c0_2, %c0_3] : memref<128x32xf32, #tpu.memory_space<vmem>>, vector<128x32xf32>
    %c0_4 = arith.constant 0 : index
    %c0_5 = arith.constant 0 : index
    %5 = vector.load %arg4[%c0_4, %c0_5] : memref<8x32xbf16, #tpu.memory_space<vmem>>, vector<8x32xbf16>
    %cst = arith.constant dense<0.000000e+00> : vector<128x32xf32>
    %6 = tpu.matmul %3, %5, %cst {dimension_numbers = #tpu.dot_dimension_numbers<[1], [0], [0], [1], [0, 0, 1, 1], [], []>} : vector<128x8xbf16>, vector<8x32xbf16>, vector<128x32xf32> -> vector<128x32xf32>
    %7 = arith.addf %4, %6 : vector<128x32xf32>
    %c0_6 = arith.constant 0 : index
    %c0_7 = arith.constant 0 : index
    %8 = vector.load %arg7[%c0_6, %c0_7] : memref<128x32xf32, #tpu.memory_space<vmem>>, vector<128x32xf32>
    tpu.vector_store %arg7[%c0_6, %c0_7], %7 {strides = array<i32>} : memref<128x32xf32, #tpu.memory_space<vmem>>, vector<128x32xf32>,
    %c0_i32_8 = arith.constant 0 : i32
    %9 = arith.cmpi eq, %arg2, %c0_i32_8 : i32
    %10 = arith.extui %9 : i1 to i32
    %c0_i32_9 = arith.constant 0 : i32
    %11 = arith.cmpi ne, %10, %c0_i32_9 : i32
    scf.if %11 {
      %c0_10 = arith.constant 0 : index
      %c0_11 = arith.constant 0 : index
      %12 = vector.load %arg7[%c0_10, %c0_11] : memref<128x32xf32, #tpu.memory_space<vmem>>, vector<128x32xf32>
      %c0_12 = arith.constant 0 : index
      %c0_13 = arith.constant 0 : index
      %13 = vector.load %arg5[%c0_12, %c0_13] : memref<128x32xf32, #tpu.memory_space<vmem>>, vector<128x32xf32>
      %14 = arith.addf %12, %13 : vector<128x32xf32>
      %c0_14 = arith.constant 0 : index
      %c0_15 = arith.constant 0 : index
      %15 = vector.load %arg6[%c0_14, %c0_15] : memref<128x32xf32, #tpu.memory_space<vmem>>, vector<128x32xf32>
      tpu.vector_store %arg6[%c0_14, %c0_15], %14 {strides = array<i32>} : memref<128x32xf32, #tpu.memory_space<vmem>>, vector<128x32xf32>,
    } else {
    }
    return
  }
  func.func @transform_0(%arg0: i32, %arg1: i32, %arg2: i32) -> (i32, i32) {
    %c0_i32 = arith.constant 0 : i32
    return %arg0, %arg2 : i32, i32
  }
  func.func @transform_1(%arg0: i32, %arg1: i32, %arg2: i32) -> (i32, i32) {
    %c0_i32 = arith.constant 0 : i32
    return %arg2, %arg1 : i32, i32
  }
  func.func @transform_2(%arg0: i32, %arg1: i32, %arg2: i32) -> (i32, i32) {
    %c0_i32 = arith.constant 0 : i32
    return %arg0, %arg1 : i32, i32
  }
  func.func @transform_3(%arg0: i32, %arg1: i32, %arg2: i32) -> (i32, i32) {
    %c0_i32 = arith.constant 0 : i32
    return %arg0, %arg1 : i32, i32
  }
}

</mosaic_0001>

<llo_original>
// kernel: preact_bottleneck.5
$region0: #{preact_bottleneck.5}
  #allocation0 [shape = 'u32[]', space=smem, size = 0x4, offset = 0x4, fixed_abs, tag = 'smem constant byte address 0x4 - core index']
  #allocation1 [shape = 'u32[144,128]{1,0:T(1,128)}', space=vmem, size = 0x12000, scoped, tag = 'internal scratch']
  #allocation2 [shape = 'f32[64,32]{1,0:T(8,128)}', space=vmem, size = 0x8000, scoped, tag = 'scratch operand']
  %s0 = inlined_call_operand.vmem [shape: f32[2,8,2,8,32], index: 0, kind: input, shape index: {}]
  %s1 = inlined_call_operand.vmem [shape: bf16[1,1,16,32], index: 1, kind: input, shape index: {}]
  %s2 = inlined_call_operand.vmem [shape: f32[1,16], index: 2, kind: input, shape index: {}]
  %s3 = inlined_call_operand.vmem [shape: f32[1,16], index: 3, kind: input, shape index: {}]
  %s4 = inlined_call_operand.vmem [shape: f32[2,8,8,32], index: 4, kind: output, shape index: {}]
  %s5 = sld [smem:[#allocation0]]
  $region49: #{preact_bottleneck.5} parent=0
    _
  %s7 = ssub.s32 1, %s5
  %s8 = scalar_select 0, %s7, %s5
  loop: start=0, step=1, limit=4
  $region2: #{preact_bottleneck.5} parent=0 // loop_pre_header
    _
  $region3: #{preact_bottleneck.5} parent=0 // loop_header
    %s10 = sphi 0, %s14
    %p11 = scmp.ge.s32.totalorder %s10, 4
    %s20 = sphi 0, %s22
    %s23 = sphi 0, %s20
    %s24 = sphi 0, %s23
    %s40 = sphi 0, %s24
    %s44 = sphi 0, %s44
    %s46 = sphi 0, %s44
    %s47 = sphi 0, %s46
    %s61 = sphi 0, %s47
    %s65 = sphi 0, %s65
    %s67 = sphi 0, %s65
    %s68 = sphi 0, %s67
    %s82 = sphi 0, %s68
    %s86 = sphi 0, %s86
    %s88 = sphi 0, %s86
    %s89 = sphi 0, %s88
    %s103 = sphi 0, %s89
    %s109 = sphi 0, %s111
    %s112 = sphi 0, %s109
    %s113 = sphi 0, %s112
    %s129 = sphi 0, %s113
  $region4: #{preact_bottleneck.5} parent=0 // loop_header_branch
    %13 = sbr.rel (%p11) target = $region8
  $region5: #{preact_bottleneck.5} parent=0 // loop_body
    %s15 = ssub.s32 %s10, 1
    %s16 = ssub.s32 %s10, 2
    %s17 = sadd.s32 %s10, 1
    %s18 = ssub.s32 %s10, %s17
    %p19 = scmp.eq.s32.totalorder %s18, 0
    %s21 = sadd.s32 %s20, 1
    %s22 = scalar_select %p19, %s20, %s21
    %p25 = pneg %p19
    %p26 = scmp.eq.s32.totalorder %s10, 1
    %p27 = por %p25, %p26
    %p28 = scmp.ne.s32.totalorder %s20, %s23
    %p29 = scmp.eq.s32.totalorder %s10, 0
    %p30 = por %p28, %p29
    %p31 = scmp.ne.s32.totalorder %s20, %s23
    %p32 = scmp.eq.s32.totalorder %s15, 1
    %p33 = por %p31, %p32
    %p34 = scmp.ne.s32.totalorder %s23, %s24
    %p35 = scmp.eq.s32.totalorder %s15, 0
    %p36 = por %p34, %p35
    %p37 = scmp.ne.s32.totalorder %s23, %s24
    %p38 = scmp.eq.s32.totalorder %s16, 1
    %p39 = por %p37, %p38
    %p41 = scmp.ne.s32.totalorder %s24, %s40
    %p42 = scmp.eq.s32.totalorder %s16, 0
    %p43 = por %p41, %p42
    %s45 = sadd.s32 %s44, 1
    %p48 = scmp.eq.s32.totalorder %s10, 1
    %p49 = scmp.ne.s32.totalorder %s44, %s46
    %p50 = scmp.eq.s32.totalorder %s10, 0
    %p51 = por %p49, %p50
    %p52 = scmp.ne.s32.totalorder %s44, %s46
    %p53 = scmp.eq.s32.totalorder %s15, 1
    %p54 = por %p52, %p53
    %p55 = scmp.ne.s32.totalorder %s46, %s47
    %p56 = scmp.eq.s32.totalorder %s15, 0
    %p57 = por %p55, %p56
    %p58 = scmp.ne.s32.totalorder %s46, %s47
    %p59 = scmp.eq.s32.totalorder %s16, 1
    %p60 = por %p58, %p59
    %p62 = scmp.ne.s32.totalorder %s47, %s61
    %p63 = scmp.eq.s32.totalorder %s16, 0
    %p64 = por %p62, %p63
    %s66 = sadd.s32 %s65, 1
    %p69 = scmp.eq.s32.totalorder %s10, 1
    %p70 = scmp.ne.s32.totalorder %s65, %s67
    %p71 = scmp.eq.s32.totalorder %s10, 0
    %p72 = por %p70, %p71
    %p73 = scmp.ne.s32.totalorder %s65, %s67
    %p74 = scmp.eq.s32.totalorder %s15, 1
    %p75 = por %p73, %p74
    %p76 = scmp.ne.s32.totalorder %s67, %s68
    %p77 = scmp.eq.s32.totalorder %s15, 0
    %p78 = por %p76, %p77
    %p79 = scmp.ne.s32.totalorder %s67, %s68
    %p80 = scmp.eq.s32.totalorder %s16, 1
    %p81 = por %p79, %p80
    %p83 = scmp.ne.s32.totalorder %s68, %s82
    %p84 = scmp.eq.s32.totalorder %s16, 0
    %p85 = por %p83, %p84
    %s87 = sadd.s32 %s86, 1
    %p90 = scmp.eq.s32.totalorder %s10, 1
    %p91 = scmp.ne.s32.totalorder %s86, %s88
    %p92 = scmp.eq.s32.totalorder %s10, 0
    %p93 = por %p91, %p92
    %p94 = scmp.ne.s32.totalorder %s86, %s88
    %p95 = scmp.eq.s32.totalorder %s15, 1
    %p96 = por %p94, %p95
    %p97 = scmp.ne.s32.totalorder %s88, %s89
    %p98 = scmp.eq.s32.totalorder %s15, 0
    %p99 = por %p97, %p98
    %p100 = scmp.ne.s32.totalorder %s88, %s89
    %p101 = scmp.eq.s32.totalorder %s16, 1
    %p102 = por %p100, %p101
    %p104 = scmp.ne.s32.totalorder %s89, %s103
    %p105 = scmp.eq.s32.totalorder %s16, 0
    %p106 = por %p104, %p105
    %s107 = ssub.s32 %s10, %s17
    %p108 = scmp.eq.s32.totalorder %s107, 0
    %s110 = sadd.s32 %s109, 1
    %s111 = scalar_select %p108, %s109, %s110
    %p114 = pneg %p108
    %p115 = scmp.eq.s32.totalorder %s10, 1
    %p116 = por %p114, %p115
    %p117 = scmp.ne.s32.totalorder %s109, %s112
    %p118 = scmp.eq.s32.totalorder %s10, 0
    %p119 = por %p117, %p118
    %p120 = scmp.ne.s32.totalorder %s109, %s112
    %p121 = scmp.eq.s32.totalorder %s15, 1
    %p122 = por %p120, %p121
    %p123 = scmp.ne.s32.totalorder %s112, %s113
    %p124 = scmp.eq.s32.totalorder %s15, 0
    %p125 = por %p123, %p124
    %p126 = scmp.ne.s32.totalorder %s112, %s113
    %p127 = scmp.eq.s32.totalorder %s16, 1
    %p128 = por %p126, %p127
    %p130 = scmp.ne.s32.totalorder %s113, %s129
    %p131 = scmp.eq.s32.totalorder %s16, 0
    %p132 = por %p130, %p131
    %p133 = scmp.le.s32.totalorder 1, %s10
    %p134 = scmp.lt.s32.totalorder %s10, 3
    %p135 = pnand %p133, %p134
    %p136 = pneg %p135
    // Predicated region
    $region9: #{preact_bottleneck.5} parent=5 // pred_check
      _
    $region10: #{preact_bottleneck.5} parent=5 // pred_check_branch
      %138 = sbr.rel (%p135) target = $region12
    $region11: #{preact_bottleneck.5} parent=5 // pred_region
      %s139 = ssub.s32 %s10, 1
      // Predicated region
      $region13: #{preact_bottleneck.5} parent=11 // pred_check
        %p140 = pneg %p57
      $region14: #{preact_bottleneck.5} parent=11 // pred_check_branch
        %142 = sbr.rel (%p140) target = $region16
      $region15: #{preact_bottleneck.5} parent=11 // pred_region
        _
      $region16: #{preact_bottleneck.5} parent=11 // pred_fallthru
        _
      // Predicated region
      $region17: #{preact_bottleneck.5} parent=11 // pred_check
        %p143 = pneg %p78
      $region18: #{preact_bottleneck.5} parent=11 // pred_check_branch
        %145 = sbr.rel (%p143) target = $region20
      $region19: #{preact_bottleneck.5} parent=11 // pred_region
        _
      $region20: #{preact_bottleneck.5} parent=11 // pred_fallthru
        _
      // Predicated region
      $region21: #{preact_bottleneck.5} parent=11 // pred_check
        %p146 = pneg %p99
      $region22: #{preact_bottleneck.5} parent=11 // pred_check_branch
        %148 = sbr.rel (%p146) target = $region24
      $region23: #{preact_bottleneck.5} parent=11 // pred_region
        _
      $region24: #{preact_bottleneck.5} parent=11 // pred_fallthru
        _
    $region12: #{preact_bottleneck.5} parent=5 // pred_fallthru
      _
    %p149 = scmp.lt.s32.totalorder %s10, 2
    // Predicated region
    $region25: #{preact_bottleneck.5} parent=5 // pred_check
      %p150 = pneg %p149
    $region26: #{preact_bottleneck.5} parent=5 // pred_check_branch
      %152 = sbr.rel (%p150) target = $region28
    $region27: #{preact_bottleneck.5} parent=5 // pred_region
      // Predicated region
      $region29: #{preact_bottleneck.5} parent=27 // pred_check
        %p153 = pneg %p30
      $region30: #{preact_bottleneck.5} parent=27 // pred_check_branch
        %155 = sbr.rel (%p153) target = $region32
      $region31: #{preact_bottleneck.5} parent=27 // pred_region
        %p156 = scmp.lt.s32.totalorder %s10, 1
        %s157 = scalar_select %p156, %s10, 1
        %s158 = smul.addr %s157, 16
        %s159 = smul.addr %s158, 8
        %s160 = scalar_lea.vmem %s0, %s159
      $region32: #{preact_bottleneck.5} parent=27 // pred_fallthru
        _
    $region28: #{preact_bottleneck.5} parent=5 // pred_fallthru
      _
    %p161 = scmp.le.s32.totalorder 1, %s10
    %p162 = scmp.lt.s32.totalorder %s10, 3
    %p163 = pnand %p161, %p162
    %p164 = pneg %p163
    // Predicated region
    $region33: #{preact_bottleneck.5} parent=5 // pred_check
      _
    $region34: #{preact_bottleneck.5} parent=5 // pred_check_branch
      %166 = sbr.rel (%p163) target = $region36
    $region35: #{preact_bottleneck.5} parent=5 // pred_region
      %s167 = ssub.s32 %s10, 1
      %p168 = scmp.lt.s32.totalorder %s15, 1
      %s169 = scalar_select %p168, %s15, 1
      %s170 = smul.addr %s169, 16
      %s171 = smul.addr %s170, 8
      %s172 = scalar_lea.vmem %s0, %s171
      %p173 = pneg %p36
      %p174 = pneg %p33
      %p175 = pneg %p57
      %p176 = pneg %p54
      %p177 = pneg %p78
      %p178 = pneg %p75
      %p179 = pneg %p99
      %p180 = pneg %p96
      %p181 = pneg %p125
      %p182 = pneg %p122
      %p183 = scmp.lt.s32.totalorder %s15, 1
      %s184 = scalar_select %p183, %s15, 1
      %s185 = smul.addr %s184, 8
      %s186 = smul.addr %s185, 8
      %s187 = scalar_lea.vmem %s4, %s186
      %p188 = scmp.lt.s32.totalorder %s15, 1
      %s189 = scalar_select %p188, %s15, 1
      %s190 = smul.addr %s189, 16
      %s191 = smul.addr %s190, 8
      %s192 = scalar_lea.vmem %s0, %s191
      %p193 = scmp.lt.s32.totalorder %s15, 1
      %s194 = scalar_select %p193, %s15, 1
      %s195 = smul.addr %s194, 8
      %s196 = smul.addr %s195, 8
      %s197 = scalar_lea.vmem %s4, %s196
      %v199 = vld [vmem:[%s192] sm:$0xff]
      %v200 = vld [vmem:[%s192 + $0x10] sm:$0xff]
      %v201 = vld [vmem:[%s192 + $0x20] sm:$0xff]
      %v202 = vld [vmem:[%s192 + $0x30] sm:$0xff]
      %v203 = vld [vmem:[%s192 + $0x40] sm:$0xff]
      %v204 = vld [vmem:[%s192 + $0x50] sm:$0xff]
      %v205 = vld [vmem:[%s192 + $0x60] sm:$0xff]
      %v206 = vld [vmem:[%s192 + $0x70] sm:$0xff]
      %v207 = vld [vmem:[%s2] sm:$0x1]
      %v209 = vlaneseq
      %v210 = vshrl.u32 %v209, 7
      %v211 = vsub.s32 0, %v210
      %v212 = vrot.slane %v207, %v211
      %v214 = vmul.f32 %v199, %v212
      %v215 = vmul.f32 %v200, %v212
      %v216 = vmul.f32 %v201, %v212
      %v217 = vmul.f32 %v202, %v212
      %v218 = vmul.f32 %v203, %v212
      %v219 = vmul.f32 %v204, %v212
      %v220 = vmul.f32 %v205, %v212
      %v221 = vmul.f32 %v206, %v212
      %v222 = vld [vmem:[%s3] sm:$0x1]
      %v224 = vlaneseq
      %v225 = vshrl.u32 %v224, 7
      %v226 = vsub.s32 0, %v225
      %v227 = vrot.slane %v222, %v226
      %v229 = vadd.f32 %v214, %v227
      %v230 = vadd.f32 %v215, %v227
      %v231 = vadd.f32 %v216, %v227
      %v232 = vadd.f32 %v217, %v227
      %v233 = vadd.f32 %v218, %v227
      %v234 = vadd.f32 %v219, %v227
      %v235 = vadd.f32 %v220, %v227
      %v236 = vadd.f32 %v221, %v227
      %v237 = vmax.f32 %v229, 0.0
      %v238 = vmax.f32 %v230, 0.0
      %v239 = vmax.f32 %v231, 0.0
      %v240 = vmax.f32 %v232, 0.0
      %v241 = vmax.f32 %v233, 0.0
      %v242 = vmax.f32 %v234, 0.0
      %v243 = vmax.f32 %v235, 0.0
      %v244 = vmax.f32 %v236, 0.0
      %v245 = vpack.c.bf16 %v238, %v237
      %v246 = vpack.c.bf16 %v240, %v239
      %v247 = vpack.c.bf16 %v242, %v241
      %v248 = vpack.c.bf16 %v244, %v243
      %v249 = vld [vmem:[%s1] sm:$0xf]
      %v250 = vld [vmem:[%s1 + $0x4] sm:$0xf]
      %v253 = vunpack.c.l.b16 %v249
      %v254 = vunpack.c.l.b16 %v250
      %v255 = vpack.c.b16 %v254, %v253
      %vm257 = vcmask 130048
      %v259 = vsel %vm257, %v245, 0
      %v262 = vsel %vm257, %v246, 0
      %v265 = vsel %vm257, %v247, 0
      %v268 = vsel %vm257, %v248, 0
      %270 = vmatprep.subr.bf16.mxu0 0
      %271 = vmatpush1.bf16.msra.mxu0 0
      %272 = vmatprep.subr.bf16.mxu0 0
      %273 = vmatpush1.bf16.msra.mxu0 0
      %274 = vmatprep.subr.bf16.mxu0 0
      %275 = vmatpush1.bf16.msra.mxu0 0
      %276 = vmatprep.subr.bf16.mxu0 0
      %277 = vmatpush1.bf16.msra.mxu0 0
      %278 = vmatprep.subr.bf16.mxu0 0
      %279 = vmatpush1.bf16.msra.mxu0 0
      %280 = vmatprep.subr.bf16.mxu0 0
      %281 = vmatpush1.bf16.msra.mxu0 0
      %282 = vmatprep.subr.bf16.mxu0 0
      %283 = vmatpush1.bf16.msra.mxu0 0
      %284 = vmatprep.subr.bf16.mxu0 0
      %285 = vmatpush1.bf16.msra.mxu0 %v255
      %286 = vmatprep.subr.bf16.mxu0 0
      %287 = vmatpush2.bf16.msra.mxu0 0
      %288 = vmatprep.subr.bf16.mxu0 0
      %289 = vmatpush2.bf16.msra.mxu0 0
      %290 = vmatprep.subr.bf16.mxu0 0
      %291 = vmatpush2.bf16.msra.mxu0 0
      %292 = vmatprep.subr.bf16.mxu0 0
      %293 = vmatpush2.bf16.msra.mxu0 0
      %294 = vmatprep.subr.bf16.mxu0 0
      %295 = vmatpush2.bf16.msra.mxu0 0
      %296 = vmatprep.subr.bf16.mxu0 0
      %297 = vmatpush2.bf16.msra.mxu0 0
      %298 = vmatprep.subr.bf16.mxu0 0
      %299 = vmatpush2.bf16.msra.mxu0 0
      %300 = vmatprep.subr.bf16.mxu0 0
      %301 = vmatpush2.bf16.msra.mxu0 0
      %302 = vmatprep.mubr.bf16.mxu0 0
      %303 = vmatmul.mubr.bf16.gmra.mxu0 %v259
      %v304 = vpop.f32.mrf.mxu0
      %v305 = vadd.f32 0.0, %v304
      %v306 = vpop.f32.mrf.mxu0
      %v307 = vpop.f32.mrf.mxu0
      %v308 = vadd.f32 0.0, %v307
      %v309 = vpop.f32.mrf.mxu0
      %310 = vmatprep.mubr.bf16.mxu0 0
      %311 = vmatmul.mubr.bf16.gmra.mxu0 %v262
      %v312 = vpop.f32.mrf.mxu0
      %v313 = vadd.f32 0.0, %v312
      %v314 = vpop.f32.mrf.mxu0
      %v315 = vpop.f32.mrf.mxu0
      %v316 = vadd.f32 0.0, %v315
      %v317 = vpop.f32.mrf.mxu0
      %318 = vmatprep.mubr.bf16.mxu0 0
      %319 = vmatmul.mubr.bf16.gmra.mxu0 %v265
      %v320 = vpop.f32.mrf.mxu0
      %v321 = vadd.f32 0.0, %v320
      %v322 = vpop.f32.mrf.mxu0
      %v323 = vpop.f32.mrf.mxu0
      %v324 = vadd.f32 0.0, %v323
      %v325 = vpop.f32.mrf.mxu0
      %326 = vmatprep.mubr.bf16.mxu0 0
      %327 = vmatmul.mubr.bf16.gmra.mxu0 %v268
      %v328 = vpop.f32.mrf.mxu0
      %v329 = vadd.f32 0.0, %v328
      %v330 = vpop.f32.mrf.mxu0
      %v331 = vpop.f32.mrf.mxu0
      %v332 = vadd.f32 0.0, %v331
      %v333 = vpop.f32.mrf.mxu0
      %334 = vdwg.mxu0
      %vm335 = vcmask 261120
      %336 = vst.msk [vmem:[#allocation2] sm:$0xff] %vm335, %v305
      %337 = vst.msk [vmem:[#allocation2 + $0x8] sm:$0xff] %vm335, %v308
      %338 = vst.msk [vmem:[#allocation2 + $0x10] sm:$0xff] %vm335, %v313
      %339 = vst.msk [vmem:[#allocation2 + $0x18] sm:$0xff] %vm335, %v316
      %340 = vst.msk [vmem:[#allocation2 + $0x20] sm:$0xff] %vm335, %v321
      %341 = vst.msk [vmem:[#allocation2 + $0x28] sm:$0xff] %vm335, %v324
      %342 = vst.msk [vmem:[#allocation2 + $0x30] sm:$0xff] %vm335, %v329
      %343 = vst.msk [vmem:[#allocation2 + $0x38] sm:$0xff] %vm335, %v332
      %v344 = vld [vmem:[#allocation2] sm:$0xff]
      %v345 = vld [vmem:[#allocation2 + $0x8] sm:$0xff]
      %v346 = vld [vmem:[#allocation2 + $0x10] sm:$0xff]
      %v347 = vld [vmem:[#allocation2 + $0x18] sm:$0xff]
      %v348 = vld [vmem:[#allocation2 + $0x20] sm:$0xff]
      %v349 = vld [vmem:[#allocation2 + $0x28] sm:$0xff]
      %v350 = vld [vmem:[#allocation2 + $0x30] sm:$0xff]
      %v351 = vld [vmem:[#allocation2 + $0x38] sm:$0xff]
      %352 = vst.msk [vmem:[%s197] sm:$0xff] %vm335, %v344
      %353 = vst.msk [vmem:[%s197 + $0x8] sm:$0xff] %vm335, %v345
      %354 = vst.msk [vmem:[%s197 + $0x10] sm:$0xff] %vm335, %v346
      %355 = vst.msk [vmem:[%s197 + $0x18] sm:$0xff] %vm335, %v347
      %356 = vst.msk [vmem:[%s197 + $0x20] sm:$0xff] %vm335, %v348
      %357 = vst.msk [vmem:[%s197 + $0x28] sm:$0xff] %vm335, %v349
      %358 = vst.msk [vmem:[%s197 + $0x30] sm:$0xff] %vm335, %v350
      %359 = vst.msk [vmem:[%s197 + $0x38] sm:$0xff] %vm335, %v351
      %p360 = scmp.lt.s32.totalorder %s15, 1
      %s361 = scalar_select %p360, %s15, 1
      %s362 = smul.addr %s361, 8
      %s363 = smul.addr %s362, 8
      %s364 = scalar_lea.vmem %s4, %s363
      // Predicated region
      $region37: #{preact_bottleneck.5} parent=35 // pred_check
        %p365 = pneg %p122
      $region38: #{preact_bottleneck.5} parent=35 // pred_check_branch
        %367 = sbr.rel (%p365) target = $region40
      $region39: #{preact_bottleneck.5} parent=35 // pred_region
        _
      $region40: #{preact_bottleneck.5} parent=35 // pred_fallthru
        _
    $region36: #{preact_bottleneck.5} parent=5 // pred_fallthru
      _
    %p368 = scmp.le.s32.totalorder 2, %s10
    // Predicated region
    $region41: #{preact_bottleneck.5} parent=5 // pred_check
      %p369 = pneg %p368
    $region42: #{preact_bottleneck.5} parent=5 // pred_check_branch
      %371 = sbr.rel (%p369) target = $region44
    $region43: #{preact_bottleneck.5} parent=5 // pred_region
      %s372 = ssub.s32 %s10, 2
      // Predicated region
      $region45: #{preact_bottleneck.5} parent=43 // pred_check
        %p373 = pneg %p128
      $region46: #{preact_bottleneck.5} parent=43 // pred_check_branch
        %375 = sbr.rel (%p373) target = $region48
      $region47: #{preact_bottleneck.5} parent=43 // pred_region
        %p376 = scmp.lt.s32.totalorder %s16, 1
        %s377 = scalar_select %p376, %s16, 1
        %s378 = smul.addr %s377, 8
        %s379 = smul.addr %s378, 8
        %s380 = scalar_lea.vmem %s4, %s379
      $region48: #{preact_bottleneck.5} parent=43 // pred_fallthru
        _
    $region44: #{preact_bottleneck.5} parent=5 // pred_fallthru
      _
  $region6: #{preact_bottleneck.5} parent=0 // loop_footer
    %s14 = sadd.s32 1, %s10
  $region7: #{preact_bottleneck.5} parent=0 // loop_footer_branch
    %9 = sbr.rel target = $region3
  $region8: #{preact_bottleneck.5} parent=0 // loop_exit
    _

// kernel: preact_bottleneck.7
$region0: #{preact_bottleneck.7}
  #allocation0 [shape = 'u32[]', space=smem, size = 0x4, offset = 0x4, fixed_abs, tag = 'smem constant byte address 0x4 - core index']
  #allocation1 [shape = 'u32[144,128]{1,0:T(1,128)}', space=vmem, size = 0x12000, scoped, tag = 'internal scratch']
  #allocation2 [shape = 'f32[128,32]{1,0:T(8,128)}', space=vmem, size = 0x10000, scoped, tag = 'scratch operand']
  %s0 = inlined_call_operand.vmem [shape: bf16[128,8], index: 0, kind: input, shape index: {}]
  %s1 = inlined_call_operand.vmem [shape: bf16[8,32], index: 1, kind: input, shape index: {}]
  %s2 = inlined_call_operand.vmem [shape: f32[128,32], index: 2, kind: input, shape index: {}]
  %s3 = inlined_call_operand.hbm [shape: f32[128,32], index: 3, kind: output, shape index: {}]
  %s4 = sld [smem:[#allocation0]]
  $region30: #{preact_bottleneck.7} parent=0
    _
  %s6 = ssub.s32 1, %s4
  %s7 = scalar_select 0, %s6, %s4
  $region1: #{preact_bottleneck.7} parent=0
    #allocation3 [shape = 'u8[65536]{0}', space=vmem, size = 0x10000, scoped, tag = 'output window, operand 0, single buffered']
    #allocation4 [shape = 's32[1]{0}', space=sflag, size = 0x4, scoped, tag = 'scoped memory for preact_bottleneck.7']
    %8 = vsyncpa [#allocation4], 0
    // Predicated region
    $region2: #{preact_bottleneck.7} parent=1 // pred_check
      _
    $region3: #{preact_bottleneck.7} parent=1 // pred_check_branch
      %10 = sbr.rel (0) target = $region5
    $region4: #{preact_bottleneck.7} parent=1 // pred_region
      _
    $region5: #{preact_bottleneck.7} parent=1 // pred_fallthru
      _
    // Predicated region
    $region6: #{preact_bottleneck.7} parent=1 // pred_check
      _
    $region7: #{preact_bottleneck.7} parent=1 // pred_check_branch
      %12 = sbr.rel (0) target = $region9
    $region8: #{preact_bottleneck.7} parent=1 // pred_region
      _
    $region9: #{preact_bottleneck.7} parent=1 // pred_fallthru
      _
    // Predicated region
    $region10: #{preact_bottleneck.7} parent=1 // pred_check
      _
    $region11: #{preact_bottleneck.7} parent=1 // pred_check_branch
      %14 = sbr.rel (0) target = $region13
    $region12: #{preact_bottleneck.7} parent=1 // pred_region
      _
    $region13: #{preact_bottleneck.7} parent=1 // pred_fallthru
      _
    %p16 = scmp.eq.s32.totalorder 0, 0
    // Predicated region
    $region14: #{preact_bottleneck.7} parent=1 // pred_check
      %p17 = pneg %p16
    $region15: #{preact_bottleneck.7} parent=1 // pred_check_branch
      %19 = sbr.rel (%p17) target = $region17
    $region16: #{preact_bottleneck.7} parent=1 // pred_region
      %vm20 = vcmask 261120
      %21 = vst.msk [vmem:[#allocation2] sm:$0xff] %vm20, 0.0
      %22 = vst.msk [vmem:[#allocation2 + $0x8] sm:$0xff] %vm20, 0.0
      %23 = vst.msk [vmem:[#allocation2 + $0x10] sm:$0xff] %vm20, 0.0
      %24 = vst.msk [vmem:[#allocation2 + $0x18] sm:$0xff] %vm20, 0.0
      %25 = vst.msk [vmem:[#allocation2 + $0x20] sm:$0xff] %vm20, 0.0
      %26 = vst.msk [vmem:[#allocation2 + $0x28] sm:$0xff] %vm20, 0.0
      %27 = vst.msk [vmem:[#allocation2 + $0x30] sm:$0xff] %vm20, 0.0
      %28 = vst.msk [vmem:[#allocation2 + $0x38] sm:$0xff] %vm20, 0.0
      %29 = vst.msk [vmem:[#allocation2 + $0x40] sm:$0xff] %vm20, 0.0
      %30 = vst.msk [vmem:[#allocation2 + $0x48] sm:$0xff] %vm20, 0.0
      %31 = vst.msk [vmem:[#allocation2 + $0x50] sm:$0xff] %vm20, 0.0
      %32 = vst.msk [vmem:[#allocation2 + $0x58] sm:$0xff] %vm20, 0.0
      %33 = vst.msk [vmem:[#allocation2 + $0x60] sm:$0xff] %vm20, 0.0
      %34 = vst.msk [vmem:[#allocation2 + $0x68] sm:$0xff] %vm20, 0.0
      %35 = vst.msk [vmem:[#allocation2 + $0x70] sm:$0xff] %vm20, 0.0
      %36 = vst.msk [vmem:[#allocation2 + $0x78] sm:$0xff] %vm20, 0.0
    $region17: #{preact_bottleneck.7} parent=1 // pred_fallthru
      _
    %v37 = vld [vmem:[%s0] sm:$0xf]
    %v38 = vld [vmem:[%s0 + $0x4] sm:$0xf]
    %v39 = vld [vmem:[%s0 + $0x8] sm:$0xf]
    %v40 = vld [vmem:[%s0 + $0xc] sm:$0xf]
    %v41 = vld [vmem:[%s0 + $0x10] sm:$0xf]
    %v42 = vld [vmem:[%s0 + $0x14] sm:$0xf]
    %v43 = vld [vmem:[%s0 + $0x18] sm:$0xf]
    %v44 = vld [vmem:[%s0 + $0x1c] sm:$0xf]
    %v45 = vld [vmem:[%s0 + $0x20] sm:$0xf]
    %v46 = vld [vmem:[%s0 + $0x24] sm:$0xf]
    %v47 = vld [vmem:[%s0 + $0x28] sm:$0xf]
    %v48 = vld [vmem:[%s0 + $0x2c] sm:$0xf]
    %v49 = vld [vmem:[%s0 + $0x30] sm:$0xf]
    %v50 = vld [vmem:[%s0 + $0x34] sm:$0xf]
    %v51 = vld [vmem:[%s0 + $0x38] sm:$0xf]
    %v52 = vld [vmem:[%s0 + $0x3c] sm:$0xf]
    %v53 = vld [vmem:[#allocation2] sm:$0xff]
    %v54 = vld [vmem:[#allocation2 + $0x8] sm:$0xff]
    %v55 = vld [vmem:[#allocation2 + $0x10] sm:$0xff]
    %v56 = vld [vmem:[#allocation2 + $0x18] sm:$0xff]
    %v57 = vld [vmem:[#allocation2 + $0x20] sm:$0xff]
    %v58 = vld [vmem:[#allocation2 + $0x28] sm:$0xff]
    %v59 = vld [vmem:[#allocation2 + $0x30] sm:$0xff]
    %v60 = vld [vmem:[#allocation2 + $0x38] sm:$0xff]
    %v61 = vld [vmem:[#allocation2 + $0x40] sm:$0xff]
    %v62 = vld [vmem:[#allocation2 + $0x48] sm:$0xff]
    %v63 = vld [vmem:[#allocation2 + $0x50] sm:$0xff]
    %v64 = vld [vmem:[#allocation2 + $0x58] sm:$0xff]
    %v65 = vld [vmem:[#allocation2 + $0x60] sm:$0xff]
    %v66 = vld [vmem:[#allocation2 + $0x68] sm:$0xff]
    %v67 = vld [vmem:[#allocation2 + $0x70] sm:$0xff]
    %v68 = vld [vmem:[#allocation2 + $0x78] sm:$0xff]
    %v69 = vld [vmem:[%s1] sm:$0xf]
    %v86 = vunpack.c.l.b16 %v37
    %v87 = vunpack.c.l.b16 %v38
    %v88 = vunpack.c.l.b16 %v39
    %v89 = vunpack.c.l.b16 %v40
    %v90 = vunpack.c.l.b16 %v41
    %v91 = vunpack.c.l.b16 %v42
    %v92 = vunpack.c.l.b16 %v43
    %v93 = vunpack.c.l.b16 %v44
    %v94 = vunpack.c.l.b16 %v45
    %v95 = vunpack.c.l.b16 %v46
    %v96 = vunpack.c.l.b16 %v47
    %v97 = vunpack.c.l.b16 %v48
    %v98 = vunpack.c.l.b16 %v49
    %v99 = vunpack.c.l.b16 %v50
    %v100 = vunpack.c.l.b16 %v51
    %v101 = vunpack.c.l.b16 %v52
    %v102 = vpack.c.b16 %v87, %v86
    %v103 = vpack.c.b16 %v89, %v88
    %v104 = vpack.c.b16 %v91, %v90
    %v105 = vpack.c.b16 %v93, %v92
    %v106 = vpack.c.b16 %v95, %v94
    %v107 = vpack.c.b16 %v97, %v96
    %v108 = vpack.c.b16 %v99, %v98
    %v109 = vpack.c.b16 %v101, %v100
    %vm110 = vcmask 64512
    %v112 = vsel %vm110, %v102, 0
    %v115 = vsel %vm110, %v103, 0
    %v118 = vsel %vm110, %v104, 0
    %v121 = vsel %vm110, %v105, 0
    %v124 = vsel %vm110, %v106, 0
    %v127 = vsel %vm110, %v107, 0
    %v130 = vsel %vm110, %v108, 0
    %v133 = vsel %vm110, %v109, 0
    %vm135 = vcmask 1043456
    %v137 = vsel %vm135, %v69, 0
    %139 = vmatprep.subr.bf16.mxu0 0
    %140 = vmatpush1.bf16.msra.mxu0 0
    %141 = vmatprep.subr.bf16.mxu0 0
    %142 = vmatpush1.bf16.msra.mxu0 0
    %143 = vmatprep.subr.bf16.mxu0 0
    %144 = vmatpush1.bf16.msra.mxu0 0
    %145 = vmatprep.subr.bf16.mxu0 0
    %146 = vmatpush1.bf16.msra.mxu0 0
    %147 = vmatprep.subr.bf16.mxu0 0
    %148 = vmatpush1.bf16.msra.mxu0 0
    %149 = vmatprep.subr.bf16.mxu0 0
    %150 = vmatpush1.bf16.msra.mxu0 0
    %151 = vmatprep.subr.bf16.mxu0 0
    %152 = vmatpush1.bf16.msra.mxu0 0
    %153 = vmatprep.subr.bf16.mxu0 0
    %154 = vmatpush1.bf16.msra.mxu0 %v137
    %155 = vmatprep.subr.bf16.mxu0 0
    %156 = vmatpush2.bf16.msra.mxu0 0
    %157 = vmatprep.subr.bf16.mxu0 0
    %158 = vmatpush2.bf16.msra.mxu0 0
    %159 = vmatprep.subr.bf16.mxu0 0
    %160 = vmatpush2.bf16.msra.mxu0 0
    %161 = vmatprep.subr.bf16.mxu0 0
    %162 = vmatpush2.bf16.msra.mxu0 0
    %163 = vmatprep.subr.bf16.mxu0 0
    %164 = vmatpush2.bf16.msra.mxu0 0
    %165 = vmatprep.subr.bf16.mxu0 0
    %166 = vmatpush2.bf16.msra.mxu0 0
    %167 = vmatprep.subr.bf16.mxu0 0
    %168 = vmatpush2.bf16.msra.mxu0 0
    %169 = vmatprep.subr.bf16.mxu0 0
    %170 = vmatpush2.bf16.msra.mxu0 0
    %171 = vmatprep.mubr.bf16.mxu0 0
    %172 = vmatmul.mubr.bf16.gmra.mxu0 %v112
    %v173 = vpop.f32.mrf.mxu0
    %v174 = vadd.f32 0.0, %v173
    %v175 = vpop.f32.mrf.mxu0
    %v176 = vpop.f32.mrf.mxu0
    %v177 = vadd.f32 0.0, %v176
    %v178 = vpop.f32.mrf.mxu0
    %179 = vmatprep.mubr.bf16.mxu0 0
    %180 = vmatmul.mubr.bf16.gmra.mxu0 %v115
    %v181 = vpop.f32.mrf.mxu0
    %v182 = vadd.f32 0.0, %v181
    %v183 = vpop.f32.mrf.mxu0
    %v184 = vpop.f32.mrf.mxu0
    %v185 = vadd.f32 0.0, %v184
    %v186 = vpop.f32.mrf.mxu0
    %187 = vmatprep.mubr.bf16.mxu0 0
    %188 = vmatmul.mubr.bf16.gmra.mxu0 %v118
    %v189 = vpop.f32.mrf.mxu0
    %v190 = vadd.f32 0.0, %v189
    %v191 = vpop.f32.mrf.mxu0
    %v192 = vpop.f32.mrf.mxu0
    %v193 = vadd.f32 0.0, %v192
    %v194 = vpop.f32.mrf.mxu0
    %195 = vmatprep.mubr.bf16.mxu0 0
    %196 = vmatmul.mubr.bf16.gmra.mxu0 %v121
    %v197 = vpop.f32.mrf.mxu0
    %v198 = vadd.f32 0.0, %v197
    %v199 = vpop.f32.mrf.mxu0
    %v200 = vpop.f32.mrf.mxu0
    %v201 = vadd.f32 0.0, %v200
    %v202 = vpop.f32.mrf.mxu0
    %203 = vmatprep.mubr.bf16.mxu0 0
    %204 = vmatmul.mubr.bf16.gmra.mxu0 %v124
    %v205 = vpop.f32.mrf.mxu0
    %v206 = vadd.f32 0.0, %v205
    %v207 = vpop.f32.mrf.mxu0
    %v208 = vpop.f32.mrf.mxu0
    %v209 = vadd.f32 0.0, %v208
    %v210 = vpop.f32.mrf.mxu0
    %211 = vmatprep.mubr.bf16.mxu0 0
    %212 = vmatmul.mubr.bf16.gmra.mxu0 %v127
    %v213 = vpop.f32.mrf.mxu0
    %v214 = vadd.f32 0.0, %v213
    %v215 = vpop.f32.mrf.mxu0
    %v216 = vpop.f32.mrf.mxu0
    %v217 = vadd.f32 0.0, %v216
    %v218 = vpop.f32.mrf.mxu0
    %219 = vmatprep.mubr.bf16.mxu0 0
    %220 = vmatmul.mubr.bf16.gmra.mxu0 %v130
    %v221 = vpop.f32.mrf.mxu0
    %v222 = vadd.f32 0.0, %v221
    %v223 = vpop.f32.mrf.mxu0
    %v224 = vpop.f32.mrf.mxu0
    %v225 = vadd.f32 0.0, %v224
    %v226 = vpop.f32.mrf.mxu0
    %227 = vmatprep.mubr.bf16.mxu0 0
    %228 = vmatmul.mubr.bf16.gmra.mxu0 %v133
    %v229 = vpop.f32.mrf.mxu0
    %v230 = vadd.f32 0.0, %v229
    %v231 = vpop.f32.mrf.mxu0
    %v232 = vpop.f32.mrf.mxu0
    %v233 = vadd.f32 0.0, %v232
    %v234 = vpop.f32.mrf.mxu0
    %235 = vdwg.mxu0
    %v236 = vadd.f32 %v53, %v174
    %v237 = vadd.f32 %v54, %v177
    %v238 = vadd.f32 %v55, %v182
    %v239 = vadd.f32 %v56, %v185
    %v240 = vadd.f32 %v57, %v190
    %v241 = vadd.f32 %v58, %v193
    %v242 = vadd.f32 %v59, %v198
    %v243 = vadd.f32 %v60, %v201
    %v244 = vadd.f32 %v61, %v206
    %v245 = vadd.f32 %v62, %v209
    %v246 = vadd.f32 %v63, %v214
    %v247 = vadd.f32 %v64, %v217
    %v248 = vadd.f32 %v65, %v222
    %v249 = vadd.f32 %v66, %v225
    %v250 = vadd.f32 %v67, %v230
    %v251 = vadd.f32 %v68, %v233
    %vm252 = vcmask 261120
    %253 = vst.msk [vmem:[#allocation2] sm:$0xff] %vm252, %v236
    %254 = vst.msk [vmem:[#allocation2 + $0x8] sm:$0xff] %vm252, %v237
    %255 = vst.msk [vmem:[#allocation2 + $0x10] sm:$0xff] %vm252, %v238
    %256 = vst.msk [vmem:[#allocation2 + $0x18] sm:$0xff] %vm252, %v239
    %257 = vst.msk [vmem:[#allocation2 + $0x20] sm:$0xff] %vm252, %v240
    %258 = vst.msk [vmem:[#allocation2 + $0x28] sm:$0xff] %vm252, %v241
    %259 = vst.msk [vmem:[#allocation2 + $0x30] sm:$0xff] %vm252, %v242
    %260 = vst.msk [vmem:[#allocation2 + $0x38] sm:$0xff] %vm252, %v243
    %261 = vst.msk [vmem:[#allocation2 + $0x40] sm:$0xff] %vm252, %v244
    %262 = vst.msk [vmem:[#allocation2 + $0x48] sm:$0xff] %vm252, %v245
    %263 = vst.msk [vmem:[#allocation2 + $0x50] sm:$0xff] %vm252, %v246
    %264 = vst.msk [vmem:[#allocation2 + $0x58] sm:$0xff] %vm252, %v247
    %265 = vst.msk [vmem:[#allocation2 + $0x60] sm:$0xff] %vm252, %v248
    %266 = vst.msk [vmem:[#allocation2 + $0x68] sm:$0xff] %vm252, %v249
    %267 = vst.msk [vmem:[#allocation2 + $0x70] sm:$0xff] %vm252, %v250
    %268 = vst.msk [vmem:[#allocation2 + $0x78] sm:$0xff] %vm252, %v251
    // Predicated region
    $region18: #{preact_bottleneck.7} parent=1 // pred_check
      %p269 = pneg %p16
    $region19: #{preact_bottleneck.7} parent=1 // pred_check_branch
      %271 = sbr.rel (%p269) target = $region21
    $region20: #{preact_bottleneck.7} parent=1 // pred_region
      %v272 = vld [vmem:[#allocation2] sm:$0xff]
      %v273 = vld [vmem:[#allocation2 + $0x8] sm:$0xff]
      %v274 = vld [vmem:[#allocation2 + $0x10] sm:$0xff]
      %v275 = vld [vmem:[#allocation2 + $0x18] sm:$0xff]
      %v276 = vld [vmem:[#allocation2 + $0x20] sm:$0xff]
      %v277 = vld [vmem:[#allocation2 + $0x28] sm:$0xff]
      %v278 = vld [vmem:[#allocation2 + $0x30] sm:$0xff]
      %v279 = vld [vmem:[#allocation2 + $0x38] sm:$0xff]
      %v280 = vld [vmem:[#allocation2 + $0x40] sm:$0xff]
      %v281 = vld [vmem:[#allocation2 + $0x48] sm:$0xff]
      %v282 = vld [vmem:[#allocation2 + $0x50] sm:$0xff]
      %v283 = vld [vmem:[#allocation2 + $0x58] sm:$0xff]
      %v284 = vld [vmem:[#allocation2 + $0x60] sm:$0xff]
      %v285 = vld [vmem:[#allocation2 + $0x68] sm:$0xff]
      %v286 = vld [vmem:[#allocation2 + $0x70] sm:$0xff]
      %v287 = vld [vmem:[#allocation2 + $0x78] sm:$0xff]
      %v288 = vld [vmem:[%s2] sm:$0xff]
      %v289 = vld [vmem:[%s2 + $0x8] sm:$0xff]
      %v290 = vld [vmem:[%s2 + $0x10] sm:$0xff]
      %v291 = vld [vmem:[%s2 + $0x18] sm:$0xff]
      %v292 = vld [vmem:[%s2 + $0x20] sm:$0xff]
      %v293 = vld [vmem:[%s2 + $0x28] sm:$0xff]
      %v294 = vld [vmem:[%s2 + $0x30] sm:$0xff]
      %v295 = vld [vmem:[%s2 + $0x38] sm:$0xff]
      %v296 = vld [vmem:[%s2 + $0x40] sm:$0xff]
      %v297 = vld [vmem:[%s2 + $0x48] sm:$0xff]
      %v298 = vld [vmem:[%s2 + $0x50] sm:$0xff]
      %v299 = vld [vmem:[%s2 + $0x58] sm:$0xff]
      %v300 = vld [vmem:[%s2 + $0x60] sm:$0xff]
      %v301 = vld [vmem:[%s2 + $0x68] sm:$0xff]
      %v302 = vld [vmem:[%s2 + $0x70] sm:$0xff]
      %v303 = vld [vmem:[%s2 + $0x78] sm:$0xff]
      %v304 = vadd.f32 %v272, %v288
      %v305 = vadd.f32 %v273, %v289
      %v306 = vadd.f32 %v274, %v290
      %v307 = vadd.f32 %v275, %v291
      %v308 = vadd.f32 %v276, %v292
      %v309 = vadd.f32 %v277, %v293
      %v310 = vadd.f32 %v278, %v294
      %v311 = vadd.f32 %v279, %v295
      %v312 = vadd.f32 %v280, %v296
      %v313 = vadd.f32 %v281, %v297
      %v314 = vadd.f32 %v282, %v298
      %v315 = vadd.f32 %v283, %v299
      %v316 = vadd.f32 %v284, %v300
      %v317 = vadd.f32 %v285, %v301
      %v318 = vadd.f32 %v286, %v302
      %v319 = vadd.f32 %v287, %v303
      %320 = vst.msk [vmem:[#allocation3] sm:$0xff] %vm252, %v304
      %321 = vst.msk [vmem:[#allocation3 + $0x8] sm:$0xff] %vm252, %v305
      %322 = vst.msk [vmem:[#allocation3 + $0x10] sm:$0xff] %vm252, %v306
      %323 = vst.msk [vmem:[#allocation3 + $0x18] sm:$0xff] %vm252, %v307
      %324 = vst.msk [vmem:[#allocation3 + $0x20] sm:$0xff] %vm252, %v308
      %325 = vst.msk [vmem:[#allocation3 + $0x28] sm:$0xff] %vm252, %v309
      %326 = vst.msk [vmem:[#allocation3 + $0x30] sm:$0xff] %vm252, %v310
      %327 = vst.msk [vmem:[#allocation3 + $0x38] sm:$0xff] %vm252, %v311
      %328 = vst.msk [vmem:[#allocation3 + $0x40] sm:$0xff] %vm252, %v312
      %329 = vst.msk [vmem:[#allocation3 + $0x48] sm:$0xff] %vm252, %v313
      %330 = vst.msk [vmem:[#allocation3 + $0x50] sm:$0xff] %vm252, %v314
      %331 = vst.msk [vmem:[#allocation3 + $0x58] sm:$0xff] %vm252, %v315
      %332 = vst.msk [vmem:[#allocation3 + $0x60] sm:$0xff] %vm252, %v316
      %333 = vst.msk [vmem:[#allocation3 + $0x68] sm:$0xff] %vm252, %v317
      %334 = vst.msk [vmem:[#allocation3 + $0x70] sm:$0xff] %vm252, %v318
      %335 = vst.msk [vmem:[#allocation3 + $0x78] sm:$0xff] %vm252, %v319
    $region21: #{preact_bottleneck.7} parent=1 // pred_fallthru
      _
    // Predicated region
    $region22: #{preact_bottleneck.7} parent=1 // pred_check
      _
    $region23: #{preact_bottleneck.7} parent=1 // pred_check_branch
      %337 = sbr.rel (0) target = $region25
    $region24: #{preact_bottleneck.7} parent=1 // pred_region
      %s339 = ssub.s32 2048, 2048
      %340 = vsyncadd [#allocation4], %s339
      %s341 = sshll.u32 [#allocation3], 4
      %s342 = int_to_ptr.vmem [resolvable:$true] %s341
      %347 = dma.vmem_to_hbm [thread:$0]  %s342, 2048, %s3, [#allocation4], 128, 128, 8
    $region25: #{preact_bottleneck.7} parent=1 // pred_fallthru
      _
    // Predicated region
    $region26: #{preact_bottleneck.7} parent=1 // pred_check
      _
    $region27: #{preact_bottleneck.7} parent=1 // pred_check_branch
      %349 = sbr.rel (0) target = $region29
    $region28: #{preact_bottleneck.7} parent=1 // pred_region
      %350 = dma.done [#allocation4], 2048
    $region29: #{preact_bottleneck.7} parent=1 // pred_fallthru
      _
    %351 = vsyncpa [#allocation4], 1

// kernel: preact_bottleneck.4
$region0: #{preact_bottleneck.4}
  #allocation0 [shape = 'u32[]', space=smem, size = 0x4, offset = 0x4, fixed_abs, tag = 'smem constant byte address 0x4 - core index']
  #allocation1 [shape = 'u32[144,128]{1,0:T(1,128)}', space=vmem, size = 0x12000, scoped, tag = 'internal scratch']
  #allocation2 [shape = 'f32[512,8]{1,0:T(8,128)}', space=vmem, size = 0x40000, scoped, tag = 'scratch operand']
  %s0 = inlined_call_operand.vmem [shape: f32[512,16], index: 0, kind: input, shape index: {}]
  %s1 = inlined_call_operand.vmem [shape: bf16[16,8], index: 1, kind: input, shape index: {}]
  %s2 = inlined_call_operand.vmem [shape: f32[1,16], index: 2, kind: input, shape index: {}]
  %s3 = inlined_call_operand.vmem [shape: f32[1,16], index: 3, kind: input, shape index: {}]
  %s4 = inlined_call_operand.vmem [shape: f32[1,8], index: 4, kind: input, shape index: {}]
  %s5 = inlined_call_operand.vmem [shape: f32[1,8], index: 5, kind: input, shape index: {}]
  %s6 = inlined_call_operand.vmem [shape: bf16[512,8], index: 6, kind: output, shape index: {}]
  %s7 = sld [smem:[#allocation0]]
  $region42: #{preact_bottleneck.4} parent=0
    _
  %s9 = ssub.s32 1, %s7
  %s10 = scalar_select 0, %s9, %s7
  // Predicated region
  $region2: #{preact_bottleneck.4} parent=0 // pred_check
    _
  $region3: #{preact_bottleneck.4} parent=0 // pred_check_branch
    %12 = sbr.rel (0) target = $region5
  $region4: #{preact_bottleneck.4} parent=0 // pred_region
    _
  $region5: #{preact_bottleneck.4} parent=0 // pred_fallthru
    _
  // Predicated region
  $region6: #{preact_bottleneck.4} parent=0 // pred_check
    _
  $region7: #{preact_bottleneck.4} parent=0 // pred_check_branch
    %14 = sbr.rel (0) target = $region9
  $region8: #{preact_bottleneck.4} parent=0 // pred_region
    _
  $region9: #{preact_bottleneck.4} parent=0 // pred_fallthru
    _
  // Predicated region
  $region10: #{preact_bottleneck.4} parent=0 // pred_check
    _
  $region11: #{preact_bottleneck.4} parent=0 // pred_check_branch
    %16 = sbr.rel (0) target = $region13
  $region12: #{preact_bottleneck.4} parent=0 // pred_region
    _
  $region13: #{preact_bottleneck.4} parent=0 // pred_fallthru
    _
  // Predicated region
  $region14: #{preact_bottleneck.4} parent=0 // pred_check
    _
  $region15: #{preact_bottleneck.4} parent=0 // pred_check_branch
    %18 = sbr.rel (0) target = $region17
  $region16: #{preact_bottleneck.4} parent=0 // pred_region
    _
  $region17: #{preact_bottleneck.4} parent=0 // pred_fallthru
    _
  // Predicated region
  $region18: #{preact_bottleneck.4} parent=0 // pred_check
    _
  $region19: #{preact_bottleneck.4} parent=0 // pred_check_branch
    %20 = sbr.rel (0) target = $region21
  $region20: #{preact_bottleneck.4} parent=0 // pred_region
    _
  $region21: #{preact_bottleneck.4} parent=0 // pred_fallthru
    _
  // Predicated region
  $region22: #{preact_bottleneck.4} parent=0 // pred_check
    _
  $region23: #{preact_bottleneck.4} parent=0 // pred_check_branch
    %22 = sbr.rel (0) target = $region25
  $region24: #{preact_bottleneck.4} parent=0 // pred_region
    _
  $region25: #{preact_bottleneck.4} parent=0 // pred_fallthru
    _
  %p24 = scmp.eq.s32.totalorder 0, 0
  // Predicated region
  $region26: #{preact_bottleneck.4} parent=0 // pred_check
    %p25 = pneg %p24
  $region27: #{preact_bottleneck.4} parent=0 // pred_check_branch
    %27 = sbr.rel (%p25) target = $region29
  $region28: #{preact_bottleneck.4} parent=0 // pred_region
    %vm28 = vcmask 64512
    %29 = vst.msk [vmem:[#allocation2] sm:$0xff] %vm28, 0.0
    %30 = vst.msk [vmem:[#allocation2 + $0x8] sm:$0xff] %vm28, 0.0
    %31 = vst.msk [vmem:[#allocation2 + $0x10] sm:$0xff] %vm28, 0.0
    %32 = vst.msk [vmem:[#allocation2 + $0x18] sm:$0xff] %vm28, 0.0
    %33 = vst.msk [vmem:[#allocation2 + $0x20] sm:$0xff] %vm28, 0.0
    %34 = vst.msk [vmem:[#allocation2 + $0x28] sm:$0xff] %vm28, 0.0
    %35 = vst.msk [vmem:[#allocation2 + $0x30] sm:$0xff] %vm28, 0.0
    %36 = vst.msk [vmem:[#allocation2 + $0x38] sm:$0xff] %vm28, 0.0
    %37 = vst.msk [vmem:[#allocation2 + $0x40] sm:$0xff] %vm28, 0.0
    %38 = vst.msk [vmem:[#allocation2 + $0x48] sm:$0xff] %vm28, 0.0
    %39 = vst.msk [vmem:[#allocation2 + $0x50] sm:$0xff] %vm28, 0.0
    %40 = vst.msk [vmem:[#allocation2 + $0x58] sm:$0xff] %vm28, 0.0
    %41 = vst.msk [vmem:[#allocation2 + $0x60] sm:$0xff] %vm28, 0.0
    %42 = vst.msk [vmem:[#allocation2 + $0x68] sm:$0xff] %vm28, 0.0
    %43 = vst.msk [vmem:[#allocation2 + $0x70] sm:$0xff] %vm28, 0.0
    %44 = vst.msk [vmem:[#allocation2 + $0x78] sm:$0xff] %vm28, 0.0
    %45 = vst.msk [vmem:[#allocation2 + $0x80] sm:$0xff] %vm28, 0.0
    %46 = vst.msk [vmem:[#allocation2 + $0x88] sm:$0xff] %vm28, 0.0
    %47 = vst.msk [vmem:[#allocation2 + $0x90] sm:$0xff] %vm28, 0.0
    %48 = vst.msk [vmem:[#allocation2 + $0x98] sm:$0xff] %vm28, 0.0
    %49 = vst.msk [vmem:[#allocation2 + $0xa0] sm:$0xff] %vm28, 0.0
    %50 = vst.msk [vmem:[#allocation2 + $0xa8] sm:$0xff] %vm28, 0.0
    %51 = vst.msk [vmem:[#allocation2 + $0xb0] sm:$0xff] %vm28, 0.0
    %52 = vst.msk [vmem:[#allocation2 + $0xb8] sm:$0xff] %vm28, 0.0
    %53 = vst.msk [vmem:[#allocation2 + $0xc0] sm:$0xff] %vm28, 0.0
    %54 = vst.msk [vmem:[#allocation2 + $0xc8] sm:$0xff] %vm28, 0.0
    %55 = vst.msk [vmem:[#allocation2 + $0xd0] sm:$0xff] %vm28, 0.0
    %56 = vst.msk [vmem:[#allocation2 + $0xd8] sm:$0xff] %vm28, 0.0
    %57 = vst.msk [vmem:[#allocation2 + $0xe0] sm:$0xff] %vm28, 0.0
    %58 = vst.msk [vmem:[#allocation2 + $0xe8] sm:$0xff] %vm28, 0.0
    %59 = vst.msk [vmem:[#allocation2 + $0xf0] sm:$0xff] %vm28, 0.0
    %60 = vst.msk [vmem:[#allocation2 + $0xf8] sm:$0xff] %vm28, 0.0
    %61 = vst.msk [vmem:[#allocation2 + $0x100] sm:$0xff] %vm28, 0.0
    %62 = vst.msk [vmem:[#allocation2 + $0x108] sm:$0xff] %vm28, 0.0
    %63 = vst.msk [vmem:[#allocation2 + $0x110] sm:$0xff] %vm28, 0.0
    %64 = vst.msk [vmem:[#allocation2 + $0x118] sm:$0xff] %vm28, 0.0
    %65 = vst.msk [vmem:[#allocation2 + $0x120] sm:$0xff] %vm28, 0.0
    %66 = vst.msk [vmem:[#allocation2 + $0x128] sm:$0xff] %vm28, 0.0
    %67 = vst.msk [vmem:[#allocation2 + $0x130] sm:$0xff] %vm28, 0.0
    %68 = vst.msk [vmem:[#allocation2 + $0x138] sm:$0xff] %vm28, 0.0
    %69 = vst.msk [vmem:[#allocation2 + $0x140] sm:$0xff] %vm28, 0.0
    %70 = vst.msk [vmem:[#allocation2 + $0x148] sm:$0xff] %vm28, 0.0
    %71 = vst.msk [vmem:[#allocation2 + $0x150] sm:$0xff] %vm28, 0.0
    %72 = vst.msk [vmem:[#allocation2 + $0x158] sm:$0xff] %vm28, 0.0
    %73 = vst.msk [vmem:[#allocation2 + $0x160] sm:$0xff] %vm28, 0.0
    %74 = vst.msk [vmem:[#allocation2 + $0x168] sm:$0xff] %vm28, 0.0
    %75 = vst.msk [vmem:[#allocation2 + $0x170] sm:$0xff] %vm28, 0.0
    %76 = vst.msk [vmem:[#allocation2 + $0x178] sm:$0xff] %vm28, 0.0
    %77 = vst.msk [vmem:[#allocation2 + $0x180] sm:$0xff] %vm28, 0.0
    %78 = vst.msk [vmem:[#allocation2 + $0x188] sm:$0xff] %vm28, 0.0
    %79 = vst.msk [vmem:[#allocation2 + $0x190] sm:$0xff] %vm28, 0.0
    %80 = vst.msk [vmem:[#allocation2 + $0x198] sm:$0xff] %vm28, 0.0
    %81 = vst.msk [vmem:[#allocation2 + $0x1a0] sm:$0xff] %vm28, 0.0
    %82 = vst.msk [vmem:[#allocation2 + $0x1a8] sm:$0xff] %vm28, 0.0
    %83 = vst.msk [vmem:[#allocation2 + $0x1b0] sm:$0xff] %vm28, 0.0
    %84 = vst.msk [vmem:[#allocation2 + $0x1b8] sm:$0xff] %vm28, 0.0
    %85 = vst.msk [vmem:[#allocation2 + $0x1c0] sm:$0xff] %vm28, 0.0
    %86 = vst.msk [vmem:[#allocation2 + $0x1c8] sm:$0xff] %vm28, 0.0
    %87 = vst.msk [vmem:[#allocation2 + $0x1d0] sm:$0xff] %vm28, 0.0
    %88 = vst.msk [vmem:[#allocation2 + $0x1d8] sm:$0xff] %vm28, 0.0
    %89 = vst.msk [vmem:[#allocation2 + $0x1e0] sm:$0xff] %vm28, 0.0
    %90 = vst.msk [vmem:[#allocation2 + $0x1e8] sm:$0xff] %vm28, 0.0
    %91 = vst.msk [vmem:[#allocation2 + $0x1f0] sm:$0xff] %vm28, 0.0
    %92 = vst.msk [vmem:[#allocation2 + $0x1f8] sm:$0xff] %vm28, 0.0
  $region29: #{preact_bottleneck.4} parent=0 // pred_fallthru
    _
  %v93 = vld [vmem:[%s0] sm:$0xff]
  %v94 = vld [vmem:[%s0 + $0x8] sm:$0xff]
  %v95 = vld [vmem:[%s0 + $0x10] sm:$0xff]
  %v96 = vld [vmem:[%s0 + $0x18] sm:$0xff]
  %v97 = vld [vmem:[%s0 + $0x20] sm:$0xff]
  %v98 = vld [vmem:[%s0 + $0x28] sm:$0xff]
  %v99 = vld [vmem:[%s0 + $0x30] sm:$0xff]
  %v100 = vld [vmem:[%s0 + $0x38] sm:$0xff]
  %v101 = vld [vmem:[%s0 + $0x40] sm:$0xff]
  %v102 = vld [vmem:[%s0 + $0x48] sm:$0xff]
  %v103 = vld [vmem:[%s0 + $0x50] sm:$0xff]
  %v104 = vld [vmem:[%s0 + $0x58] sm:$0xff]
  %v105 = vld [vmem:[%s0 + $0x60] sm:$0xff]
  %v106 = vld [vmem:[%s0 + $0x68] sm:$0xff]
  %v107 = vld [vmem:[%s0 + $0x70] sm:$0xff]
  %v108 = vld [vmem:[%s0 + $0x78] sm:$0xff]
  %v109 = vld [vmem:[%s0 + $0x80] sm:$0xff]
  %v110 = vld [vmem:[%s0 + $0x88] sm:$0xff]
  %v111 = vld [vmem:[%s0 + $0x90] sm:$0xff]
  %v112 = vld [vmem:[%s0 + $0x98] sm:$0xff]
  %v113 = vld [vmem:[%s0 + $0xa0] sm:$0xff]
  %v114 = vld [vmem:[%s0 + $0xa8] sm:$0xff]
  %v115 = vld [vmem:[%s0 + $0xb0] sm:$0xff]
  %v116 = vld [vmem:[%s0 + $0xb8] sm:$0xff]
  %v117 = vld [vmem:[%s0 + $0xc0] sm:$0xff]
  %v118 = vld [vmem:[%s0 + $0xc8] sm:$0xff]
  %v119 = vld [vmem:[%s0 + $0xd0] sm:$0xff]
  %v120 = vld [vmem:[%s0 + $0xd8] sm:$0xff]
  %v121 = vld [vmem:[%s0 + $0xe0] sm:$0xff]
  %v122 = vld [vmem:[%s0 + $0xe8] sm:$0xff]
  %v123 = vld [vmem:[%s0 + $0xf0] sm:$0xff]
  %v124 = vld [vmem:[%s0 + $0xf8] sm:$0xff]
  %v125 = vld [vmem:[%s0 + $0x100] sm:$0xff]
  %v126 = vld [vmem:[%s0 + $0x108] sm:$0xff]
  %v127 = vld [vmem:[%s0 + $0x110] sm:$0xff]
  %v128 = vld [vmem:[%s0 + $0x118] sm:$0xff]
  %v129 = vld [vmem:[%s0 + $0x120] sm:$0xff]
  %v130 = vld [vmem:[%s0 + $0x128] sm:$0xff]
  %v131 = vld [vmem:[%s0 + $0x130] sm:$0xff]
  %v132 = vld [vmem:[%s0 + $0x138] sm:$0xff]
  %v133 = vld [vmem:[%s0 + $0x140] sm:$0xff]
  %v134 = vld [vmem:[%s0 + $0x148] sm:$0xff]
  %v135 = vld [vmem:[%s0 + $0x150] sm:$0xff]
  %v136 = vld [vmem:[%s0 + $0x158] sm:$0xff]
  %v137 = vld [vmem:[%s0 + $0x160] sm:$0xff]
  %v138 = vld [vmem:[%s0 + $0x168] sm:$0xff]
  %v139 = vld [vmem:[%s0 + $0x170] sm:$0xff]
  %v140 = vld [vmem:[%s0 + $0x178] sm:$0xff]
  %v141 = vld [vmem:[%s0 + $0x180] sm:$0xff]
  %v142 = vld [vmem:[%s0 + $0x188] sm:$0xff]
  %v143 = vld [vmem:[%s0 + $0x190] sm:$0xff]
  %v144 = vld [vmem:[%s0 + $0x198] sm:$0xff]
  %v145 = vld [vmem:[%s0 + $0x1a0] sm:$0xff]
  %v146 = vld [vmem:[%s0 + $0x1a8] sm:$0xff]
  %v147 = vld [vmem:[%s0 + $0x1b0] sm:$0xff]
  %v148 = vld [vmem:[%s0 + $0x1b8] sm:$0xff]
  %v149 = vld [vmem:[%s0 + $0x1c0] sm:$0xff]
  %v150 = vld [vmem:[%s0 + $0x1c8] sm:$0xff]
  %v151 = vld [vmem:[%s0 + $0x1d0] sm:$0xff]
  %v152 = vld [vmem:[%s0 + $0x1d8] sm:$0xff]
  %v153 = vld [vmem:[%s0 + $0x1e0] sm:$0xff]
  %v154 = vld [vmem:[%s0 + $0x1e8] sm:$0xff]
  %v155 = vld [vmem:[%s0 + $0x1f0] sm:$0xff]
  %v156 = vld [vmem:[%s0 + $0x1f8] sm:$0xff]
  %v157 = vld [vmem:[%s2] sm:$0x1]
  %v159 = vlaneseq
  %v160 = vshrl.u32 %v159, 7
  %v161 = vsub.s32 0, %v160
  %v162 = vrot.slane %v157, %v161
  %v164 = vmul.f32 %v93, %v162
  %v165 = vmul.f32 %v94, %v162
  %v166 = vmul.f32 %v95, %v162
  %v167 = vmul.f32 %v96, %v162
  %v168 = vmul.f32 %v97, %v162
  %v169 = vmul.f32 %v98, %v162
  %v170 = vmul.f32 %v99, %v162
  %v171 = vmul.f32 %v100, %v162
  %v172 = vmul.f32 %v101, %v162
  %v173 = vmul.f32 %v102, %v162
  %v174 = vmul.f32 %v103, %v162
  %v175 = vmul.f32 %v104, %v162
  %v176 = vmul.f32 %v105, %v162
  %v177 = vmul.f32 %v106, %v162
  %v178 = vmul.f32 %v107, %v162
  %v179 = vmul.f32 %v108, %v162
  %v180 = vmul.f32 %v109, %v162
  %v181 = vmul.f32 %v110, %v162
  %v182 = vmul.f32 %v111, %v162
  %v183 = vmul.f32 %v112, %v162
  %v184 = vmul.f32 %v113, %v162
  %v185 = vmul.f32 %v114, %v162
  %v186 = vmul.f32 %v115, %v162
  %v187 = vmul.f32 %v116, %v162
  %v188 = vmul.f32 %v117, %v162
  %v189 = vmul.f32 %v118, %v162
  %v190 = vmul.f32 %v119, %v162
  %v191 = vmul.f32 %v120, %v162
  %v192 = vmul.f32 %v121, %v162
  %v193 = vmul.f32 %v122, %v162
  %v194 = vmul.f32 %v123, %v162
  %v195 = vmul.f32 %v124, %v162
  %v196 = vmul.f32 %v125, %v162
  %v197 = vmul.f32 %v126, %v162
  %v198 = vmul.f32 %v127, %v162
  %v199 = vmul.f32 %v128, %v162
  %v200 = vmul.f32 %v129, %v162
  %v201 = vmul.f32 %v130, %v162
  %v202 = vmul.f32 %v131, %v162
  %v203 = vmul.f32 %v132, %v162
  %v204 = vmul.f32 %v133, %v162
  %v205 = vmul.f32 %v134, %v162
  %v206 = vmul.f32 %v135, %v162
  %v207 = vmul.f32 %v136, %v162
  %v208 = vmul.f32 %v137, %v162
  %v209 = vmul.f32 %v138, %v162
  %v210 = vmul.f32 %v139, %v162
  %v211 = vmul.f32 %v140, %v162
  %v212 = vmul.f32 %v141, %v162
  %v213 = vmul.f32 %v142, %v162
  %v214 = vmul.f32 %v143, %v162
  %v215 = vmul.f32 %v144, %v162
  %v216 = vmul.f32 %v145, %v162
  %v217 = vmul.f32 %v146, %v162
  %v218 = vmul.f32 %v147, %v162
  %v219 = vmul.f32 %v148, %v162
  %v220 = vmul.f32 %v149, %v162
  %v221 = vmul.f32 %v150, %v162
  %v222 = vmul.f32 %v151, %v162
  %v223 = vmul.f32 %v152, %v162
  %v224 = vmul.f32 %v153, %v162
  %v225 = vmul.f32 %v154, %v162
  %v226 = vmul.f32 %v155, %v162
  %v227 = vmul.f32 %v156, %v162
  %v228 = vld [vmem:[%s3] sm:$0x1]
  %v230 = vlaneseq
  %v231 = vshrl.u32 %v230, 7
  %v232 = vsub.s32 0, %v231
  %v233 = vrot.slane %v228, %v232
  %v235 = vadd.f32 %v164, %v233
  %v236 = vadd.f32 %v165, %v233
  %v237 = vadd.f32 %v166, %v233
  %v238 = vadd.f32 %v167, %v233
  %v239 = vadd.f32 %v168, %v233
  %v240 = vadd.f32 %v169, %v233
  %v241 = vadd.f32 %v170, %v233
  %v242 = vadd.f32 %v171, %v233
  %v243 = vadd.f32 %v172, %v233
  %v244 = vadd.f32 %v173, %v233
  %v245 = vadd.f32 %v174, %v233
  %v246 = vadd.f32 %v175, %v233
  %v247 = vadd.f32 %v176, %v233
  %v248 = vadd.f32 %v177, %v233
  %v249 = vadd.f32 %v178, %v233
  %v250 = vadd.f32 %v179, %v233
  %v251 = vadd.f32 %v180, %v233
  %v252 = vadd.f32 %v181, %v233
  %v253 = vadd.f32 %v182, %v233
  %v254 = vadd.f32 %v183, %v233
  %v255 = vadd.f32 %v184, %v233
  %v256 = vadd.f32 %v185, %v233
  %v257 = vadd.f32 %v186, %v233
  %v258 = vadd.f32 %v187, %v233
  %v259 = vadd.f32 %v188, %v233
  %v260 = vadd.f32 %v189, %v233
  %v261 = vadd.f32 %v190, %v233
  %v262 = vadd.f32 %v191, %v233
  %v263 = vadd.f32 %v192, %v233
  %v264 = vadd.f32 %v193, %v233
  %v265 = vadd.f32 %v194, %v233
  %v266 = vadd.f32 %v195, %v233
  %v267 = vadd.f32 %v196, %v233
  %v268 = vadd.f32 %v197, %v233
  %v269 = vadd.f32 %v198, %v233
  %v270 = vadd.f32 %v199, %v233
  %v271 = vadd.f32 %v200, %v233
  %v272 = vadd.f32 %v201, %v233
  %v273 = vadd.f32 %v202, %v233
  %v274 = vadd.f32 %v203, %v233
  %v275 = vadd.f32 %v204, %v233
  %v276 = vadd.f32 %v205, %v233
  %v277 = vadd.f32 %v206, %v233
  %v278 = vadd.f32 %v207, %v233
  %v279 = vadd.f32 %v208, %v233
  %v280 = vadd.f32 %v209, %v233
  %v281 = vadd.f32 %v210, %v233
  %v282 = vadd.f32 %v211, %v233
  %v283 = vadd.f32 %v212, %v233
  %v284 = vadd.f32 %v213, %v233
  %v285 = vadd.f32 %v214, %v233
  %v286 = vadd.f32 %v215, %v233
  %v287 = vadd.f32 %v216, %v233
  %v288 = vadd.f32 %v217, %v233
  %v289 = vadd.f32 %v218, %v233
  %v290 = vadd.f32 %v219, %v233
  %v291 = vadd.f32 %v220, %v233
  %v292 = vadd.f32 %v221, %v233
  %v293 = vadd.f32 %v222, %v233
  %v294 = vadd.f32 %v223, %v233
  %v295 = vadd.f32 %v224, %v233
  %v296 = vadd.f32 %v225, %v233
  %v297 = vadd.f32 %v226, %v233
  %v298 = vadd.f32 %v227, %v233
  %v299 = vmax.f32 %v235, 0.0
  %v300 = vmax.f32 %v236, 0.0
  %v301 = vmax.f32 %v237, 0.0
  %v302 = vmax.f32 %v238, 0.0
  %v303 = vmax.f32 %v239, 0.0
  %v304 = vmax.f32 %v240, 0.0
  %v305 = vmax.f32 %v241, 0.0
  %v306 = vmax.f32 %v242, 0.0
  %v307 = vmax.f32 %v243, 0.0
  %v308 = vmax.f32 %v244, 0.0
  %v309 = vmax.f32 %v245, 0.0
  %v310 = vmax.f32 %v246, 0.0
  %v311 = vmax.f32 %v247, 0.0
  %v312 = vmax.f32 %v248, 0.0
  %v313 = vmax.f32 %v249, 0.0
  %v314 = vmax.f32 %v250, 0.0
  %v315 = vmax.f32 %v251, 0.0
  %v316 = vmax.f32 %v252, 0.0
  %v317 = vmax.f32 %v253, 0.0
  %v318 = vmax.f32 %v254, 0.0
  %v319 = vmax.f32 %v255, 0.0
  %v320 = vmax.f32 %v256, 0.0
  %v321 = vmax.f32 %v257, 0.0
  %v322 = vmax.f32 %v258, 0.0
  %v323 = vmax.f32 %v259, 0.0
  %v324 = vmax.f32 %v260, 0.0
  %v325 = vmax.f32 %v261, 0.0
  %v326 = vmax.f32 %v262, 0.0
  %v327 = vmax.f32 %v263, 0.0
  %v328 = vmax.f32 %v264, 0.0
  %v329 = vmax.f32 %v265, 0.0
  %v330 = vmax.f32 %v266, 0.0
  %v331 = vmax.f32 %v267, 0.0
  %v332 = vmax.f32 %v268, 0.0
  %v333 = vmax.f32 %v269, 0.0
  %v334 = vmax.f32 %v270, 0.0
  %v335 = vmax.f32 %v271, 0.0
  %v336 = vmax.f32 %v272, 0.0
  %v337 = vmax.f32 %v273, 0.0
  %v338 = vmax.f32 %v274, 0.0
  %v339 = vmax.f32 %v275, 0.0
  %v340 = vmax.f32 %v276, 0.0
  %v341 = vmax.f32 %v277, 0.0
  %v342 = vmax.f32 %v278, 0.0
  %v343 = vmax.f32 %v279, 0.0
  %v344 = vmax.f32 %v280, 0.0
  %v345 = vmax.f32 %v281, 0.0
  %v346 = vmax.f32 %v282, 0.0
  %v347 = vmax.f32 %v283, 0.0
  %v348 = vmax.f32 %v284, 0.0
  %v349 = vmax.f32 %v285, 0.0
  %v350 = vmax.f32 %v286, 0.0
  %v351 = vmax.f32 %v287, 0.0
  %v352 = vmax.f32 %v288, 0.0
  %v353 = vmax.f32 %v289, 0.0
  %v354 = vmax.f32 %v290, 0.0
  %v355 = vmax.f32 %v291, 0.0
  %v356 = vmax.f32 %v292, 0.0
  %v357 = vmax.f32 %v293, 0.0
  %v358 = vmax.f32 %v294, 0.0
  %v359 = vmax.f32 %v295, 0.0
  %v360 = vmax.f32 %v296, 0.0
  %v361 = vmax.f32 %v297, 0.0
  %v362 = vmax.f32 %v298, 0.0
  %v363 = vld [vmem:[#allocation2] sm:$0xff]
  %v364 = vld [vmem:[#allocation2 + $0x8] sm:$0xff]
  %v365 = vld [vmem:[#allocation2 + $0x10] sm:$0xff]
  %v366 = vld [vmem:[#allocation2 + $0x18] sm:$0xff]
  %v367 = vld [vmem:[#allocation2 + $0x20] sm:$0xff]
  %v368 = vld [vmem:[#allocation2 + $0x28] sm:$0xff]
  %v369 = vld [vmem:[#allocation2 + $0x30] sm:$0xff]
  %v370 = vld [vmem:[#allocation2 + $0x38] sm:$0xff]
  %v371 = vld [vmem:[#allocation2 + $0x40] sm:$0xff]
  %v372 = vld [vmem:[#allocation2 + $0x48] sm:$0xff]
  %v373 = vld [vmem:[#allocation2 + $0x50] sm:$0xff]
  %v374 = vld [vmem:[#allocation2 + $0x58] sm:$0xff]
  %v375 = vld [vmem:[#allocation2 + $0x60] sm:$0xff]
  %v376 = vld [vmem:[#allocation2 + $0x68] sm:$0xff]
  %v377 = vld [vmem:[#allocation2 + $0x70] sm:$0xff]
  %v378 = vld [vmem:[#allocation2 + $0x78] sm:$0xff]
  %v379 = vld [vmem:[#allocation2 + $0x80] sm:$0xff]
  %v380 = vld [vmem:[#allocation2 + $0x88] sm:$0xff]
  %v381 = vld [vmem:[#allocation2 + $0x90] sm:$0xff]
  %v382 = vld [vmem:[#allocation2 + $0x98] sm:$0xff]
  %v383 = vld [vmem:[#allocation2 + $0xa0] sm:$0xff]
  %v384 = vld [vmem:[#allocation2 + $0xa8] sm:$0xff]
  %v385 = vld [vmem:[#allocation2 + $0xb0] sm:$0xff]
  %v386 = vld [vmem:[#allocation2 + $0xb8] sm:$0xff]
  %v387 = vld [vmem:[#allocation2 + $0xc0] sm:$0xff]
  %v388 = vld [vmem:[#allocation2 + $0xc8] sm:$0xff]
  %v389 = vld [vmem:[#allocation2 + $0xd0] sm:$0xff]
  %v390 = vld [vmem:[#allocation2 + $0xd8] sm:$0xff]
  %v391 = vld [vmem:[#allocation2 + $0xe0] sm:$0xff]
  %v392 = vld [vmem:[#allocation2 + $0xe8] sm:$0xff]
  %v393 = vld [vmem:[#allocation2 + $0xf0] sm:$0xff]
  %v394 = vld [vmem:[#allocation2 + $0xf8] sm:$0xff]
  %v395 = vld [vmem:[#allocation2 + $0x100] sm:$0xff]
  %v396 = vld [vmem:[#allocation2 + $0x108] sm:$0xff]
  %v397 = vld [vmem:[#allocation2 + $0x110] sm:$0xff]
  %v398 = vld [vmem:[#allocation2 + $0x118] sm:$0xff]
  %v399 = vld [vmem:[#allocation2 + $0x120] sm:$0xff]
  %v400 = vld [vmem:[#allocation2 + $0x128] sm:$0xff]
  %v401 = vld [vmem:[#allocation2 + $0x130] sm:$0xff]
  %v402 = vld [vmem:[#allocation2 + $0x138] sm:$0xff]
  %v403 = vld [vmem:[#allocation2 + $0x140] sm:$0xff]
  %v404 = vld [vmem:[#allocation2 + $0x148] sm:$0xff]
  %v405 = vld [vmem:[#allocation2 + $0x150] sm:$0xff]
  %v406 = vld [vmem:[#allocation2 + $0x158] sm:$0xff]
  %v407 = vld [vmem:[#allocation2 + $0x160] sm:$0xff]
  %v408 = vld [vmem:[#allocation2 + $0x168] sm:$0xff]
  %v409 = vld [vmem:[#allocation2 + $0x170] sm:$0xff]
  %v410 = vld [vmem:[#allocation2 + $0x178] sm:$0xff]
  %v411 = vld [vmem:[#allocation2 + $0x180] sm:$0xff]
  %v412 = vld [vmem:[#allocation2 + $0x188] sm:$0xff]
  %v413 = vld [vmem:[#allocation2 + $0x190] sm:$0xff]
  %v414 = vld [vmem:[#allocation2 + $0x198] sm:$0xff]
  %v415 = vld [vmem:[#allocation2 + $0x1a0] sm:$0xff]
  %v416 = vld [vmem:[#allocation2 + $0x1a8] sm:$0xff]
  %v417 = vld [vmem:[#allocation2 + $0x1b0] sm:$0xff]
  %v418 = vld [vmem:[#allocation2 + $0x1b8] sm:$0xff]
  %v419 = vld [vmem:[#allocation2 + $0x1c0] sm:$0xff]
  %v420 = vld [vmem:[#allocation2 + $0x1c8] sm:$0xff]
  %v421 = vld [vmem:[#allocation2 + $0x1d0] sm:$0xff]
  %v422 = vld [vmem:[#allocation2 + $0x1d8] sm:$0xff]
  %v423 = vld [vmem:[#allocation2 + $0x1e0] sm:$0xff]
  %v424 = vld [vmem:[#allocation2 + $0x1e8] sm:$0xff]
  %v425 = vld [vmem:[#allocation2 + $0x1f0] sm:$0xff]
  %v426 = vld [vmem:[#allocation2 + $0x1f8] sm:$0xff]
  %v427 = vpack.c.bf16 %v300, %v299
  %v428 = vpack.c.bf16 %v302, %v301
  %v429 = vpack.c.bf16 %v304, %v303
  %v430 = vpack.c.bf16 %v306, %v305
  %v431 = vpack.c.bf16 %v308, %v307
  %v432 = vpack.c.bf16 %v310, %v309
  %v433 = vpack.c.bf16 %v312, %v311
  %v434 = vpack.c.bf16 %v314, %v313
  %v435 = vpack.c.bf16 %v316, %v315
  %v436 = vpack.c.bf16 %v318, %v317
  %v437 = vpack.c.bf16 %v320, %v319
  %v438 = vpack.c.bf16 %v322, %v321
  %v439 = vpack.c.bf16 %v324, %v323
  %v440 = vpack.c.bf16 %v326, %v325
  %v441 = vpack.c.bf16 %v328, %v327
  %v442 = vpack.c.bf16 %v330, %v329
  %v443 = vpack.c.bf16 %v332, %v331
  %v444 = vpack.c.bf16 %v334, %v333
  %v445 = vpack.c.bf16 %v336, %v335
  %v446 = vpack.c.bf16 %v338, %v337
  %v447 = vpack.c.bf16 %v340, %v339
  %v448 = vpack.c.bf16 %v342, %v341
  %v449 = vpack.c.bf16 %v344, %v343
  %v450 = vpack.c.bf16 %v346, %v345
  %v451 = vpack.c.bf16 %v348, %v347
  %v452 = vpack.c.bf16 %v350, %v349
  %v453 = vpack.c.bf16 %v352, %v351
  %v454 = vpack.c.bf16 %v354, %v353
  %v455 = vpack.c.bf16 %v356, %v355
  %v456 = vpack.c.bf16 %v358, %v357
  %v457 = vpack.c.bf16 %v360, %v359
  %v458 = vpack.c.bf16 %v362, %v361
  %v459 = vld [vmem:[%s1] sm:$0xf]
  %v460 = vld [vmem:[%s1 + $0x4] sm:$0xf]
  %v463 = vunpack.c.l.b16 %v459
  %v464 = vunpack.c.l.b16 %v460
  %v465 = vpack.c.b16 %v464, %v463
  %vm467 = vcmask 130048
  %v469 = vsel %vm467, %v427, 0
  %v472 = vsel %vm467, %v428, 0
  %v475 = vsel %vm467, %v429, 0
  %v478 = vsel %vm467, %v430, 0
  %v481 = vsel %vm467, %v431, 0
  %v484 = vsel %vm467, %v432, 0
  %v487 = vsel %vm467, %v433, 0
  %v490 = vsel %vm467, %v434, 0
  %v493 = vsel %vm467, %v435, 0
  %v496 = vsel %vm467, %v436, 0
  %v499 = vsel %vm467, %v437, 0
  %v502 = vsel %vm467, %v438, 0
  %v505 = vsel %vm467, %v439, 0
  %v508 = vsel %vm467, %v440, 0
  %v511 = vsel %vm467, %v441, 0
  %v514 = vsel %vm467, %v442, 0
  %v517 = vsel %vm467, %v443, 0
  %v520 = vsel %vm467, %v444, 0
  %v523 = vsel %vm467, %v445, 0
  %v526 = vsel %vm467, %v446, 0
  %v529 = vsel %vm467, %v447, 0
  %v532 = vsel %vm467, %v448, 0
  %v535 = vsel %vm467, %v449, 0
  %v538 = vsel %vm467, %v450, 0
  %v541 = vsel %vm467, %v451, 0
  %v544 = vsel %vm467, %v452, 0
  %v547 = vsel %vm467, %v453, 0
  %v550 = vsel %vm467, %v454, 0
  %v553 = vsel %vm467, %v455, 0
  %v556 = vsel %vm467, %v456, 0
  %v559 = vsel %vm467, %v457, 0
  %v562 = vsel %vm467, %v458, 0
  %564 = vmatprep.subr.bf16.mxu0 0
  %565 = vmatpush1.bf16.msra.mxu0 0
  %566 = vmatprep.subr.bf16.mxu0 0
  %567 = vmatpush1.bf16.msra.mxu0 0
  %568 = vmatprep.subr.bf16.mxu0 0
  %569 = vmatpush1.bf16.msra.mxu0 0
  %570 = vmatprep.subr.bf16.mxu0 0
  %571 = vmatpush1.bf16.msra.mxu0 0
  %572 = vmatprep.subr.bf16.mxu0 0
  %573 = vmatpush1.bf16.msra.mxu0 0
  %574 = vmatprep.subr.bf16.mxu0 0
  %575 = vmatpush1.bf16.msra.mxu0 0
  %576 = vmatprep.subr.bf16.mxu0 0
  %577 = vmatpush1.bf16.msra.mxu0 0
  %578 = vmatprep.subr.bf16.mxu0 0
  %579 = vmatpush1.bf16.msra.mxu0 %v465
  %580 = vmatprep.subr.bf16.mxu0 0
  %581 = vmatpush2.bf16.msra.mxu0 0
  %582 = vmatprep.subr.bf16.mxu0 0
  %583 = vmatpush2.bf16.msra.mxu0 0
  %584 = vmatprep.subr.bf16.mxu0 0
  %585 = vmatpush2.bf16.msra.mxu0 0
  %586 = vmatprep.subr.bf16.mxu0 0
  %587 = vmatpush2.bf16.msra.mxu0 0
  %588 = vmatprep.subr.bf16.mxu0 0
  %589 = vmatpush2.bf16.msra.mxu0 0
  %590 = vmatprep.subr.bf16.mxu0 0
  %591 = vmatpush2.bf16.msra.mxu0 0
  %592 = vmatprep.subr.bf16.mxu0 0
  %593 = vmatpush2.bf16.msra.mxu0 0
  %594 = vmatprep.subr.bf16.mxu0 0
  %595 = vmatpush2.bf16.msra.mxu0 0
  %596 = vmatprep.mubr.bf16.mxu0 0
  %597 = vmatmul.mubr.bf16.gmra.mxu0 %v469
  %v598 = vpop.f32.mrf.mxu0
  %v599 = vadd.f32 0.0, %v598
  %v600 = vpop.f32.mrf.mxu0
  %v601 = vpop.f32.mrf.mxu0
  %v602 = vadd.f32 0.0, %v601
  %v603 = vpop.f32.mrf.mxu0
  %604 = vmatprep.mubr.bf16.mxu0 0
  %605 = vmatmul.mubr.bf16.gmra.mxu0 %v472
  %v606 = vpop.f32.mrf.mxu0
  %v607 = vadd.f32 0.0, %v606
  %v608 = vpop.f32.mrf.mxu0
  %v609 = vpop.f32.mrf.mxu0
  %v610 = vadd.f32 0.0, %v609
  %v611 = vpop.f32.mrf.mxu0
  %612 = vmatprep.mubr.bf16.mxu0 0
  %613 = vmatmul.mubr.bf16.gmra.mxu0 %v475
  %v614 = vpop.f32.mrf.mxu0
  %v615 = vadd.f32 0.0, %v614
  %v616 = vpop.f32.mrf.mxu0
  %v617 = vpop.f32.mrf.mxu0
  %v618 = vadd.f32 0.0, %v617
  %v619 = vpop.f32.mrf.mxu0
  %620 = vmatprep.mubr.bf16.mxu0 0
  %621 = vmatmul.mubr.bf16.gmra.mxu0 %v478
  %v622 = vpop.f32.mrf.mxu0
  %v623 = vadd.f32 0.0, %v622
  %v624 = vpop.f32.mrf.mxu0
  %v625 = vpop.f32.mrf.mxu0
  %v626 = vadd.f32 0.0, %v625
  %v627 = vpop.f32.mrf.mxu0
  %628 = vmatprep.mubr.bf16.mxu0 0
  %629 = vmatmul.mubr.bf16.gmra.mxu0 %v481
  %v630 = vpop.f32.mrf.mxu0
  %v631 = vadd.f32 0.0, %v630
  %v632 = vpop.f32.mrf.mxu0
  %v633 = vpop.f32.mrf.mxu0
  %v634 = vadd.f32 0.0, %v633
  %v635 = vpop.f32.mrf.mxu0
  %636 = vmatprep.mubr.bf16.mxu0 0
  %637 = vmatmul.mubr.bf16.gmra.mxu0 %v484
  %v638 = vpop.f32.mrf.mxu0
  %v639 = vadd.f32 0.0, %v638
  %v640 = vpop.f32.mrf.mxu0
  %v641 = vpop.f32.mrf.mxu0
  %v642 = vadd.f32 0.0, %v641
  %v643 = vpop.f32.mrf.mxu0
  %644 = vmatprep.mubr.bf16.mxu0 0
  %645 = vmatmul.mubr.bf16.gmra.mxu0 %v487
  %v646 = vpop.f32.mrf.mxu0
  %v647 = vadd.f32 0.0, %v646
  %v648 = vpop.f32.mrf.mxu0
  %v649 = vpop.f32.mrf.mxu0
  %v650 = vadd.f32 0.0, %v649
  %v651 = vpop.f32.mrf.mxu0
  %652 = vmatprep.mubr.bf16.mxu0 0
  %653 = vmatmul.mubr.bf16.gmra.mxu0 %v490
  %v654 = vpop.f32.mrf.mxu0
  %v655 = vadd.f32 0.0, %v654
  %v656 = vpop.f32.mrf.mxu0
  %v657 = vpop.f32.mrf.mxu0
  %v658 = vadd.f32 0.0, %v657
  %v659 = vpop.f32.mrf.mxu0
  %660 = vmatprep.mubr.bf16.mxu0 0
  %661 = vmatmul.mubr.bf16.gmra.mxu0 %v493
  %v662 = vpop.f32.mrf.mxu0
  %v663 = vadd.f32 0.0, %v662
  %v664 = vpop.f32.mrf.mxu0
  %v665 = vpop.f32.mrf.mxu0
  %v666 = vadd.f32 0.0, %v665
  %v667 = vpop.f32.mrf.mxu0
  %668 = vmatprep.mubr.bf16.mxu0 0
  %669 = vmatmul.mubr.bf16.gmra.mxu0 %v496
  %v670 = vpop.f32.mrf.mxu0
  %v671 = vadd.f32 0.0, %v670
  %v672 = vpop.f32.mrf.mxu0
  %v673 = vpop.f32.mrf.mxu0
  %v674 = vadd.f32 0.0, %v673
  %v675 = vpop.f32.mrf.mxu0
  %676 = vmatprep.mubr.bf16.mxu0 0
  %677 = vmatmul.mubr.bf16.gmra.mxu0 %v499
  %v678 = vpop.f32.mrf.mxu0
  %v679 = vadd.f32 0.0, %v678
  %v680 = vpop.f32.mrf.mxu0
  %v681 = vpop.f32.mrf.mxu0
  %v682 = vadd.f32 0.0, %v681
  %v683 = vpop.f32.mrf.mxu0
  %684 = vmatprep.mubr.bf16.mxu0 0
  %685 = vmatmul.mubr.bf16.gmra.mxu0 %v502
  %v686 = vpop.f32.mrf.mxu0
  %v687 = vadd.f32 0.0, %v686
  %v688 = vpop.f32.mrf.mxu0
  %v689 = vpop.f32.mrf.mxu0
  %v690 = vadd.f32 0.0, %v689
  %v691 = vpop.f32.mrf.mxu0
  %692 = vmatprep.mubr.bf16.mxu0 0
  %693 = vmatmul.mubr.bf16.gmra.mxu0 %v505
  %v694 = vpop.f32.mrf.mxu0
  %v695 = vadd.f32 0.0, %v694
  %v696 = vpop.f32.mrf.mxu0
  %v697 = vpop.f32.mrf.mxu0
  %v698 = vadd.f32 0.0, %v697
  %v699 = vpop.f32.mrf.mxu0
  %700 = vmatprep.mubr.bf16.mxu0 0
  %701 = vmatmul.mubr.bf16.gmra.mxu0 %v508
  %v702 = vpop.f32.mrf.mxu0
  %v703 = vadd.f32 0.0, %v702
  %v704 = vpop.f32.mrf.mxu0
  %v705 = vpop.f32.mrf.mxu0
  %v706 = vadd.f32 0.0, %v705
  %v707 = vpop.f32.mrf.mxu0
  %708 = vmatprep.mubr.bf16.mxu0 0
  %709 = vmatmul.mubr.bf16.gmra.mxu0 %v511
  %v710 = vpop.f32.mrf.mxu0
  %v711 = vadd.f32 0.0, %v710
  %v712 = vpop.f32.mrf.mxu0
  %v713 = vpop.f32.mrf.mxu0
  %v714 = vadd.f32 0.0, %v713
  %v715 = vpop.f32.mrf.mxu0
  %716 = vmatprep.mubr.bf16.mxu0 0
  %717 = vmatmul.mubr.bf16.gmra.mxu0 %v514
  %v718 = vpop.f32.mrf.mxu0
  %v719 = vadd.f32 0.0, %v718
  %v720 = vpop.f32.mrf.mxu0
  %v721 = vpop.f32.mrf.mxu0
  %v722 = vadd.f32 0.0, %v721
  %v723 = vpop.f32.mrf.mxu0
  %724 = vmatprep.mubr.bf16.mxu0 0
  %725 = vmatmul.mubr.bf16.gmra.mxu0 %v517
  %v726 = vpop.f32.mrf.mxu0
  %v727 = vadd.f32 0.0, %v726
  %v728 = vpop.f32.mrf.mxu0
  %v729 = vpop.f32.mrf.mxu0
  %v730 = vadd.f32 0.0, %v729
  %v731 = vpop.f32.mrf.mxu0
  %732 = vmatprep.mubr.bf16.mxu0 0
  %733 = vmatmul.mubr.bf16.gmra.mxu0 %v520
  %v734 = vpop.f32.mrf.mxu0
  %v735 = vadd.f32 0.0, %v734
  %v736 = vpop.f32.mrf.mxu0
  %v737 = vpop.f32.mrf.mxu0
  %v738 = vadd.f32 0.0, %v737
  %v739 = vpop.f32.mrf.mxu0
  %740 = vmatprep.mubr.bf16.mxu0 0
  %741 = vmatmul.mubr.bf16.gmra.mxu0 %v523
  %v742 = vpop.f32.mrf.mxu0
  %v743 = vadd.f32 0.0, %v742
  %v744 = vpop.f32.mrf.mxu0
  %v745 = vpop.f32.mrf.mxu0
  %v746 = vadd.f32 0.0, %v745
  %v747 = vpop.f32.mrf.mxu0
  %748 = vmatprep.mubr.bf16.mxu0 0
  %749 = vmatmul.mubr.bf16.gmra.mxu0 %v526
  %v750 = vpop.f32.mrf.mxu0
  %v751 = vadd.f32 0.0, %v750
  %v752 = vpop.f32.mrf.mxu0
  %v753 = vpop.f32.mrf.mxu0
  %v754 = vadd.f32 0.0, %v753
  %v755 = vpop.f32.mrf.mxu0
  %756 = vmatprep.mubr.bf16.mxu0 0
  %757 = vmatmul.mubr.bf16.gmra.mxu0 %v529
  %v758 = vpop.f32.mrf.mxu0
  %v759 = vadd.f32 0.0, %v758
  %v760 = vpop.f32.mrf.mxu0
  %v761 = vpop.f32.mrf.mxu0
  %v762 = vadd.f32 0.0, %v761
  %v763 = vpop.f32.mrf.mxu0
  %764 = vmatprep.mubr.bf16.mxu0 0
  %765 = vmatmul.mubr.bf16.gmra.mxu0 %v532
  %v766 = vpop.f32.mrf.mxu0
  %v767 = vadd.f32 0.0, %v766
  %v768 = vpop.f32.mrf.mxu0
  %v769 = vpop.f32.mrf.mxu0
  %v770 = vadd.f32 0.0, %v769
  %v771 = vpop.f32.mrf.mxu0
  %772 = vmatprep.mubr.bf16.mxu0 0
  %773 = vmatmul.mubr.bf16.gmra.mxu0 %v535
  %v774 = vpop.f32.mrf.mxu0
  %v775 = vadd.f32 0.0, %v774
  %v776 = vpop.f32.mrf.mxu0
  %v777 = vpop.f32.mrf.mxu0
  %v778 = vadd.f32 0.0, %v777
  %v779 = vpop.f32.mrf.mxu0
  %780 = vmatprep.mubr.bf16.mxu0 0
  %781 = vmatmul.mubr.bf16.gmra.mxu0 %v538
  %v782 = vpop.f32.mrf.mxu0
  %v783 = vadd.f32 0.0, %v782
  %v784 = vpop.f32.mrf.mxu0
  %v785 = vpop.f32.mrf.mxu0
  %v786 = vadd.f32 0.0, %v785
  %v787 = vpop.f32.mrf.mxu0
  %788 = vmatprep.mubr.bf16.mxu0 0
  %789 = vmatmul.mubr.bf16.gmra.mxu0 %v541
  %v790 = vpop.f32.mrf.mxu0
  %v791 = vadd.f32 0.0, %v790
  %v792 = vpop.f32.mrf.mxu0
  %v793 = vpop.f32.mrf.mxu0
  %v794 = vadd.f32 0.0, %v793
  %v795 = vpop.f32.mrf.mxu0
  %796 = vmatprep.mubr.bf16.mxu0 0
  %797 = vmatmul.mubr.bf16.gmra.mxu0 %v544
  %v798 = vpop.f32.mrf.mxu0
  %v799 = vadd.f32 0.0, %v798
  %v800 = vpop.f32.mrf.mxu0
  %v801 = vpop.f32.mrf.mxu0
  %v802 = vadd.f32 0.0, %v801
  %v803 = vpop.f32.mrf.mxu0
  %804 = vmatprep.mubr.bf16.mxu0 0
  %805 = vmatmul.mubr.bf16.gmra.mxu0 %v547
  %v806 = vpop.f32.mrf.mxu0
  %v807 = vadd.f32 0.0, %v806
  %v808 = vpop.f32.mrf.mxu0
  %v809 = vpop.f32.mrf.mxu0
  %v810 = vadd.f32 0.0, %v809
  %v811 = vpop.f32.mrf.mxu0
  %812 = vmatprep.mubr.bf16.mxu0 0
  %813 = vmatmul.mubr.bf16.gmra.mxu0 %v550
  %v814 = vpop.f32.mrf.mxu0
  %v815 = vadd.f32 0.0, %v814
  %v816 = vpop.f32.mrf.mxu0
  %v817 = vpop.f32.mrf.mxu0
  %v818 = vadd.f32 0.0, %v817
  %v819 = vpop.f32.mrf.mxu0
  %820 = vmatprep.mubr.bf16.mxu0 0
  %821 = vmatmul.mubr.bf16.gmra.mxu0 %v553
  %v822 = vpop.f32.mrf.mxu0
  %v823 = vadd.f32 0.0, %v822
  %v824 = vpop.f32.mrf.mxu0
  %v825 = vpop.f32.mrf.mxu0
  %v826 = vadd.f32 0.0, %v825
  %v827 = vpop.f32.mrf.mxu0
  %828 = vmatprep.mubr.bf16.mxu0 0
  %829 = vmatmul.mubr.bf16.gmra.mxu0 %v556
  %v830 = vpop.f32.mrf.mxu0
  %v831 = vadd.f32 0.0, %v830
  %v832 = vpop.f32.mrf.mxu0
  %v833 = vpop.f32.mrf.mxu0
  %v834 = vadd.f32 0.0, %v833
  %v835 = vpop.f32.mrf.mxu0
  %836 = vmatprep.mubr.bf16.mxu0 0
  %837 = vmatmul.mubr.bf16.gmra.mxu0 %v559
  %v838 = vpop.f32.mrf.mxu0
  %v839 = vadd.f32 0.0, %v838
  %v840 = vpop.f32.mrf.mxu0
  %v841 = vpop.f32.mrf.mxu0
  %v842 = vadd.f32 0.0, %v841
  %v843 = vpop.f32.mrf.mxu0
  %844 = vmatprep.mubr.bf16.mxu0 0
  %845 = vmatmul.mubr.bf16.gmra.mxu0 %v562
  %v846 = vpop.f32.mrf.mxu0
  %v847 = vadd.f32 0.0, %v846
  %v848 = vpop.f32.mrf.mxu0
  %v849 = vpop.f32.mrf.mxu0
  %v850 = vadd.f32 0.0, %v849
  %v851 = vpop.f32.mrf.mxu0
  %852 = vdwg.mxu0
  %v853 = vadd.f32 %v363, %v599
  %v854 = vadd.f32 %v364, %v602
  %v855 = vadd.f32 %v365, %v607
  %v856 = vadd.f32 %v366, %v610
  %v857 = vadd.f32 %v367, %v615
  %v858 = vadd.f32 %v368, %v618
  %v859 = vadd.f32 %v369, %v623
  %v860 = vadd.f32 %v370, %v626
  %v861 = vadd.f32 %v371, %v631
  %v862 = vadd.f32 %v372, %v634
  %v863 = vadd.f32 %v373, %v639
  %v864 = vadd.f32 %v374, %v642
  %v865 = vadd.f32 %v375, %v647
  %v866 = vadd.f32 %v376, %v650
  %v867 = vadd.f32 %v377, %v655
  %v868 = vadd.f32 %v378, %v658
  %v869 = vadd.f32 %v379, %v663
  %v870 = vadd.f32 %v380, %v666
  %v871 = vadd.f32 %v381, %v671
  %v872 = vadd.f32 %v382, %v674
  %v873 = vadd.f32 %v383, %v679
  %v874 = vadd.f32 %v384, %v682
  %v875 = vadd.f32 %v385, %v687
  %v876 = vadd.f32 %v386, %v690
  %v877 = vadd.f32 %v387, %v695
  %v878 = vadd.f32 %v388, %v698
  %v879 = vadd.f32 %v389, %v703
  %v880 = vadd.f32 %v390, %v706
  %v881 = vadd.f32 %v391, %v711
  %v882 = vadd.f32 %v392, %v714
  %v883 = vadd.f32 %v393, %v719
  %v884 = vadd.f32 %v394, %v722
  %v885 = vadd.f32 %v395, %v727
  %v886 = vadd.f32 %v396, %v730
  %v887 = vadd.f32 %v397, %v735
  %v888 = vadd.f32 %v398, %v738
  %v889 = vadd.f32 %v399, %v743
  %v890 = vadd.f32 %v400, %v746
  %v891 = vadd.f32 %v401, %v751
  %v892 = vadd.f32 %v402, %v754
  %v893 = vadd.f32 %v403, %v759
  %v894 = vadd.f32 %v404, %v762
  %v895 = vadd.f32 %v405, %v767
  %v896 = vadd.f32 %v406, %v770
  %v897 = vadd.f32 %v407, %v775
  %v898 = vadd.f32 %v408, %v778
  %v899 = vadd.f32 %v409, %v783
  %v900 = vadd.f32 %v410, %v786
  %v901 = vadd.f32 %v411, %v791
  %v902 = vadd.f32 %v412, %v794
  %v903 = vadd.f32 %v413, %v799
  %v904 = vadd.f32 %v414, %v802
  %v905 = vadd.f32 %v415, %v807
  %v906 = vadd.f32 %v416, %v810
  %v907 = vadd.f32 %v417, %v815
  %v908 = vadd.f32 %v418, %v818
  %v909 = vadd.f32 %v419, %v823
  %v910 = vadd.f32 %v420, %v826
  %v911 = vadd.f32 %v421, %v831
  %v912 = vadd.f32 %v422, %v834
  %v913 = vadd.f32 %v423, %v839
  %v914 = vadd.f32 %v424, %v842
  %v915 = vadd.f32 %v425, %v847
  %v916 = vadd.f32 %v426, %v850
  %vm917 = vcmask 64512
  %918 = vst.msk [vmem:[#allocation2] sm:$0xff] %vm917, %v853
  %919 = vst.msk [vmem:[#allocation2 + $0x8] sm:$0xff] %vm917, %v854
  %920 = vst.msk [vmem:[#allocation2 + $0x10] sm:$0xff] %vm917, %v855
  %921 = vst.msk [vmem:[#allocation2 + $0x18] sm:$0xff] %vm917, %v856
  %922 = vst.msk [vmem:[#allocation2 + $0x20] sm:$0xff] %vm917, %v857
  %923 = vst.msk [vmem:[#allocation2 + $0x28] sm:$0xff] %vm917, %v858
  %924 = vst.msk [vmem:[#allocation2 + $0x30] sm:$0xff] %vm917, %v859
  %925 = vst.msk [vmem:[#allocation2 + $0x38] sm:$0xff] %vm917, %v860
  %926 = vst.msk [vmem:[#allocation2 + $0x40] sm:$0xff] %vm917, %v861
  %927 = vst.msk [vmem:[#allocation2 + $0x48] sm:$0xff] %vm917, %v862
  %928 = vst.msk [vmem:[#allocation2 + $0x50] sm:$0xff] %vm917, %v863
  %929 = vst.msk [vmem:[#allocation2 + $0x58] sm:$0xff] %vm917, %v864
  %930 = vst.msk [vmem:[#allocation2 + $0x60] sm:$0xff] %vm917, %v865
  %931 = vst.msk [vmem:[#allocation2 + $0x68] sm:$0xff] %vm917, %v866
  %932 = vst.msk [vmem:[#allocation2 + $0x70] sm:$0xff] %vm917, %v867
  %933 = vst.msk [vmem:[#allocation2 + $0x78] sm:$0xff] %vm917, %v868
  %934 = vst.msk [vmem:[#allocation2 + $0x80] sm:$0xff] %vm917, %v869
  %935 = vst.msk [vmem:[#allocation2 + $0x88] sm:$0xff] %vm917, %v870
  %936 = vst.msk [vmem:[#allocation2 + $0x90] sm:$0xff] %vm917, %v871
  %937 = vst.msk [vmem:[#allocation2 + $0x98] sm:$0xff] %vm917, %v872
  %938 = vst.msk [vmem:[#allocation2 + $0xa0] sm:$0xff] %vm917, %v873
  %939 = vst.msk [vmem:[#allocation2 + $0xa8] sm:$0xff] %vm917, %v874
  %940 = vst.msk [vmem:[#allocation2 + $0xb0] sm:$0xff] %vm917, %v875
  %941 = vst.msk [vmem:[#allocation2 + $0xb8] sm:$0xff] %vm917, %v876
  %942 = vst.msk [vmem:[#allocation2 + $0xc0] sm:$0xff] %vm917, %v877
  %943 = vst.msk [vmem:[#allocation2 + $0xc8] sm:$0xff] %vm917, %v878
  %944 = vst.msk [vmem:[#allocation2 + $0xd0] sm:$0xff] %vm917, %v879
  %945 = vst.msk [vmem:[#allocation2 + $0xd8] sm:$0xff] %vm917, %v880
  %946 = vst.msk [vmem:[#allocation2 + $0xe0] sm:$0xff] %vm917, %v881
  %947 = vst.msk [vmem:[#allocation2 + $0xe8] sm:$0xff] %vm917, %v882
  %948 = vst.msk [vmem:[#allocation2 + $0xf0] sm:$0xff] %vm917, %v883
  %949 = vst.msk [vmem:[#allocation2 + $0xf8] sm:$0xff] %vm917, %v884
  %950 = vst.msk [vmem:[#allocation2 + $0x100] sm:$0xff] %vm917, %v885
  %951 = vst.msk [vmem:[#allocation2 + $0x108] sm:$0xff] %vm917, %v886
  %952 = vst.msk [vmem:[#allocation2 + $0x110] sm:$0xff] %vm917, %v887
  %953 = vst.msk [vmem:[#allocation2 + $0x118] sm:$0xff] %vm917, %v888
  %954 = vst.msk [vmem:[#allocation2 + $0x120] sm:$0xff] %vm917, %v889
  %955 = vst.msk [vmem:[#allocation2 + $0x128] sm:$0xff] %vm917, %v890
  %956 = vst.msk [vmem:[#allocation2 + $0x130] sm:$0xff] %vm917, %v891
  %957 = vst.msk [vmem:[#allocation2 + $0x138] sm:$0xff] %vm917, %v892
  %958 = vst.msk [vmem:[#allocation2 + $0x140] sm:$0xff] %vm917, %v893
  %959 = vst.msk [vmem:[#allocation2 + $0x148] sm:$0xff] %vm917, %v894
  %960 = vst.msk [vmem:[#allocation2 + $0x150] sm:$0xff] %vm917, %v895
  %961 = vst.msk [vmem:[#allocation2 + $0x158] sm:$0xff] %vm917, %v896
  %962 = vst.msk [vmem:[#allocation2 + $0x160] sm:$0xff] %vm917, %v897
  %963 = vst.msk [vmem:[#allocation2 + $0x168] sm:$0xff] %vm917, %v898
  %964 = vst.msk [vmem:[#allocation2 + $0x170] sm:$0xff] %vm917, %v899
  %965 = vst.msk [vmem:[#allocation2 + $0x178] sm:$0xff] %vm917, %v900
  %966 = vst.msk [vmem:[#allocation2 + $0x180] sm:$0xff] %vm917, %v901
  %967 = vst.msk [vmem:[#allocation2 + $0x188] sm:$0xff] %vm917, %v902
  %968 = vst.msk [vmem:[#allocation2 + $0x190] sm:$0xff] %vm917, %v903
  %969 = vst.msk [vmem:[#allocation2 + $0x198] sm:$0xff] %vm917, %v904
  %970 = vst.msk [vmem:[#allocation2 + $0x1a0] sm:$0xff] %vm917, %v905
  %971 = vst.msk [vmem:[#allocation2 + $0x1a8] sm:$0xff] %vm917, %v906
  %972 = vst.msk [vmem:[#allocation2 + $0x1b0] sm:$0xff] %vm917, %v907
  %973 = vst.msk [vmem:[#allocation2 + $0x1b8] sm:$0xff] %vm917, %v908
  %974 = vst.msk [vmem:[#allocation2 + $0x1c0] sm:$0xff] %vm917, %v909
  %975 = vst.msk [vmem:[#allocation2 + $0x1c8] sm:$0xff] %vm917, %v910
  %976 = vst.msk [vmem:[#allocation2 + $0x1d0] sm:$0xff] %vm917, %v911
  %977 = vst.msk [vmem:[#allocation2 + $0x1d8] sm:$0xff] %vm917, %v912
  %978 = vst.msk [vmem:[#allocation2 + $0x1e0] sm:$0xff] %vm917, %v913
  %979 = vst.msk [vmem:[#allocation2 + $0x1e8] sm:$0xff] %vm917, %v914
  %980 = vst.msk [vmem:[#allocation2 + $0x1f0] sm:$0xff] %vm917, %v915
  %981 = vst.msk [vmem:[#allocation2 + $0x1f8] sm:$0xff] %vm917, %v916
  // Predicated region
  $region30: #{preact_bottleneck.4} parent=0 // pred_check
    %p982 = pneg %p24
  $region31: #{preact_bottleneck.4} parent=0 // pred_check_branch
    %984 = sbr.rel (%p982) target = $region33
  $region32: #{preact_bottleneck.4} parent=0 // pred_region
    %v985 = vld [vmem:[#allocation2] sm:$0xff]
    %v986 = vld [vmem:[#allocation2 + $0x8] sm:$0xff]
    %v987 = vld [vmem:[#allocation2 + $0x10] sm:$0xff]
    %v988 = vld [vmem:[#allocation2 + $0x18] sm:$0xff]
    %v989 = vld [vmem:[#allocation2 + $0x20] sm:$0xff]
    %v990 = vld [vmem:[#allocation2 + $0x28] sm:$0xff]
    %v991 = vld [vmem:[#allocation2 + $0x30] sm:$0xff]
    %v992 = vld [vmem:[#allocation2 + $0x38] sm:$0xff]
    %v993 = vld [vmem:[#allocation2 + $0x40] sm:$0xff]
    %v994 = vld [vmem:[#allocation2 + $0x48] sm:$0xff]
    %v995 = vld [vmem:[#allocation2 + $0x50] sm:$0xff]
    %v996 = vld [vmem:[#allocation2 + $0x58] sm:$0xff]
    %v997 = vld [vmem:[#allocation2 + $0x60] sm:$0xff]
    %v998 = vld [vmem:[#allocation2 + $0x68] sm:$0xff]
    %v999 = vld [vmem:[#allocation2 + $0x70] sm:$0xff]
    %v1000 = vld [vmem:[#allocation2 + $0x78] sm:$0xff]
    %v1001 = vld [vmem:[#allocation2 + $0x80] sm:$0xff]
    %v1002 = vld [vmem:[#allocation2 + $0x88] sm:$0xff]
    %v1003 = vld [vmem:[#allocation2 + $0x90] sm:$0xff]
    %v1004 = vld [vmem:[#allocation2 + $0x98] sm:$0xff]
    %v1005 = vld [vmem:[#allocation2 + $0xa0] sm:$0xff]
    %v1006 = vld [vmem:[#allocation2 + $0xa8] sm:$0xff]
    %v1007 = vld [vmem:[#allocation2 + $0xb0] sm:$0xff]
    %v1008 = vld [vmem:[#allocation2 + $0xb8] sm:$0xff]
    %v1009 = vld [vmem:[#allocation2 + $0xc0] sm:$0xff]
    %v1010 = vld [vmem:[#allocation2 + $0xc8] sm:$0xff]
    %v1011 = vld [vmem:[#allocation2 + $0xd0] sm:$0xff]
    %v1012 = vld [vmem:[#allocation2 + $0xd8] sm:$0xff]
    %v1013 = vld [vmem:[#allocation2 + $0xe0] sm:$0xff]
    %v1014 = vld [vmem:[#allocation2 + $0xe8] sm:$0xff]
    %v1015 = vld [vmem:[#allocation2 + $0xf0] sm:$0xff]
    %v1016 = vld [vmem:[#allocation2 + $0xf8] sm:$0xff]
    %v1017 = vld [vmem:[#allocation2 + $0x100] sm:$0xff]
    %v1018 = vld [vmem:[#allocation2 + $0x108] sm:$0xff]
    %v1019 = vld [vmem:[#allocation2 + $0x110] sm:$0xff]
    %v1020 = vld [vmem:[#allocation2 + $0x118] sm:$0xff]
    %v1021 = vld [vmem:[#allocation2 + $0x120] sm:$0xff]
    %v1022 = vld [vmem:[#allocation2 + $0x128] sm:$0xff]
    %v1023 = vld [vmem:[#allocation2 + $0x130] sm:$0xff]
    %v1024 = vld [vmem:[#allocation2 + $0x138] sm:$0xff]
    %v1025 = vld [vmem:[#allocation2 + $0x140] sm:$0xff]
    %v1026 = vld [vmem:[#allocation2 + $0x148] sm:$0xff]
    %v1027 = vld [vmem:[#allocation2 + $0x150] sm:$0xff]
    %v1028 = vld [vmem:[#allocation2 + $0x158] sm:$0xff]
    %v1029 = vld [vmem:[#allocation2 + $0x160] sm:$0xff]
    %v1030 = vld [vmem:[#allocation2 + $0x168] sm:$0xff]
    %v1031 = vld [vmem:[#allocation2 + $0x170] sm:$0xff]
    %v1032 = vld [vmem:[#allocation2 + $0x178] sm:$0xff]
    %v1033 = vld [vmem:[#allocation2 + $0x180] sm:$0xff]
    %v1034 = vld [vmem:[#allocation2 + $0x188] sm:$0xff]
    %v1035 = vld [vmem:[#allocation2 + $0x190] sm:$0xff]
    %v1036 = vld [vmem:[#allocation2 + $0x198] sm:$0xff]
    %v1037 = vld [vmem:[#allocation2 + $0x1a0] sm:$0xff]
    %v1038 = vld [vmem:[#allocation2 + $0x1a8] sm:$0xff]
    %v1039 = vld [vmem:[#allocation2 + $0x1b0] sm:$0xff]
    %v1040 = vld [vmem:[#allocation2 + $0x1b8] sm:$0xff]
    %v1041 = vld [vmem:[#allocation2 + $0x1c0] sm:$0xff]
    %v1042 = vld [vmem:[#allocation2 + $0x1c8] sm:$0xff]
    %v1043 = vld [vmem:[#allocation2 + $0x1d0] sm:$0xff]
    %v1044 = vld [vmem:[#allocation2 + $0x1d8] sm:$0xff]
    %v1045 = vld [vmem:[#allocation2 + $0x1e0] sm:$0xff]
    %v1046 = vld [vmem:[#allocation2 + $0x1e8] sm:$0xff]
    %v1047 = vld [vmem:[#allocation2 + $0x1f0] sm:$0xff]
    %v1048 = vld [vmem:[#allocation2 + $0x1f8] sm:$0xff]
    %v1049 = vld [vmem:[%s4] sm:$0x1]
    %v1051 = vlaneseq
    %v1052 = vshrl.u32 %v1051, 7
    %v1053 = vsub.s32 0, %v1052
    %v1054 = vrot.slane %v1049, %v1053
    %v1056 = vmul.f32 %v985, %v1054
    %v1057 = vmul.f32 %v986, %v1054
    %v1058 = vmul.f32 %v987, %v1054
    %v1059 = vmul.f32 %v988, %v1054
    %v1060 = vmul.f32 %v989, %v1054
    %v1061 = vmul.f32 %v990, %v1054
    %v1062 = vmul.f32 %v991, %v1054
    %v1063 = vmul.f32 %v992, %v1054
    %v1064 = vmul.f32 %v993, %v1054
    %v1065 = vmul.f32 %v994, %v1054
    %v1066 = vmul.f32 %v995, %v1054
    %v1067 = vmul.f32 %v996, %v1054
    %v1068 = vmul.f32 %v997, %v1054
    %v1069 = vmul.f32 %v998, %v1054
    %v1070 = vmul.f32 %v999, %v1054
    %v1071 = vmul.f32 %v1000, %v1054
    %v1072 = vmul.f32 %v1001, %v1054
    %v1073 = vmul.f32 %v1002, %v1054
    %v1074 = vmul.f32 %v1003, %v1054
    %v1075 = vmul.f32 %v1004, %v1054
    %v1076 = vmul.f32 %v1005, %v1054
    %v1077 = vmul.f32 %v1006, %v1054
    %v1078 = vmul.f32 %v1007, %v1054
    %v1079 = vmul.f32 %v1008, %v1054
    %v1080 = vmul.f32 %v1009, %v1054
    %v1081 = vmul.f32 %v1010, %v1054
    %v1082 = vmul.f32 %v1011, %v1054
    %v1083 = vmul.f32 %v1012, %v1054
    %v1084 = vmul.f32 %v1013, %v1054
    %v1085 = vmul.f32 %v1014, %v1054
    %v1086 = vmul.f32 %v1015, %v1054
    %v1087 = vmul.f32 %v1016, %v1054
    %v1088 = vmul.f32 %v1017, %v1054
    %v1089 = vmul.f32 %v1018, %v1054
    %v1090 = vmul.f32 %v1019, %v1054
    %v1091 = vmul.f32 %v1020, %v1054
    %v1092 = vmul.f32 %v1021, %v1054
    %v1093 = vmul.f32 %v1022, %v1054
    %v1094 = vmul.f32 %v1023, %v1054
    %v1095 = vmul.f32 %v1024, %v1054
    %v1096 = vmul.f32 %v1025, %v1054
    %v1097 = vmul.f32 %v1026, %v1054
    %v1098 = vmul.f32 %v1027, %v1054
    %v1099 = vmul.f32 %v1028, %v1054
    %v1100 = vmul.f32 %v1029, %v1054
    %v1101 = vmul.f32 %v1030, %v1054
    %v1102 = vmul.f32 %v1031, %v1054
    %v1103 = vmul.f32 %v1032, %v1054
    %v1104 = vmul.f32 %v1033, %v1054
    %v1105 = vmul.f32 %v1034, %v1054
    %v1106 = vmul.f32 %v1035, %v1054
    %v1107 = vmul.f32 %v1036, %v1054
    %v1108 = vmul.f32 %v1037, %v1054
    %v1109 = vmul.f32 %v1038, %v1054
    %v1110 = vmul.f32 %v1039, %v1054
    %v1111 = vmul.f32 %v1040, %v1054
    %v1112 = vmul.f32 %v1041, %v1054
    %v1113 = vmul.f32 %v1042, %v1054
    %v1114 = vmul.f32 %v1043, %v1054
    %v1115 = vmul.f32 %v1044, %v1054
    %v1116 = vmul.f32 %v1045, %v1054
    %v1117 = vmul.f32 %v1046, %v1054
    %v1118 = vmul.f32 %v1047, %v1054
    %v1119 = vmul.f32 %v1048, %v1054
    %v1120 = vld [vmem:[%s5] sm:$0x1]
    %v1122 = vlaneseq
    %v1123 = vshrl.u32 %v1122, 7
    %v1124 = vsub.s32 0, %v1123
    %v1125 = vrot.slane %v1120, %v1124
    %v1127 = vadd.f32 %v1056, %v1125
    %v1128 = vadd.f32 %v1057, %v1125
    %v1129 = vadd.f32 %v1058, %v1125
    %v1130 = vadd.f32 %v1059, %v1125
    %v1131 = vadd.f32 %v1060, %v1125
    %v1132 = vadd.f32 %v1061, %v1125
    %v1133 = vadd.f32 %v1062, %v1125
    %v1134 = vadd.f32 %v1063, %v1125
    %v1135 = vadd.f32 %v1064, %v1125
    %v1136 = vadd.f32 %v1065, %v1125
    %v1137 = vadd.f32 %v1066, %v1125
    %v1138 = vadd.f32 %v1067, %v1125
    %v1139 = vadd.f32 %v1068, %v1125
    %v1140 = vadd.f32 %v1069, %v1125
    %v1141 = vadd.f32 %v1070, %v1125
    %v1142 = vadd.f32 %v1071, %v1125
    %v1143 = vadd.f32 %v1072, %v1125
    %v1144 = vadd.f32 %v1073, %v1125
    %v1145 = vadd.f32 %v1074, %v1125
    %v1146 = vadd.f32 %v1075, %v1125
    %v1147 = vadd.f32 %v1076, %v1125
    %v1148 = vadd.f32 %v1077, %v1125
    %v1149 = vadd.f32 %v1078, %v1125
    %v1150 = vadd.f32 %v1079, %v1125
    %v1151 = vadd.f32 %v1080, %v1125
    %v1152 = vadd.f32 %v1081, %v1125
    %v1153 = vadd.f32 %v1082, %v1125
    %v1154 = vadd.f32 %v1083, %v1125
    %v1155 = vadd.f32 %v1084, %v1125
    %v1156 = vadd.f32 %v1085, %v1125
    %v1157 = vadd.f32 %v1086, %v1125
    %v1158 = vadd.f32 %v1087, %v1125
    %v1159 = vadd.f32 %v1088, %v1125
    %v1160 = vadd.f32 %v1089, %v1125
    %v1161 = vadd.f32 %v1090, %v1125
    %v1162 = vadd.f32 %v1091, %v1125
    %v1163 = vadd.f32 %v1092, %v1125
    %v1164 = vadd.f32 %v1093, %v1125
    %v1165 = vadd.f32 %v1094, %v1125
    %v1166 = vadd.f32 %v1095, %v1125
    %v1167 = vadd.f32 %v1096, %v1125
    %v1168 = vadd.f32 %v1097, %v1125
    %v1169 = vadd.f32 %v1098, %v1125
    %v1170 = vadd.f32 %v1099, %v1125
    %v1171 = vadd.f32 %v1100, %v1125
    %v1172 = vadd.f32 %v1101, %v1125
    %v1173 = vadd.f32 %v1102, %v1125
    %v1174 = vadd.f32 %v1103, %v1125
    %v1175 = vadd.f32 %v1104, %v1125
    %v1176 = vadd.f32 %v1105, %v1125
    %v1177 = vadd.f32 %v1106, %v1125
    %v1178 = vadd.f32 %v1107, %v1125
    %v1179 = vadd.f32 %v1108, %v1125
    %v1180 = vadd.f32 %v1109, %v1125
    %v1181 = vadd.f32 %v1110, %v1125
    %v1182 = vadd.f32 %v1111, %v1125
    %v1183 = vadd.f32 %v1112, %v1125
    %v1184 = vadd.f32 %v1113, %v1125
    %v1185 = vadd.f32 %v1114, %v1125
    %v1186 = vadd.f32 %v1115, %v1125
    %v1187 = vadd.f32 %v1116, %v1125
    %v1188 = vadd.f32 %v1117, %v1125
    %v1189 = vadd.f32 %v1118, %v1125
    %v1190 = vadd.f32 %v1119, %v1125
    %v1191 = vmax.f32 %v1127, 0.0
    %v1192 = vmax.f32 %v1128, 0.0
    %v1193 = vmax.f32 %v1129, 0.0
    %v1194 = vmax.f32 %v1130, 0.0
    %v1195 = vmax.f32 %v1131, 0.0
    %v1196 = vmax.f32 %v1132, 0.0
    %v1197 = vmax.f32 %v1133, 0.0
    %v1198 = vmax.f32 %v1134, 0.0
    %v1199 = vmax.f32 %v1135, 0.0
    %v1200 = vmax.f32 %v1136, 0.0
    %v1201 = vmax.f32 %v1137, 0.0
    %v1202 = vmax.f32 %v1138, 0.0
    %v1203 = vmax.f32 %v1139, 0.0
    %v1204 = vmax.f32 %v1140, 0.0
    %v1205 = vmax.f32 %v1141, 0.0
    %v1206 = vmax.f32 %v1142, 0.0
    %v1207 = vmax.f32 %v1143, 0.0
    %v1208 = vmax.f32 %v1144, 0.0
    %v1209 = vmax.f32 %v1145, 0.0
    %v1210 = vmax.f32 %v1146, 0.0
    %v1211 = vmax.f32 %v1147, 0.0
    %v1212 = vmax.f32 %v1148, 0.0
    %v1213 = vmax.f32 %v1149, 0.0
    %v1214 = vmax.f32 %v1150, 0.0
    %v1215 = vmax.f32 %v1151, 0.0
    %v1216 = vmax.f32 %v1152, 0.0
    %v1217 = vmax.f32 %v1153, 0.0
    %v1218 = vmax.f32 %v1154, 0.0
    %v1219 = vmax.f32 %v1155, 0.0
    %v1220 = vmax.f32 %v1156, 0.0
    %v1221 = vmax.f32 %v1157, 0.0
    %v1222 = vmax.f32 %v1158, 0.0
    %v1223 = vmax.f32 %v1159, 0.0
    %v1224 = vmax.f32 %v1160, 0.0
    %v1225 = vmax.f32 %v1161, 0.0
    %v1226 = vmax.f32 %v1162, 0.0
    %v1227 = vmax.f32 %v1163, 0.0
    %v1228 = vmax.f32 %v1164, 0.0
    %v1229 = vmax.f32 %v1165, 0.0
    %v1230 = vmax.f32 %v1166, 0.0
    %v1231 = vmax.f32 %v1167, 0.0
    %v1232 = vmax.f32 %v1168, 0.0
    %v1233 = vmax.f32 %v1169, 0.0
    %v1234 = vmax.f32 %v1170, 0.0
    %v1235 = vmax.f32 %v1171, 0.0
    %v1236 = vmax.f32 %v1172, 0.0
    %v1237 = vmax.f32 %v1173, 0.0
    %v1238 = vmax.f32 %v1174, 0.0
    %v1239 = vmax.f32 %v1175, 0.0
    %v1240 = vmax.f32 %v1176, 0.0
    %v1241 = vmax.f32 %v1177, 0.0
    %v1242 = vmax.f32 %v1178, 0.0
    %v1243 = vmax.f32 %v1179, 0.0
    %v1244 = vmax.f32 %v1180, 0.0
    %v1245 = vmax.f32 %v1181, 0.0
    %v1246 = vmax.f32 %v1182, 0.0
    %v1247 = vmax.f32 %v1183, 0.0
    %v1248 = vmax.f32 %v1184, 0.0
    %v1249 = vmax.f32 %v1185, 0.0
    %v1250 = vmax.f32 %v1186, 0.0
    %v1251 = vmax.f32 %v1187, 0.0
    %v1252 = vmax.f32 %v1188, 0.0
    %v1253 = vmax.f32 %v1189, 0.0
    %v1254 = vmax.f32 %v1190, 0.0
    %v1255 = vpack.c.bf16 %v1192, %v1191
    %v1256 = vpack.c.bf16 %v1194, %v1193
    %v1257 = vpack.c.bf16 %v1196, %v1195
    %v1258 = vpack.c.bf16 %v1198, %v1197
    %v1259 = vpack.c.bf16 %v1200, %v1199
    %v1260 = vpack.c.bf16 %v1202, %v1201
    %v1261 = vpack.c.bf16 %v1204, %v1203
    %v1262 = vpack.c.bf16 %v1206, %v1205
    %v1263 = vpack.c.bf16 %v1208, %v1207
    %v1264 = vpack.c.bf16 %v1210, %v1209
    %v1265 = vpack.c.bf16 %v1212, %v1211
    %v1266 = vpack.c.bf16 %v1214, %v1213
    %v1267 = vpack.c.bf16 %v1216, %v1215
    %v1268 = vpack.c.bf16 %v1218, %v1217
    %v1269 = vpack.c.bf16 %v1220, %v1219
    %v1270 = vpack.c.bf16 %v1222, %v1221
    %v1271 = vpack.c.bf16 %v1224, %v1223
    %v1272 = vpack.c.bf16 %v1226, %v1225
    %v1273 = vpack.c.bf16 %v1228, %v1227
    %v1274 = vpack.c.bf16 %v1230, %v1229
    %v1275 = vpack.c.bf16 %v1232, %v1231
    %v1276 = vpack.c.bf16 %v1234, %v1233
    %v1277 = vpack.c.bf16 %v1236, %v1235
    %v1278 = vpack.c.bf16 %v1238, %v1237
    %v1279 = vpack.c.bf16 %v1240, %v1239
    %v1280 = vpack.c.bf16 %v1242, %v1241
    %v1281 = vpack.c.bf16 %v1244, %v1243
    %v1282 = vpack.c.bf16 %v1246, %v1245
    %v1283 = vpack.c.bf16 %v1248, %v1247
    %v1284 = vpack.c.bf16 %v1250, %v1249
    %v1285 = vpack.c.bf16 %v1252, %v1251
    %v1286 = vpack.c.bf16 %v1254, %v1253
    %v1319 = vunpack.c.l.b16 %v1255
    %v1320 = vunpack.c.h.b16 %v1255
    %v1321 = vunpack.c.l.b16 %v1256
    %v1322 = vunpack.c.h.b16 %v1256
    %v1323 = vunpack.c.l.b16 %v1257
    %v1324 = vunpack.c.h.b16 %v1257
    %v1325 = vunpack.c.l.b16 %v1258
    %v1326 = vunpack.c.h.b16 %v1258
    %v1327 = vunpack.c.l.b16 %v1259
    %v1328 = vunpack.c.h.b16 %v1259
    %v1329 = vunpack.c.l.b16 %v1260
    %v1330 = vunpack.c.h.b16 %v1260
    %v1331 = vunpack.c.l.b16 %v1261
    %v1332 = vunpack.c.h.b16 %v1261
    %v1333 = vunpack.c.l.b16 %v1262
    %v1334 = vunpack.c.h.b16 %v1262
    %v1335 = vunpack.c.l.b16 %v1263
    %v1336 = vunpack.c.h.b16 %v1263
    %v1337 = vunpack.c.l.b16 %v1264
    %v1338 = vunpack.c.h.b16 %v1264
    %v1339 = vunpack.c.l.b16 %v1265
    %v1340 = vunpack.c.h.b16 %v1265
    %v1341 = vunpack.c.l.b16 %v1266
    %v1342 = vunpack.c.h.b16 %v1266
    %v1343 = vunpack.c.l.b16 %v1267
    %v1344 = vunpack.c.h.b16 %v1267
    %v1345 = vunpack.c.l.b16 %v1268
    %v1346 = vunpack.c.h.b16 %v1268
    %v1347 = vunpack.c.l.b16 %v1269
    %v1348 = vunpack.c.h.b16 %v1269
    %v1349 = vunpack.c.l.b16 %v1270
    %v1350 = vunpack.c.h.b16 %v1270
    %v1351 = vunpack.c.l.b16 %v1271
    %v1352 = vunpack.c.h.b16 %v1271
    %v1353 = vunpack.c.l.b16 %v1272
    %v1354 = vunpack.c.h.b16 %v1272
    %v1355 = vunpack.c.l.b16 %v1273
    %v1356 = vunpack.c.h.b16 %v1273
    %v1357 = vunpack.c.l.b16 %v1274
    %v1358 = vunpack.c.h.b16 %v1274
    %v1359 = vunpack.c.l.b16 %v1275
    %v1360 = vunpack.c.h.b16 %v1275
    %v1361 = vunpack.c.l.b16 %v1276
    %v1362 = vunpack.c.h.b16 %v1276
    %v1363 = vunpack.c.l.b16 %v1277
    %v1364 = vunpack.c.h.b16 %v1277
    %v1365 = vunpack.c.l.b16 %v1278
    %v1366 = vunpack.c.h.b16 %v1278
    %v1367 = vunpack.c.l.b16 %v1279
    %v1368 = vunpack.c.h.b16 %v1279
    %v1369 = vunpack.c.l.b16 %v1280
    %v1370 = vunpack.c.h.b16 %v1280
    %v1371 = vunpack.c.l.b16 %v1281
    %v1372 = vunpack.c.h.b16 %v1281
    %v1373 = vunpack.c.l.b16 %v1282
    %v1374 = vunpack.c.h.b16 %v1282
    %v1375 = vunpack.c.l.b16 %v1283
    %v1376 = vunpack.c.h.b16 %v1283
    %v1377 = vunpack.c.l.b16 %v1284
    %v1378 = vunpack.c.h.b16 %v1284
    %v1379 = vunpack.c.l.b16 %v1285
    %v1380 = vunpack.c.h.b16 %v1285
    %v1381 = vunpack.c.l.b16 %v1286
    %v1382 = vunpack.c.h.b16 %v1286
    %v1383 = vpack.c.b16 %v1319, %v1319
    %v1384 = vpack.c.b16 %v1320, %v1320
    %v1385 = vpack.c.b16 %v1321, %v1321
    %v1386 = vpack.c.b16 %v1322, %v1322
    %v1387 = vpack.c.b16 %v1323, %v1323
    %v1388 = vpack.c.b16 %v1324, %v1324
    %v1389 = vpack.c.b16 %v1325, %v1325
    %v1390 = vpack.c.b16 %v1326, %v1326
    %v1391 = vpack.c.b16 %v1327, %v1327
    %v1392 = vpack.c.b16 %v1328, %v1328
    %v1393 = vpack.c.b16 %v1329, %v1329
    %v1394 = vpack.c.b16 %v1330, %v1330
    %v1395 = vpack.c.b16 %v1331, %v1331
    %v1396 = vpack.c.b16 %v1332, %v1332
    %v1397 = vpack.c.b16 %v1333, %v1333
    %v1398 = vpack.c.b16 %v1334, %v1334
    %v1399 = vpack.c.b16 %v1335, %v1335
    %v1400 = vpack.c.b16 %v1336, %v1336
    %v1401 = vpack.c.b16 %v1337, %v1337
    %v1402 = vpack.c.b16 %v1338, %v1338
    %v1403 = vpack.c.b16 %v1339, %v1339
    %v1404 = vpack.c.b16 %v1340, %v1340
    %v1405 = vpack.c.b16 %v1341, %v1341
    %v1406 = vpack.c.b16 %v1342, %v1342
    %v1407 = vpack.c.b16 %v1343, %v1343
    %v1408 = vpack.c.b16 %v1344, %v1344
    %v1409 = vpack.c.b16 %v1345, %v1345
    %v1410 = vpack.c.b16 %v1346, %v1346
    %v1411 = vpack.c.b16 %v1347, %v1347
    %v1412 = vpack.c.b16 %v1348, %v1348
    %v1413 = vpack.c.b16 %v1349, %v1349
    %v1414 = vpack.c.b16 %v1350, %v1350
    %v1415 = vpack.c.b16 %v1351, %v1351
    %v1416 = vpack.c.b16 %v1352, %v1352
    %v1417 = vpack.c.b16 %v1353, %v1353
    %v1418 = vpack.c.b16 %v1354, %v1354
    %v1419 = vpack.c.b16 %v1355, %v1355
    %v1420 = vpack.c.b16 %v1356, %v1356
    %v1421 = vpack.c.b16 %v1357, %v1357
    %v1422 = vpack.c.b16 %v1358, %v1358
    %v1423 = vpack.c.b16 %v1359, %v1359
    %v1424 = vpack.c.b16 %v1360, %v1360
    %v1425 = vpack.c.b16 %v1361, %v1361
    %v1426 = vpack.c.b16 %v1362, %v1362
    %v1427 = vpack.c.b16 %v1363, %v1363
    %v1428 = vpack.c.b16 %v1364, %v1364
    %v1429 = vpack.c.b16 %v1365, %v1365
    %v1430 = vpack.c.b16 %v1366, %v1366
    %v1431 = vpack.c.b16 %v1367, %v1367
    %v1432 = vpack.c.b16 %v1368, %v1368
    %v1433 = vpack.c.b16 %v1369, %v1369
    %v1434 = vpack.c.b16 %v1370, %v1370
    %v1435 = vpack.c.b16 %v1371, %v1371
    %v1436 = vpack.c.b16 %v1372, %v1372
    %v1437 = vpack.c.b16 %v1373, %v1373
    %v1438 = vpack.c.b16 %v1374, %v1374
    %v1439 = vpack.c.b16 %v1375, %v1375
    %v1440 = vpack.c.b16 %v1376, %v1376
    %v1441 = vpack.c.b16 %v1377, %v1377
    %v1442 = vpack.c.b16 %v1378, %v1378
    %v1443 = vpack.c.b16 %v1379, %v1379
    %v1444 = vpack.c.b16 %v1380, %v1380
    %v1445 = vpack.c.b16 %v1381, %v1381
    %v1446 = vpack.c.b16 %v1382, %v1382
    %vm1511 = vcmask 60416
    %1512 = vst.msk [vmem:[%s6] sm:$0xf] %vm1511, %v1383
    %1513 = vst.msk [vmem:[%s6 + $0x4] sm:$0xf] %vm1511, %v1384
    %1514 = vst.msk [vmem:[%s6 + $0x8] sm:$0xf] %vm1511, %v1385
    %1515 = vst.msk [vmem:[%s6 + $0xc] sm:$0xf] %vm1511, %v1386
    %1516 = vst.msk [vmem:[%s6 + $0x10] sm:$0xf] %vm1511, %v1387
    %1517 = vst.msk [vmem:[%s6 + $0x14] sm:$0xf] %vm1511, %v1388
    %1518 = vst.msk [vmem:[%s6 + $0x18] sm:$0xf] %vm1511, %v1389
    %1519 = vst.msk [vmem:[%s6 + $0x1c] sm:$0xf] %vm1511, %v1390
    %1520 = vst.msk [vmem:[%s6 + $0x20] sm:$0xf] %vm1511, %v1391
    %1521 = vst.msk [vmem:[%s6 + $0x24] sm:$0xf] %vm1511, %v1392
    %1522 = vst.msk [vmem:[%s6 + $0x28] sm:$0xf] %vm1511, %v1393
    %1523 = vst.msk [vmem:[%s6 + $0x2c] sm:$0xf] %vm1511, %v1394
    %1524 = vst.msk [vmem:[%s6 + $0x30] sm:$0xf] %vm1511, %v1395
    %1525 = vst.msk [vmem:[%s6 + $0x34] sm:$0xf] %vm1511, %v1396
    %1526 = vst.msk [vmem:[%s6 + $0x38] sm:$0xf] %vm1511, %v1397
    %1527 = vst.msk [vmem:[%s6 + $0x3c] sm:$0xf] %vm1511, %v1398
    %1528 = vst.msk [vmem:[%s6 + $0x40] sm:$0xf] %vm1511, %v1399
    %1529 = vst.msk [vmem:[%s6 + $0x44] sm:$0xf] %vm1511, %v1400
    %1530 = vst.msk [vmem:[%s6 + $0x48] sm:$0xf] %vm1511, %v1401
    %1531 = vst.msk [vmem:[%s6 + $0x4c] sm:$0xf] %vm1511, %v1402
    %1532 = vst.msk [vmem:[%s6 + $0x50] sm:$0xf] %vm1511, %v1403
    %1533 = vst.msk [vmem:[%s6 + $0x54] sm:$0xf] %vm1511, %v1404
    %1534 = vst.msk [vmem:[%s6 + $0x58] sm:$0xf] %vm1511, %v1405
    %1535 = vst.msk [vmem:[%s6 + $0x5c] sm:$0xf] %vm1511, %v1406
    %1536 = vst.msk [vmem:[%s6 + $0x60] sm:$0xf] %vm1511, %v1407
    %1537 = vst.msk [vmem:[%s6 + $0x64] sm:$0xf] %vm1511, %v1408
    %1538 = vst.msk [vmem:[%s6 + $0x68] sm:$0xf] %vm1511, %v1409
    %1539 = vst.msk [vmem:[%s6 + $0x6c] sm:$0xf] %vm1511, %v1410
    %1540 = vst.msk [vmem:[%s6 + $0x70] sm:$0xf] %vm1511, %v1411
    %1541 = vst.msk [vmem:[%s6 + $0x74] sm:$0xf] %vm1511, %v1412
    %1542 = vst.msk [vmem:[%s6 + $0x78] sm:$0xf] %vm1511, %v1413
    %1543 = vst.msk [vmem:[%s6 + $0x7c] sm:$0xf] %vm1511, %v1414
    %1544 = vst.msk [vmem:[%s6 + $0x80] sm:$0xf] %vm1511, %v1415
    %1545 = vst.msk [vmem:[%s6 + $0x84] sm:$0xf] %vm1511, %v1416
    %1546 = vst.msk [vmem:[%s6 + $0x88] sm:$0xf] %vm1511, %v1417
    %1547 = vst.msk [vmem:[%s6 + $0x8c] sm:$0xf] %vm1511, %v1418
    %1548 = vst.msk [vmem:[%s6 + $0x90] sm:$0xf] %vm1511, %v1419
    %1549 = vst.msk [vmem:[%s6 + $0x94] sm:$0xf] %vm1511, %v1420
    %1550 = vst.msk [vmem:[%s6 + $0x98] sm:$0xf] %vm1511, %v1421
    %1551 = vst.msk [vmem:[%s6 + $0x9c] sm:$0xf] %vm1511, %v1422
    %1552 = vst.msk [vmem:[%s6 + $0xa0] sm:$0xf] %vm1511, %v1423
    %1553 = vst.msk [vmem:[%s6 + $0xa4] sm:$0xf] %vm1511, %v1424
    %1554 = vst.msk [vmem:[%s6 + $0xa8] sm:$0xf] %vm1511, %v1425
    %1555 = vst.msk [vmem:[%s6 + $0xac] sm:$0xf] %vm1511, %v1426
    %1556 = vst.msk [vmem:[%s6 + $0xb0] sm:$0xf] %vm1511, %v1427
    %1557 = vst.msk [vmem:[%s6 + $0xb4] sm:$0xf] %vm1511, %v1428
    %1558 = vst.msk [vmem:[%s6 + $0xb8] sm:$0xf] %vm1511, %v1429
    %1559 = vst.msk [vmem:[%s6 + $0xbc] sm:$0xf] %vm1511, %v1430
    %1560 = vst.msk [vmem:[%s6 + $0xc0] sm:$0xf] %vm1511, %v1431
    %1561 = vst.msk [vmem:[%s6 + $0xc4] sm:$0xf] %vm1511, %v1432
    %1562 = vst.msk [vmem:[%s6 + $0xc8] sm:$0xf] %vm1511, %v1433
    %1563 = vst.msk [vmem:[%s6 + $0xcc] sm:$0xf] %vm1511, %v1434
    %1564 = vst.msk [vmem:[%s6 + $0xd0] sm:$0xf] %vm1511, %v1435
    %1565 = vst.msk [vmem:[%s6 + $0xd4] sm:$0xf] %vm1511, %v1436
    %1566 = vst.msk [vmem:[%s6 + $0xd8] sm:$0xf] %vm1511, %v1437
    %1567 = vst.msk [vmem:[%s6 + $0xdc] sm:$0xf] %vm1511, %v1438
    %1568 = vst.msk [vmem:[%s6 + $0xe0] sm:$0xf] %vm1511, %v1439
    %1569 = vst.msk [vmem:[%s6 + $0xe4] sm:$0xf] %vm1511, %v1440
    %1570 = vst.msk [vmem:[%s6 + $0xe8] sm:$0xf] %vm1511, %v1441
    %1571 = vst.msk [vmem:[%s6 + $0xec] sm:$0xf] %vm1511, %v1442
    %1572 = vst.msk [vmem:[%s6 + $0xf0] sm:$0xf] %vm1511, %v1443
    %1573 = vst.msk [vmem:[%s6 + $0xf4] sm:$0xf] %vm1511, %v1444
    %1574 = vst.msk [vmem:[%s6 + $0xf8] sm:$0xf] %vm1511, %v1445
    %1575 = vst.msk [vmem:[%s6 + $0xfc] sm:$0xf] %vm1511, %v1446
  $region33: #{preact_bottleneck.4} parent=0 // pred_fallthru
    _
  // Predicated region
  $region34: #{preact_bottleneck.4} parent=0 // pred_check
    _
  $region35: #{preact_bottleneck.4} parent=0 // pred_check_branch
    %1577 = sbr.rel (0) target = $region37
  $region36: #{preact_bottleneck.4} parent=0 // pred_region
    _
  $region37: #{preact_bottleneck.4} parent=0 // pred_fallthru
    _
  // Predicated region
  $region38: #{preact_bottleneck.4} parent=0 // pred_check
    _
  $region39: #{preact_bottleneck.4} parent=0 // pred_check_branch
    %1579 = sbr.rel (0) target = $region41
  $region40: #{preact_bottleneck.4} parent=0 // pred_region
    _
  $region41: #{preact_bottleneck.4} parent=0 // pred_fallthru
    _

// kernel: preact_bottleneck.6
$region0: #{preact_bottleneck.6}
  #allocation0 [shape = 'u32[]', space=smem, size = 0x4, offset = 0x4, fixed_abs, tag = 'smem constant byte address 0x4 - core index']
  #allocation1 [shape = 'u32[144,128]{1,0:T(1,128)}', space=vmem, size = 0x12000, scoped, tag = 'internal scratch']
  #allocation2 [shape = 'f32[64,8]{1,0:T(8,128)}', space=vmem, size = 0x8000, scoped, tag = 'scratch operand']
  %s0 = inlined_call_operand.vmem [shape: bf16[2,9,2,9,16], index: 0, kind: input, shape index: {}]
  %s1 = inlined_call_operand.vmem [shape: bf16[3,3,8,8], index: 1, kind: input, shape index: {}]
  %s2 = inlined_call_operand.vmem [shape: f32[1,8], index: 2, kind: input, shape index: {}]
  %s3 = inlined_call_operand.vmem [shape: f32[1,8], index: 3, kind: input, shape index: {}]
  %s4 = inlined_call_operand.vmem [shape: bf16[2,8,8,8], index: 4, kind: output, shape index: {}]
  %s5 = sld [smem:[#allocation0]]
  $region49: #{preact_bottleneck.6} parent=0
    _
  %s7 = ssub.s32 1, %s5
  %s8 = scalar_select 0, %s7, %s5
  loop: start=0, step=1, limit=4
  $region2: #{preact_bottleneck.6} parent=0 // loop_pre_header
    _
  $region3: #{preact_bottleneck.6} parent=0 // loop_header
    %s10 = sphi 0, %s14
    %p11 = scmp.ge.s32.totalorder %s10, 4
    %s20 = sphi 0, %s22
    %s23 = sphi 0, %s20
    %s24 = sphi 0, %s23
    %s40 = sphi 0, %s24
    %s44 = sphi 0, %s44
    %s46 = sphi 0, %s44
    %s47 = sphi 0, %s46
    %s61 = sphi 0, %s47
    %s65 = sphi 0, %s65
    %s67 = sphi 0, %s65
    %s68 = sphi 0, %s67
    %s82 = sphi 0, %s68
    %s86 = sphi 0, %s86
    %s88 = sphi 0, %s86
    %s89 = sphi 0, %s88
    %s103 = sphi 0, %s89
    %s109 = sphi 0, %s111
    %s112 = sphi 0, %s109
    %s113 = sphi 0, %s112
    %s129 = sphi 0, %s113
  $region4: #{preact_bottleneck.6} parent=0 // loop_header_branch
    %13 = sbr.rel (%p11) target = $region8
  $region5: #{preact_bottleneck.6} parent=0 // loop_body
    %s15 = ssub.s32 %s10, 1
    %s16 = ssub.s32 %s10, 2
    %s17 = sadd.s32 %s10, 1
    %s18 = ssub.s32 %s10, %s17
    %p19 = scmp.eq.s32.totalorder %s18, 0
    %s21 = sadd.s32 %s20, 1
    %s22 = scalar_select %p19, %s20, %s21
    %p25 = pneg %p19
    %p26 = scmp.eq.s32.totalorder %s10, 1
    %p27 = por %p25, %p26
    %p28 = scmp.ne.s32.totalorder %s20, %s23
    %p29 = scmp.eq.s32.totalorder %s10, 0
    %p30 = por %p28, %p29
    %p31 = scmp.ne.s32.totalorder %s20, %s23
    %p32 = scmp.eq.s32.totalorder %s15, 1
    %p33 = por %p31, %p32
    %p34 = scmp.ne.s32.totalorder %s23, %s24
    %p35 = scmp.eq.s32.totalorder %s15, 0
    %p36 = por %p34, %p35
    %p37 = scmp.ne.s32.totalorder %s23, %s24
    %p38 = scmp.eq.s32.totalorder %s16, 1
    %p39 = por %p37, %p38
    %p41 = scmp.ne.s32.totalorder %s24, %s40
    %p42 = scmp.eq.s32.totalorder %s16, 0
    %p43 = por %p41, %p42
    %s45 = sadd.s32 %s44, 1
    %p48 = scmp.eq.s32.totalorder %s10, 1
    %p49 = scmp.ne.s32.totalorder %s44, %s46
    %p50 = scmp.eq.s32.totalorder %s10, 0
    %p51 = por %p49, %p50
    %p52 = scmp.ne.s32.totalorder %s44, %s46
    %p53 = scmp.eq.s32.totalorder %s15, 1
    %p54 = por %p52, %p53
    %p55 = scmp.ne.s32.totalorder %s46, %s47
    %p56 = scmp.eq.s32.totalorder %s15, 0
    %p57 = por %p55, %p56
    %p58 = scmp.ne.s32.totalorder %s46, %s47
    %p59 = scmp.eq.s32.totalorder %s16, 1
    %p60 = por %p58, %p59
    %p62 = scmp.ne.s32.totalorder %s47, %s61
    %p63 = scmp.eq.s32.totalorder %s16, 0
    %p64 = por %p62, %p63
    %s66 = sadd.s32 %s65, 1
    %p69 = scmp.eq.s32.totalorder %s10, 1
    %p70 = scmp.ne.s32.totalorder %s65, %s67
    %p71 = scmp.eq.s32.totalorder %s10, 0
    %p72 = por %p70, %p71
    %p73 = scmp.ne.s32.totalorder %s65, %s67
    %p74 = scmp.eq.s32.totalorder %s15, 1
    %p75 = por %p73, %p74
    %p76 = scmp.ne.s32.totalorder %s67, %s68
    %p77 = scmp.eq.s32.totalorder %s15, 0
    %p78 = por %p76, %p77
    %p79 = scmp.ne.s32.totalorder %s67, %s68
    %p80 = scmp.eq.s32.totalorder %s16, 1
    %p81 = por %p79, %p80
    %p83 = scmp.ne.s32.totalorder %s68, %s82
    %p84 = scmp.eq.s32.totalorder %s16, 0
    %p85 = por %p83, %p84
    %s87 = sadd.s32 %s86, 1
    %p90 = scmp.eq.s32.totalorder %s10, 1
    %p91 = scmp.ne.s32.totalorder %s86, %s88
    %p92 = scmp.eq.s32.totalorder %s10, 0
    %p93 = por %p91, %p92
    %p94 = scmp.ne.s32.totalorder %s86, %s88
    %p95 = scmp.eq.s32.totalorder %s15, 1
    %p96 = por %p94, %p95
    %p97 = scmp.ne.s32.totalorder %s88, %s89
    %p98 = scmp.eq.s32.totalorder %s15, 0
    %p99 = por %p97, %p98
    %p100 = scmp.ne.s32.totalorder %s88, %s89
    %p101 = scmp.eq.s32.totalorder %s16, 1
    %p102 = por %p100, %p101
    %p104 = scmp.ne.s32.totalorder %s89, %s103
    %p105 = scmp.eq.s32.totalorder %s16, 0
    %p106 = por %p104, %p105
    %s107 = ssub.s32 %s10, %s17
    %p108 = scmp.eq.s32.totalorder %s107, 0
    %s110 = sadd.s32 %s109, 1
    %s111 = scalar_select %p108, %s109, %s110
    %p114 = pneg %p108
    %p115 = scmp.eq.s32.totalorder %s10, 1
    %p116 = por %p114, %p115
    %p117 = scmp.ne.s32.totalorder %s109, %s112
    %p118 = scmp.eq.s32.totalorder %s10, 0
    %p119 = por %p117, %p118
    %p120 = scmp.ne.s32.totalorder %s109, %s112
    %p121 = scmp.eq.s32.totalorder %s15, 1
    %p122 = por %p120, %p121
    %p123 = scmp.ne.s32.totalorder %s112, %s113
    %p124 = scmp.eq.s32.totalorder %s15, 0
    %p125 = por %p123, %p124
    %p126 = scmp.ne.s32.totalorder %s112, %s113
    %p127 = scmp.eq.s32.totalorder %s16, 1
    %p128 = por %p126, %p127
    %p130 = scmp.ne.s32.totalorder %s113, %s129
    %p131 = scmp.eq.s32.totalorder %s16, 0
    %p132 = por %p130, %p131
    %p133 = scmp.le.s32.totalorder 1, %s10
    %p134 = scmp.lt.s32.totalorder %s10, 3
    %p135 = pnand %p133, %p134
    %p136 = pneg %p135
    // Predicated region
    $region9: #{preact_bottleneck.6} parent=5 // pred_check
      _
    $region10: #{preact_bottleneck.6} parent=5 // pred_check_branch
      %138 = sbr.rel (%p135) target = $region12
    $region11: #{preact_bottleneck.6} parent=5 // pred_region
      %s139 = ssub.s32 %s10, 1
      // Predicated region
      $region13: #{preact_bottleneck.6} parent=11 // pred_check
        %p140 = pneg %p57
      $region14: #{preact_bottleneck.6} parent=11 // pred_check_branch
        %142 = sbr.rel (%p140) target = $region16
      $region15: #{preact_bottleneck.6} parent=11 // pred_region
        _
      $region16: #{preact_bottleneck.6} parent=11 // pred_fallthru
        _
      // Predicated region
      $region17: #{preact_bottleneck.6} parent=11 // pred_check
        %p143 = pneg %p78
      $region18: #{preact_bottleneck.6} parent=11 // pred_check_branch
        %145 = sbr.rel (%p143) target = $region20
      $region19: #{preact_bottleneck.6} parent=11 // pred_region
        _
      $region20: #{preact_bottleneck.6} parent=11 // pred_fallthru
        _
      // Predicated region
      $region21: #{preact_bottleneck.6} parent=11 // pred_check
        %p146 = pneg %p99
      $region22: #{preact_bottleneck.6} parent=11 // pred_check_branch
        %148 = sbr.rel (%p146) target = $region24
      $region23: #{preact_bottleneck.6} parent=11 // pred_region
        _
      $region24: #{preact_bottleneck.6} parent=11 // pred_fallthru
        _
    $region12: #{preact_bottleneck.6} parent=5 // pred_fallthru
      _
    %p149 = scmp.lt.s32.totalorder %s10, 2
    // Predicated region
    $region25: #{preact_bottleneck.6} parent=5 // pred_check
      %p150 = pneg %p149
    $region26: #{preact_bottleneck.6} parent=5 // pred_check_branch
      %152 = sbr.rel (%p150) target = $region28
    $region27: #{preact_bottleneck.6} parent=5 // pred_region
      // Predicated region
      $region29: #{preact_bottleneck.6} parent=27 // pred_check
        %p153 = pneg %p30
      $region30: #{preact_bottleneck.6} parent=27 // pred_check_branch
        %155 = sbr.rel (%p153) target = $region32
      $region31: #{preact_bottleneck.6} parent=27 // pred_region
        %p156 = scmp.lt.s32.totalorder %s10, 1
        %s157 = scalar_select %p156, %s10, 1
        %s158 = smul.addr %s157, 36
        %s159 = smul.addr %s158, 4
        %s160 = scalar_lea.vmem %s0, %s159
      $region32: #{preact_bottleneck.6} parent=27 // pred_fallthru
        _
    $region28: #{preact_bottleneck.6} parent=5 // pred_fallthru
      _
    %p161 = scmp.le.s32.totalorder 1, %s10
    %p162 = scmp.lt.s32.totalorder %s10, 3
    %p163 = pnand %p161, %p162
    %p164 = pneg %p163
    // Predicated region
    $region33: #{preact_bottleneck.6} parent=5 // pred_check
      _
    $region34: #{preact_bottleneck.6} parent=5 // pred_check_branch
      %166 = sbr.rel (%p163) target = $region36
    $region35: #{preact_bottleneck.6} parent=5 // pred_region
      %s167 = ssub.s32 %s10, 1
      %p168 = scmp.lt.s32.totalorder %s15, 1
      %s169 = scalar_select %p168, %s15, 1
      %s170 = smul.addr %s169, 36
      %s171 = smul.addr %s170, 4
      %s172 = scalar_lea.vmem %s0, %s171
      %p173 = pneg %p36
      %p174 = pneg %p33
      %p175 = pneg %p57
      %p176 = pneg %p54
      %p177 = pneg %p78
      %p178 = pneg %p75
      %p179 = pneg %p99
      %p180 = pneg %p96
      %p181 = pneg %p125
      %p182 = pneg %p122
      %p183 = scmp.lt.s32.totalorder %s15, 1
      %s184 = scalar_select %p183, %s15, 1
      %s185 = smul.addr %s184, 8
      %s186 = smul.addr %s185, 4
      %s187 = scalar_lea.vmem %s4, %s186
      %p188 = scmp.lt.s32.totalorder %s15, 1
      %s189 = scalar_select %p188, %s15, 1
      %s190 = smul.addr %s189, 36
      %s191 = smul.addr %s190, 4
      %s192 = scalar_lea.vmem %s0, %s191
      %p193 = scmp.lt.s32.totalorder %s15, 1
      %s194 = scalar_select %p193, %s15, 1
      %s195 = smul.addr %s194, 8
      %s196 = smul.addr %s195, 4
      %s197 = scalar_lea.vmem %s4, %s196
      %v199 = vld [vmem:[%s192] sm:$0xf]
      %v200 = vld [vmem:[%s192 + $0x4] sm:$0x1]
      %v201 = vld [vmem:[%s192 + $0x10] sm:$0xf]
      %v202 = vld [vmem:[%s192 + $0x14] sm:$0x1]
      %v203 = vld [vmem:[%s192 + $0x20] sm:$0xf]
      %v204 = vld [vmem:[%s192 + $0x24] sm:$0x1]
      %v205 = vld [vmem:[%s192 + $0x30] sm:$0xf]
      %v206 = vld [vmem:[%s192 + $0x34] sm:$0x1]
      %v207 = vld [vmem:[%s192 + $0x40] sm:$0xf]
      %v208 = vld [vmem:[%s192 + $0x44] sm:$0x1]
      %v209 = vld [vmem:[%s192 + $0x50] sm:$0xf]
      %v210 = vld [vmem:[%s192 + $0x54] sm:$0x1]
      %v211 = vld [vmem:[%s192 + $0x60] sm:$0xf]
      %v212 = vld [vmem:[%s192 + $0x64] sm:$0x1]
      %v213 = vld [vmem:[%s192 + $0x70] sm:$0xf]
      %v214 = vld [vmem:[%s192 + $0x74] sm:$0x1]
      %v215 = vld [vmem:[%s1] sm:$0xf]
      %v224 = vunpack.c.l.b16 %v199
      %v225 = vunpack.c.l.b16 %v201
      %v226 = vunpack.c.l.b16 %v203
      %v227 = vunpack.c.l.b16 %v205
      %v228 = vunpack.c.l.b16 %v207
      %v229 = vunpack.c.l.b16 %v209
      %v230 = vunpack.c.l.b16 %v211
      %v231 = vunpack.c.l.b16 %v213
      %v232 = vpack.c.b16 %v225, %v224
      %v233 = vpack.c.b16 %v227, %v226
      %v234 = vpack.c.b16 %v229, %v228
      %v235 = vpack.c.b16 %v231, %v230
      %vm236 = vcmask 64512
      %v238 = vsel %vm236, %v232, 0
      %v241 = vsel %vm236, %v233, 0
      %v244 = vsel %vm236, %v234, 0
      %v247 = vsel %vm236, %v235, 0
      %vm249 = vcmask 1043456
      %v251 = vsel %vm249, %v215, 0
      %253 = vmatprep.subr.bf16.mxu0 0
      %254 = vmatpush1.bf16.msra.mxu0 0
      %255 = vmatprep.subr.bf16.mxu0 0
      %256 = vmatpush1.bf16.msra.mxu0 0
      %257 = vmatprep.subr.bf16.mxu0 0
      %258 = vmatpush1.bf16.msra.mxu0 0
      %259 = vmatprep.subr.bf16.mxu0 0
      %260 = vmatpush1.bf16.msra.mxu0 0
      %261 = vmatprep.subr.bf16.mxu0 0
      %262 = vmatpush1.bf16.msra.mxu0 0
      %263 = vmatprep.subr.bf16.mxu0 0
      %264 = vmatpush1.bf16.msra.mxu0 0
      %265 = vmatprep.subr.bf16.mxu0 0
      %266 = vmatpush1.bf16.msra.mxu0 0
      %267 = vmatprep.subr.bf16.mxu0 0
      %268 = vmatpush1.bf16.msra.mxu0 %v251
      %269 = vmatprep.subr.bf16.mxu0 0
      %270 = vmatpush2.bf16.msra.mxu0 0
      %271 = vmatprep.subr.bf16.mxu0 0
      %272 = vmatpush2.bf16.msra.mxu0 0
      %273 = vmatprep.subr.bf16.mxu0 0
      %274 = vmatpush2.bf16.msra.mxu0 0
      %275 = vmatprep.subr.bf16.mxu0 0
      %276 = vmatpush2.bf16.msra.mxu0 0
      %277 = vmatprep.subr.bf16.mxu0 0
      %278 = vmatpush2.bf16.msra.mxu0 0
      %279 = vmatprep.subr.bf16.mxu0 0
      %280 = vmatpush2.bf16.msra.mxu0 0
      %281 = vmatprep.subr.bf16.mxu0 0
      %282 = vmatpush2.bf16.msra.mxu0 0
      %283 = vmatprep.subr.bf16.mxu0 0
      %284 = vmatpush2.bf16.msra.mxu0 0
      %285 = vmatprep.mubr.bf16.mxu0 0
      %286 = vmatmul.mubr.bf16.gmra.mxu0 %v238
      %v287 = vpop.f32.mrf.mxu0
      %v288 = vadd.f32 0.0, %v287
      %v289 = vpop.f32.mrf.mxu0
      %v290 = vpop.f32.mrf.mxu0
      %v291 = vadd.f32 0.0, %v290
      %v292 = vpop.f32.mrf.mxu0
      %293 = vmatprep.mubr.bf16.mxu0 0
      %294 = vmatmul.mubr.bf16.gmra.mxu0 %v241
      %v295 = vpop.f32.mrf.mxu0
      %v296 = vadd.f32 0.0, %v295
      %v297 = vpop.f32.mrf.mxu0
      %v298 = vpop.f32.mrf.mxu0
      %v299 = vadd.f32 0.0, %v298
      %v300 = vpop.f32.mrf.mxu0
      %301 = vmatprep.mubr.bf16.mxu0 0
      %302 = vmatmul.mubr.bf16.gmra.mxu0 %v244
      %v303 = vpop.f32.mrf.mxu0
      %v304 = vadd.f32 0.0, %v303
      %v305 = vpop.f32.mrf.mxu0
      %v306 = vpop.f32.mrf.mxu0
      %v307 = vadd.f32 0.0, %v306
      %v308 = vpop.f32.mrf.mxu0
      %309 = vmatprep.mubr.bf16.mxu0 0
      %310 = vmatmul.mubr.bf16.gmra.mxu0 %v247
      %v311 = vpop.f32.mrf.mxu0
      %v312 = vadd.f32 0.0, %v311
      %v313 = vpop.f32.mrf.mxu0
      %v314 = vpop.f32.mrf.mxu0
      %v315 = vadd.f32 0.0, %v314
      %v316 = vpop.f32.mrf.mxu0
      %317 = vdwg.mxu0
      %318 = vst.msk [vmem:[#allocation2] sm:$0xff] %vm236, %v288
      %319 = vst.msk [vmem:[#allocation2 + $0x8] sm:$0xff] %vm236, %v291
      %320 = vst.msk [vmem:[#allocation2 + $0x10] sm:$0xff] %vm236, %v296
      %321 = vst.msk [vmem:[#allocation2 + $0x18] sm:$0xff] %vm236, %v299
      %322 = vst.msk [vmem:[#allocation2 + $0x20] sm:$0xff] %vm236, %v304
      %323 = vst.msk [vmem:[#allocation2 + $0x28] sm:$0xff] %vm236, %v307
      %324 = vst.msk [vmem:[#allocation2 + $0x30] sm:$0xff] %vm236, %v312
      %325 = vst.msk [vmem:[#allocation2 + $0x38] sm:$0xff] %vm236, %v315
      %s326 = scalar_lea.vmem %s1, 4
      %v327 = vld [vmem:[%s326] sm:$0xf]
      %328 = vrot.lane.b32.xlu0 %v232, 120
      %v329 = vpop.permute.xlu0 %328
      %330 = vrot.lane.b32.xlu0 %v233, 120
      %v331 = vpop.permute.xlu0 %330
      %332 = vrot.lane.b32.xlu0 %v234, 120
      %v333 = vpop.permute.xlu0 %332
      %334 = vrot.lane.b32.xlu0 %v235, 120
      %v335 = vpop.permute.xlu0 %334
      %v337 = vsel %vm236, %v329, 0
      %v340 = vsel %vm236, %v331, 0
      %v343 = vsel %vm236, %v333, 0
      %v346 = vsel %vm236, %v335, 0
      %v349 = vsel %vm249, %v327, 0
      %351 = vmatprep.subr.bf16.mxu0 0
      %352 = vmatpush1.bf16.msra.mxu0 0
      %353 = vmatprep.subr.bf16.mxu0 0
      %354 = vmatpush1.bf16.msra.mxu0 0
      %355 = vmatprep.subr.bf16.mxu0 0
      %356 = vmatpush1.bf16.msra.mxu0 0
      %357 = vmatprep.subr.bf16.mxu0 0
      %358 = vmatpush1.bf16.msra.mxu0 0
      %359 = vmatprep.subr.bf16.mxu0 0
      %360 = vmatpush1.bf16.msra.mxu0 0
      %361 = vmatprep.subr.bf16.mxu0 0
      %362 = vmatpush1.bf16.msra.mxu0 0
      %363 = vmatprep.subr.bf16.mxu0 0
      %364 = vmatpush1.bf16.msra.mxu0 0
      %365 = vmatprep.subr.bf16.mxu0 0
      %366 = vmatpush1.bf16.msra.mxu0 %v349
      %367 = vmatprep.subr.bf16.mxu0 0
      %368 = vmatpush2.bf16.msra.mxu0 0
      %369 = vmatprep.subr.bf16.mxu0 0
      %370 = vmatpush2.bf16.msra.mxu0 0
      %371 = vmatprep.subr.bf16.mxu0 0
      %372 = vmatpush2.bf16.msra.mxu0 0
      %373 = vmatprep.subr.bf16.mxu0 0
      %374 = vmatpush2.bf16.msra.mxu0 0
      %375 = vmatprep.subr.bf16.mxu0 0
      %376 = vmatpush2.bf16.msra.mxu0 0
      %377 = vmatprep.subr.bf16.mxu0 0
      %378 = vmatpush2.bf16.msra.mxu0 0
      %379 = vmatprep.subr.bf16.mxu0 0
      %380 = vmatpush2.bf16.msra.mxu0 0
      %381 = vmatprep.subr.bf16.mxu0 0
      %382 = vmatpush2.bf16.msra.mxu0 0
      %383 = vmatprep.mubr.bf16.mxu0 0
      %384 = vmatmul.mubr.bf16.gmra.mxu0 %v337
      %v385 = vpop.f32.mrf.mxu0
      %v386 = vadd.f32 0.0, %v385
      %v387 = vpop.f32.mrf.mxu0
      %v388 = vpop.f32.mrf.mxu0
      %v389 = vadd.f32 0.0, %v388
      %v390 = vpop.f32.mrf.mxu0
      %391 = vmatprep.mubr.bf16.mxu0 0
      %392 = vmatmul.mubr.bf16.gmra.mxu0 %v340
      %v393 = vpop.f32.mrf.mxu0
      %v394 = vadd.f32 0.0, %v393
      %v395 = vpop.f32.mrf.mxu0
      %v396 = vpop.f32.mrf.mxu0
      %v397 = vadd.f32 0.0, %v396
      %v398 = vpop.f32.mrf.mxu0
      %399 = vmatprep.mubr.bf16.mxu0 0
      %400 = vmatmul.mubr.bf16.gmra.mxu0 %v343
      %v401 = vpop.f32.mrf.mxu0
      %v402 = vadd.f32 0.0, %v401
      %v403 = vpop.f32.mrf.mxu0
      %v404 = vpop.f32.mrf.mxu0
      %v405 = vadd.f32 0.0, %v404
      %v406 = vpop.f32.mrf.mxu0
      %407 = vmatprep.mubr.bf16.mxu0 0
      %408 = vmatmul.mubr.bf16.gmra.mxu0 %v346
      %v409 = vpop.f32.mrf.mxu0
      %v410 = vadd.f32 0.0, %v409
      %v411 = vpop.f32.mrf.mxu0
      %v412 = vpop.f32.mrf.mxu0
      %v413 = vadd.f32 0.0, %v412
      %v414 = vpop.f32.mrf.mxu0
      %415 = vdwg.mxu0
      %v416 = vld [vmem:[#allocation2] sm:$0xff]
      %v417 = vld [vmem:[#allocation2 + $0x8] sm:$0xff]
      %v418 = vld [vmem:[#allocation2 + $0x10] sm:$0xff]
      %v419 = vld [vmem:[#allocation2 + $0x18] sm:$0xff]
      %v420 = vld [vmem:[#allocation2 + $0x20] sm:$0xff]
      %v421 = vld [vmem:[#allocation2 + $0x28] sm:$0xff]
      %v422 = vld [vmem:[#allocation2 + $0x30] sm:$0xff]
      %v423 = vld [vmem:[#allocation2 + $0x38] sm:$0xff]
      %v424 = vadd.f32 %v416, %v386
      %v425 = vadd.f32 %v417, %v389
      %v426 = vadd.f32 %v418, %v394
      %v427 = vadd.f32 %v419, %v397
      %v428 = vadd.f32 %v420, %v402
      %v429 = vadd.f32 %v421, %v405
      %v430 = vadd.f32 %v422, %v410
      %v431 = vadd.f32 %v423, %v413
      %432 = vst.msk [vmem:[#allocation2] sm:$0xff] %vm236, %v424
      %433 = vst.msk [vmem:[#allocation2 + $0x8] sm:$0xff] %vm236, %v425
      %434 = vst.msk [vmem:[#allocation2 + $0x10] sm:$0xff] %vm236, %v426
      %435 = vst.msk [vmem:[#allocation2 + $0x18] sm:$0xff] %vm236, %v427
      %436 = vst.msk [vmem:[#allocation2 + $0x20] sm:$0xff] %vm236, %v428
      %437 = vst.msk [vmem:[#allocation2 + $0x28] sm:$0xff] %vm236, %v429
      %438 = vst.msk [vmem:[#allocation2 + $0x30] sm:$0xff] %vm236, %v430
      %439 = vst.msk [vmem:[#allocation2 + $0x38] sm:$0xff] %vm236, %v431
      %vm440 = vsmask.f32 3328
      %vm441 = vsmask.f32 7440
      %vm442 = vmor %vm440, %vm441
      %v444 = vshrl.u32 %v199, 16
      %v446 = vrot.slane %v444, 4
      %v447 = vshll.u32 %v199, 16
      %v449 = vrot.slane %v447, 5
      %v450 = vor.u32 %v446, %v449
      %v451 = vrot.slane %v450, 4
      %v453 = vshll.u32 %v200, 16
      %v455 = vrot.slane %v453, 5
      %v456 = vsel %vm442, %v451, %v455
      %v458 = vshrl.u32 %v201, 16
      %v460 = vrot.slane %v458, 4
      %v461 = vshll.u32 %v201, 16
      %v463 = vrot.slane %v461, 5
      %v464 = vor.u32 %v460, %v463
      %v465 = vrot.slane %v464, 4
      %v467 = vshll.u32 %v202, 16
      %v469 = vrot.slane %v467, 5
      %v470 = vsel %vm442, %v465, %v469
      %v472 = vshrl.u32 %v203, 16
      %v474 = vrot.slane %v472, 4
      %v475 = vshll.u32 %v203, 16
      %v477 = vrot.slane %v475, 5
      %v478 = vor.u32 %v474, %v477
      %v479 = vrot.slane %v478, 4
      %v481 = vshll.u32 %v204, 16
      %v483 = vrot.slane %v481, 5
      %v484 = vsel %vm442, %v479, %v483
      %v486 = vshrl.u32 %v205, 16
      %v488 = vrot.slane %v486, 4
      %v489 = vshll.u32 %v205, 16
      %v491 = vrot.slane %v489, 5
      %v492 = vor.u32 %v488, %v491
      %v493 = vrot.slane %v492, 4
      %v495 = vshll.u32 %v206, 16
      %v497 = vrot.slane %v495, 5
      %v498 = vsel %vm442, %v493, %v497
      %v500 = vshrl.u32 %v207, 16
      %v502 = vrot.slane %v500, 4
      %v503 = vshll.u32 %v207, 16
      %v505 = vrot.slane %v503, 5
      %v506 = vor.u32 %v502, %v505
      %v507 = vrot.slane %v506, 4
      %v509 = vshll.u32 %v208, 16
      %v511 = vrot.slane %v509, 5
      %v512 = vsel %vm442, %v507, %v511
      %v514 = vshrl.u32 %v209, 16
      %v516 = vrot.slane %v514, 4
      %v517 = vshll.u32 %v209, 16
      %v519 = vrot.slane %v517, 5
      %v520 = vor.u32 %v516, %v519
      %v521 = vrot.slane %v520, 4
      %v523 = vshll.u32 %v210, 16
      %v525 = vrot.slane %v523, 5
      %v526 = vsel %vm442, %v521, %v525
      %v528 = vshrl.u32 %v211, 16
      %v530 = vrot.slane %v528, 4
      %v531 = vshll.u32 %v211, 16
      %v533 = vrot.slane %v531, 5
      %v534 = vor.u32 %v530, %v533
      %v535 = vrot.slane %v534, 4
      %v537 = vshll.u32 %v212, 16
      %v539 = vrot.slane %v537, 5
      %v540 = vsel %vm442, %v535, %v539
      %v542 = vshrl.u32 %v213, 16
      %v544 = vrot.slane %v542, 4
      %v545 = vshll.u32 %v213, 16
      %v547 = vrot.slane %v545, 5
      %v548 = vor.u32 %v544, %v547
      %v549 = vrot.slane %v548, 4
      %v551 = vshll.u32 %v214, 16
      %v553 = vrot.slane %v551, 5
      %v554 = vsel %vm442, %v549, %v553
      %s555 = scalar_lea.vmem %s1, 8
      %v556 = vld [vmem:[%s555] sm:$0xf]
      %v557 = vunpack.c.l.b16 %v456
      %v558 = vunpack.c.l.b16 %v470
      %v559 = vunpack.c.l.b16 %v484
      %v560 = vunpack.c.l.b16 %v498
      %v561 = vunpack.c.l.b16 %v512
      %v562 = vunpack.c.l.b16 %v526
      %v563 = vunpack.c.l.b16 %v540
      %v564 = vunpack.c.l.b16 %v554
      %v565 = vpack.c.b16 %v558, %v557
      %v566 = vpack.c.b16 %v560, %v559
      %v567 = vpack.c.b16 %v562, %v561
      %v568 = vpack.c.b16 %v564, %v563
      %v570 = vsel %vm236, %v565, 0
      %v573 = vsel %vm236, %v566, 0
      %v576 = vsel %vm236, %v567, 0
      %v579 = vsel %vm236, %v568, 0
      %v582 = vsel %vm249, %v556, 0
      %584 = vmatprep.subr.bf16.mxu0 0
      %585 = vmatpush1.bf16.msra.mxu0 0
      %586 = vmatprep.subr.bf16.mxu0 0
      %587 = vmatpush1.bf16.msra.mxu0 0
      %588 = vmatprep.subr.bf16.mxu0 0
      %589 = vmatpush1.bf16.msra.mxu0 0
      %590 = vmatprep.subr.bf16.mxu0 0
      %591 = vmatpush1.bf16.msra.mxu0 0
      %592 = vmatprep.subr.bf16.mxu0 0
      %593 = vmatpush1.bf16.msra.mxu0 0
      %594 = vmatprep.subr.bf16.mxu0 0
      %595 = vmatpush1.bf16.msra.mxu0 0
      %596 = vmatprep.subr.bf16.mxu0 0
      %597 = vmatpush1.bf16.msra.mxu0 0
      %598 = vmatprep.subr.bf16.mxu0 0
      %599 = vmatpush1.bf16.msra.mxu0 %v582
      %600 = vmatprep.subr.bf16.mxu0 0
      %601 = vmatpush2.bf16.msra.mxu0 0
      %602 = vmatprep.subr.bf16.mxu0 0
      %603 = vmatpush2.bf16.msra.mxu0 0
      %604 = vmatprep.subr.bf16.mxu0 0
      %605 = vmatpush2.bf16.msra.mxu0 0
      %606 = vmatprep.subr.bf16.mxu0 0
      %607 = vmatpush2.bf16.msra.mxu0 0
      %608 = vmatprep.subr.bf16.mxu0 0
      %609 = vmatpush2.bf16.msra.mxu0 0
      %610 = vmatprep.subr.bf16.mxu0 0
      %611 = vmatpush2.bf16.msra.mxu0 0
      %612 = vmatprep.subr.bf16.mxu0 0
      %613 = vmatpush2.bf16.msra.mxu0 0
      %614 = vmatprep.subr.bf16.mxu0 0
      %615 = vmatpush2.bf16.msra.mxu0 0
      %616 = vmatprep.mubr.bf16.mxu0 0
      %617 = vmatmul.mubr.bf16.gmra.mxu0 %v570
      %v618 = vpop.f32.mrf.mxu0
      %v619 = vadd.f32 0.0, %v618
      %v620 = vpop.f32.mrf.mxu0
      %v621 = vpop.f32.mrf.mxu0
      %v622 = vadd.f32 0.0, %v621
      %v623 = vpop.f32.mrf.mxu0
      %624 = vmatprep.mubr.bf16.mxu0 0
      %625 = vmatmul.mubr.bf16.gmra.mxu0 %v573
      %v626 = vpop.f32.mrf.mxu0
      %v627 = vadd.f32 0.0, %v626
      %v628 = vpop.f32.mrf.mxu0
      %v629 = vpop.f32.mrf.mxu0
      %v630 = vadd.f32 0.0, %v629
      %v631 = vpop.f32.mrf.mxu0
      %632 = vmatprep.mubr.bf16.mxu0 0
      %633 = vmatmul.mubr.bf16.gmra.mxu0 %v576
      %v634 = vpop.f32.mrf.mxu0
      %v635 = vadd.f32 0.0, %v634
      %v636 = vpop.f32.mrf.mxu0
      %v637 = vpop.f32.mrf.mxu0
      %v638 = vadd.f32 0.0, %v637
      %v639 = vpop.f32.mrf.mxu0
      %640 = vmatprep.mubr.bf16.mxu0 0
      %641 = vmatmul.mubr.bf16.gmra.mxu0 %v579
      %v642 = vpop.f32.mrf.mxu0
      %v643 = vadd.f32 0.0, %v642
      %v644 = vpop.f32.mrf.mxu0
      %v645 = vpop.f32.mrf.mxu0
      %v646 = vadd.f32 0.0, %v645
      %v647 = vpop.f32.mrf.mxu0
      %648 = vdwg.mxu0
      %v649 = vld [vmem:[#allocation2] sm:$0xff]
      %v650 = vld [vmem:[#allocation2 + $0x8] sm:$0xff]
      %v651 = vld [vmem:[#allocation2 + $0x10] sm:$0xff]
      %v652 = vld [vmem:[#allocation2 + $0x18] sm:$0xff]
      %v653 = vld [vmem:[#allocation2 + $0x20] sm:$0xff]
      %v654 = vld [vmem:[#allocation2 + $0x28] sm:$0xff]
      %v655 = vld [vmem:[#allocation2 + $0x30] sm:$0xff]
      %v656 = vld [vmem:[#allocation2 + $0x38] sm:$0xff]
      %v657 = vadd.f32 %v649, %v619
      %v658 = vadd.f32 %v650, %v622
      %v659 = vadd.f32 %v651, %v627
      %v660 = vadd.f32 %v652, %v630
      %v661 = vadd.f32 %v653, %v635
      %v662 = vadd.f32 %v654, %v638
      %v663 = vadd.f32 %v655, %v643
      %v664 = vadd.f32 %v656, %v646
      %665 = vst.msk [vmem:[#allocation2] sm:$0xff] %vm236, %v657
      %666 = vst.msk [vmem:[#allocation2 + $0x8] sm:$0xff] %vm236, %v658
      %667 = vst.msk [vmem:[#allocation2 + $0x10] sm:$0xff] %vm236, %v659
      %668 = vst.msk [vmem:[#allocation2 + $0x18] sm:$0xff] %vm236, %v660
      %669 = vst.msk [vmem:[#allocation2 + $0x20] sm:$0xff] %vm236, %v661
      %670 = vst.msk [vmem:[#allocation2 + $0x28] sm:$0xff] %vm236, %v662
      %671 = vst.msk [vmem:[#allocation2 + $0x30] sm:$0xff] %vm236, %v663
      %672 = vst.msk [vmem:[#allocation2 + $0x38] sm:$0xff] %vm236, %v664
      %s673 = scalar_lea.vmem %s192, 8
      %v674 = vld [vmem:[%s673] sm:$0xf]
      %v675 = vld [vmem:[%s673 + $0x4] sm:$0x1]
      %v676 = vld [vmem:[%s673 + $0x10] sm:$0xf]
      %v677 = vld [vmem:[%s673 + $0x14] sm:$0x1]
      %v678 = vld [vmem:[%s673 + $0x20] sm:$0xf]
      %v679 = vld [vmem:[%s673 + $0x24] sm:$0x1]
      %v680 = vld [vmem:[%s673 + $0x30] sm:$0xf]
      %v681 = vld [vmem:[%s673 + $0x34] sm:$0x1]
      %v682 = vld [vmem:[%s673 + $0x40] sm:$0xf]
      %v683 = vld [vmem:[%s673 + $0x44] sm:$0x1]
      %v684 = vld [vmem:[%s673 + $0x50] sm:$0xf]
      %v685 = vld [vmem:[%s673 + $0x54] sm:$0x1]
      %v686 = vld [vmem:[%s673 + $0x60] sm:$0xf]
      %v687 = vld [vmem:[%s673 + $0x64] sm:$0x1]
      %v688 = vld [vmem:[%s673 + $0x70] sm:$0xf]
      %v689 = vld [vmem:[%s673 + $0x74] sm:$0x1]
      %s690 = scalar_lea.vmem %s1, 12
      %v691 = vld [vmem:[%s690] sm:$0xf]
      %v700 = vunpack.c.l.b16 %v674
      %v701 = vunpack.c.l.b16 %v676
      %v702 = vunpack.c.l.b16 %v678
      %v703 = vunpack.c.l.b16 %v680
      %v704 = vunpack.c.l.b16 %v682
      %v705 = vunpack.c.l.b16 %v684
      %v706 = vunpack.c.l.b16 %v686
      %v707 = vunpack.c.l.b16 %v688
      %v708 = vpack.c.b16 %v701, %v700
      %v709 = vpack.c.b16 %v703, %v702
      %v710 = vpack.c.b16 %v705, %v704
      %v711 = vpack.c.b16 %v707, %v706
      %v713 = vsel %vm236, %v708, 0
      %v716 = vsel %vm236, %v709, 0
      %v719 = vsel %vm236, %v710, 0
      %v722 = vsel %vm236, %v711, 0
      %v725 = vsel %vm249, %v691, 0
      %727 = vmatprep.subr.bf16.mxu0 0
      %728 = vmatpush1.bf16.msra.mxu0 0
      %729 = vmatprep.subr.bf16.mxu0 0
      %730 = vmatpush1.bf16.msra.mxu0 0
      %731 = vmatprep.subr.bf16.mxu0 0
      %732 = vmatpush1.bf16.msra.mxu0 0
      %733 = vmatprep.subr.bf16.mxu0 0
      %734 = vmatpush1.bf16.msra.mxu0 0
      %735 = vmatprep.subr.bf16.mxu0 0
      %736 = vmatpush1.bf16.msra.mxu0 0
      %737 = vmatprep.subr.bf16.mxu0 0
      %738 = vmatpush1.bf16.msra.mxu0 0
      %739 = vmatprep.subr.bf16.mxu0 0
      %740 = vmatpush1.bf16.msra.mxu0 0
      %741 = vmatprep.subr.bf16.mxu0 0
      %742 = vmatpush1.bf16.msra.mxu0 %v725
      %743 = vmatprep.subr.bf16.mxu0 0
      %744 = vmatpush2.bf16.msra.mxu0 0
      %745 = vmatprep.subr.bf16.mxu0 0
      %746 = vmatpush2.bf16.msra.mxu0 0
      %747 = vmatprep.subr.bf16.mxu0 0
      %748 = vmatpush2.bf16.msra.mxu0 0
      %749 = vmatprep.subr.bf16.mxu0 0
      %750 = vmatpush2.bf16.msra.mxu0 0
      %751 = vmatprep.subr.bf16.mxu0 0
      %752 = vmatpush2.bf16.msra.mxu0 0
      %753 = vmatprep.subr.bf16.mxu0 0
      %754 = vmatpush2.bf16.msra.mxu0 0
      %755 = vmatprep.subr.bf16.mxu0 0
      %756 = vmatpush2.bf16.msra.mxu0 0
      %757 = vmatprep.subr.bf16.mxu0 0
      %758 = vmatpush2.bf16.msra.mxu0 0
      %759 = vmatprep.mubr.bf16.mxu0 0
      %760 = vmatmul.mubr.bf16.gmra.mxu0 %v713
      %v761 = vpop.f32.mrf.mxu0
      %v762 = vadd.f32 0.0, %v761
      %v763 = vpop.f32.mrf.mxu0
      %v764 = vpop.f32.mrf.mxu0
      %v765 = vadd.f32 0.0, %v764
      %v766 = vpop.f32.mrf.mxu0
      %767 = vmatprep.mubr.bf16.mxu0 0
      %768 = vmatmul.mubr.bf16.gmra.mxu0 %v716
      %v769 = vpop.f32.mrf.mxu0
      %v770 = vadd.f32 0.0, %v769
      %v771 = vpop.f32.mrf.mxu0
      %v772 = vpop.f32.mrf.mxu0
      %v773 = vadd.f32 0.0, %v772
      %v774 = vpop.f32.mrf.mxu0
      %775 = vmatprep.mubr.bf16.mxu0 0
      %776 = vmatmul.mubr.bf16.gmra.mxu0 %v719
      %v777 = vpop.f32.mrf.mxu0
      %v778 = vadd.f32 0.0, %v777
      %v779 = vpop.f32.mrf.mxu0
      %v780 = vpop.f32.mrf.mxu0
      %v781 = vadd.f32 0.0, %v780
      %v782 = vpop.f32.mrf.mxu0
      %783 = vmatprep.mubr.bf16.mxu0 0
      %784 = vmatmul.mubr.bf16.gmra.mxu0 %v722
      %v785 = vpop.f32.mrf.mxu0
      %v786 = vadd.f32 0.0, %v785
      %v787 = vpop.f32.mrf.mxu0
      %v788 = vpop.f32.mrf.mxu0
      %v789 = vadd.f32 0.0, %v788
      %v790 = vpop.f32.mrf.mxu0
      %791 = vdwg.mxu0
      %v792 = vld [vmem:[#allocation2] sm:$0xff]
      %v793 = vld [vmem:[#allocation2 + $0x8] sm:$0xff]
      %v794 = vld [vmem:[#allocation2 + $0x10] sm:$0xff]
      %v795 = vld [vmem:[#allocation2 + $0x18] sm:$0xff]
      %v796 = vld [vmem:[#allocation2 + $0x20] sm:$0xff]
      %v797 = vld [vmem:[#allocation2 + $0x28] sm:$0xff]
      %v798 = vld [vmem:[#allocation2 + $0x30] sm:$0xff]
      %v799 = vld [vmem:[#allocation2 + $0x38] sm:$0xff]
      %v800 = vadd.f32 %v792, %v762
      %v801 = vadd.f32 %v793, %v765
      %v802 = vadd.f32 %v794, %v770
      %v803 = vadd.f32 %v795, %v773
      %v804 = vadd.f32 %v796, %v778
      %v805 = vadd.f32 %v797, %v781
      %v806 = vadd.f32 %v798, %v786
      %v807 = vadd.f32 %v799, %v789
      %808 = vst.msk [vmem:[#allocation2] sm:$0xff] %vm236, %v800
      %809 = vst.msk [vmem:[#allocation2 + $0x8] sm:$0xff] %vm236, %v801
      %810 = vst.msk [vmem:[#allocation2 + $0x10] sm:$0xff] %vm236, %v802
      %811 = vst.msk [vmem:[#allocation2 + $0x18] sm:$0xff] %vm236, %v803
      %812 = vst.msk [vmem:[#allocation2 + $0x20] sm:$0xff] %vm236, %v804
      %813 = vst.msk [vmem:[#allocation2 + $0x28] sm:$0xff] %vm236, %v805
      %814 = vst.msk [vmem:[#allocation2 + $0x30] sm:$0xff] %vm236, %v806
      %815 = vst.msk [vmem:[#allocation2 + $0x38] sm:$0xff] %vm236, %v807
      %s816 = scalar_lea.vmem %s1, 16
      %v817 = vld [vmem:[%s816] sm:$0xf]
      %818 = vrot.lane.b32.xlu0 %v708, 120
      %v819 = vpop.permute.xlu0 %818
      %820 = vrot.lane.b32.xlu0 %v709, 120
      %v821 = vpop.permute.xlu0 %820
      %822 = vrot.lane.b32.xlu0 %v710, 120
      %v823 = vpop.permute.xlu0 %822
      %824 = vrot.lane.b32.xlu0 %v711, 120
      %v825 = vpop.permute.xlu0 %824
      %v827 = vsel %vm236, %v819, 0
      %v830 = vsel %vm236, %v821, 0
      %v833 = vsel %vm236, %v823, 0
      %v836 = vsel %vm236, %v825, 0
      %v839 = vsel %vm249, %v817, 0
      %841 = vmatprep.subr.bf16.mxu0 0
      %842 = vmatpush1.bf16.msra.mxu0 0
      %843 = vmatprep.subr.bf16.mxu0 0
      %844 = vmatpush1.bf16.msra.mxu0 0
      %845 = vmatprep.subr.bf16.mxu0 0
      %846 = vmatpush1.bf16.msra.mxu0 0
      %847 = vmatprep.subr.bf16.mxu0 0
      %848 = vmatpush1.bf16.msra.mxu0 0
      %849 = vmatprep.subr.bf16.mxu0 0
      %850 = vmatpush1.bf16.msra.mxu0 0
      %851 = vmatprep.subr.bf16.mxu0 0
      %852 = vmatpush1.bf16.msra.mxu0 0
      %853 = vmatprep.subr.bf16.mxu0 0
      %854 = vmatpush1.bf16.msra.mxu0 0
      %855 = vmatprep.subr.bf16.mxu0 0
      %856 = vmatpush1.bf16.msra.mxu0 %v839
      %857 = vmatprep.subr.bf16.mxu0 0
      %858 = vmatpush2.bf16.msra.mxu0 0
      %859 = vmatprep.subr.bf16.mxu0 0
      %860 = vmatpush2.bf16.msra.mxu0 0
      %861 = vmatprep.subr.bf16.mxu0 0
      %862 = vmatpush2.bf16.msra.mxu0 0
      %863 = vmatprep.subr.bf16.mxu0 0
      %864 = vmatpush2.bf16.msra.mxu0 0
      %865 = vmatprep.subr.bf16.mxu0 0
      %866 = vmatpush2.bf16.msra.mxu0 0
      %867 = vmatprep.subr.bf16.mxu0 0
      %868 = vmatpush2.bf16.msra.mxu0 0
      %869 = vmatprep.subr.bf16.mxu0 0
      %870 = vmatpush2.bf16.msra.mxu0 0
      %871 = vmatprep.subr.bf16.mxu0 0
      %872 = vmatpush2.bf16.msra.mxu0 0
      %873 = vmatprep.mubr.bf16.mxu0 0
      %874 = vmatmul.mubr.bf16.gmra.mxu0 %v827
      %v875 = vpop.f32.mrf.mxu0
      %v876 = vadd.f32 0.0, %v875
      %v877 = vpop.f32.mrf.mxu0
      %v878 = vpop.f32.mrf.mxu0
      %v879 = vadd.f32 0.0, %v878
      %v880 = vpop.f32.mrf.mxu0
      %881 = vmatprep.mubr.bf16.mxu0 0
      %882 = vmatmul.mubr.bf16.gmra.mxu0 %v830
      %v883 = vpop.f32.mrf.mxu0
      %v884 = vadd.f32 0.0, %v883
      %v885 = vpop.f32.mrf.mxu0
      %v886 = vpop.f32.mrf.mxu0
      %v887 = vadd.f32 0.0, %v886
      %v888 = vpop.f32.mrf.mxu0
      %889 = vmatprep.mubr.bf16.mxu0 0
      %890 = vmatmul.mubr.bf16.gmra.mxu0 %v833
      %v891 = vpop.f32.mrf.mxu0
      %v892 = vadd.f32 0.0, %v891
      %v893 = vpop.f32.mrf.mxu0
      %v894 = vpop.f32.mrf.mxu0
      %v895 = vadd.f32 0.0, %v894
      %v896 = vpop.f32.mrf.mxu0
      %897 = vmatprep.mubr.bf16.mxu0 0
      %898 = vmatmul.mubr.bf16.gmra.mxu0 %v836
      %v899 = vpop.f32.mrf.mxu0
      %v900 = vadd.f32 0.0, %v899
      %v901 = vpop.f32.mrf.mxu0
      %v902 = vpop.f32.mrf.mxu0
      %v903 = vadd.f32 0.0, %v902
      %v904 = vpop.f32.mrf.mxu0
      %905 = vdwg.mxu0
      %v906 = vld [vmem:[#allocation2] sm:$0xff]
      %v907 = vld [vmem:[#allocation2 + $0x8] sm:$0xff]
      %v908 = vld [vmem:[#allocation2 + $0x10] sm:$0xff]
      %v909 = vld [vmem:[#allocation2 + $0x18] sm:$0xff]
      %v910 = vld [vmem:[#allocation2 + $0x20] sm:$0xff]
      %v911 = vld [vmem:[#allocation2 + $0x28] sm:$0xff]
      %v912 = vld [vmem:[#allocation2 + $0x30] sm:$0xff]
      %v913 = vld [vmem:[#allocation2 + $0x38] sm:$0xff]
      %v914 = vadd.f32 %v906, %v876
      %v915 = vadd.f32 %v907, %v879
      %v916 = vadd.f32 %v908, %v884
      %v917 = vadd.f32 %v909, %v887
      %v918 = vadd.f32 %v910, %v892
      %v919 = vadd.f32 %v911, %v895
      %v920 = vadd.f32 %v912, %v900
      %v921 = vadd.f32 %v913, %v903
      %922 = vst.msk [vmem:[#allocation2] sm:$0xff] %vm236, %v914
      %923 = vst.msk [vmem:[#allocation2 + $0x8] sm:$0xff] %vm236, %v915
      %924 = vst.msk [vmem:[#allocation2 + $0x10] sm:$0xff] %vm236, %v916
      %925 = vst.msk [vmem:[#allocation2 + $0x18] sm:$0xff] %vm236, %v917
      %926 = vst.msk [vmem:[#allocation2 + $0x20] sm:$0xff] %vm236, %v918
      %927 = vst.msk [vmem:[#allocation2 + $0x28] sm:$0xff] %vm236, %v919
      %928 = vst.msk [vmem:[#allocation2 + $0x30] sm:$0xff] %vm236, %v920
      %929 = vst.msk [vmem:[#allocation2 + $0x38] sm:$0xff] %vm236, %v921
      %v931 = vshrl.u32 %v674, 16
      %v933 = vrot.slane %v931, 4
      %v934 = vshll.u32 %v674, 16
      %v936 = vrot.slane %v934, 5
      %v937 = vor.u32 %v933, %v936
      %v938 = vrot.slane %v937, 4
      %v940 = vshll.u32 %v675, 16
      %v942 = vrot.slane %v940, 5
      %v943 = vsel %vm442, %v938, %v942
      %v945 = vshrl.u32 %v676, 16
      %v947 = vrot.slane %v945, 4
      %v948 = vshll.u32 %v676, 16
      %v950 = vrot.slane %v948, 5
      %v951 = vor.u32 %v947, %v950
      %v952 = vrot.slane %v951, 4
      %v954 = vshll.u32 %v677, 16
      %v956 = vrot.slane %v954, 5
      %v957 = vsel %vm442, %v952, %v956
      %v959 = vshrl.u32 %v678, 16
      %v961 = vrot.slane %v959, 4
      %v962 = vshll.u32 %v678, 16
      %v964 = vrot.slane %v962, 5
      %v965 = vor.u32 %v961, %v964
      %v966 = vrot.slane %v965, 4
      %v968 = vshll.u32 %v679, 16
      %v970 = vrot.slane %v968, 5
      %v971 = vsel %vm442, %v966, %v970
      %v973 = vshrl.u32 %v680, 16
      %v975 = vrot.slane %v973, 4
      %v976 = vshll.u32 %v680, 16
      %v978 = vrot.slane %v976, 5
      %v979 = vor.u32 %v975, %v978
      %v980 = vrot.slane %v979, 4
      %v982 = vshll.u32 %v681, 16
      %v984 = vrot.slane %v982, 5
      %v985 = vsel %vm442, %v980, %v984
      %v987 = vshrl.u32 %v682, 16
      %v989 = vrot.slane %v987, 4
      %v990 = vshll.u32 %v682, 16
      %v992 = vrot.slane %v990, 5
      %v993 = vor.u32 %v989, %v992
      %v994 = vrot.slane %v993, 4
      %v996 = vshll.u32 %v683, 16
      %v998 = vrot.slane %v996, 5
      %v999 = vsel %vm442, %v994, %v998
      %v1001 = vshrl.u32 %v684, 16
      %v1003 = vrot.slane %v1001, 4
      %v1004 = vshll.u32 %v684, 16
      %v1006 = vrot.slane %v1004, 5
      %v1007 = vor.u32 %v1003, %v1006
      %v1008 = vrot.slane %v1007, 4
      %v1010 = vshll.u32 %v685, 16
      %v1012 = vrot.slane %v1010, 5
      %v1013 = vsel %vm442, %v1008, %v1012
      %v1015 = vshrl.u32 %v686, 16
      %v1017 = vrot.slane %v1015, 4
      %v1018 = vshll.u32 %v686, 16
      %v1020 = vrot.slane %v1018, 5
      %v1021 = vor.u32 %v1017, %v1020
      %v1022 = vrot.slane %v1021, 4
      %v1024 = vshll.u32 %v687, 16
      %v1026 = vrot.slane %v1024, 5
      %v1027 = vsel %vm442, %v1022, %v1026
      %v1029 = vshrl.u32 %v688, 16
      %v1031 = vrot.slane %v1029, 4
      %v1032 = vshll.u32 %v688, 16
      %v1034 = vrot.slane %v1032, 5
      %v1035 = vor.u32 %v1031, %v1034
      %v1036 = vrot.slane %v1035, 4
      %v1038 = vshll.u32 %v689, 16
      %v1040 = vrot.slane %v1038, 5
      %v1041 = vsel %vm442, %v1036, %v1040
      %s1042 = scalar_lea.vmem %s1, 20
      %v1043 = vld [vmem:[%s1042] sm:$0xf]
      %v1044 = vunpack.c.l.b16 %v943
      %v1045 = vunpack.c.l.b16 %v957
      %v1046 = vunpack.c.l.b16 %v971
      %v1047 = vunpack.c.l.b16 %v985
      %v1048 = vunpack.c.l.b16 %v999
      %v1049 = vunpack.c.l.b16 %v1013
      %v1050 = vunpack.c.l.b16 %v1027
      %v1051 = vunpack.c.l.b16 %v1041
      %v1052 = vpack.c.b16 %v1045, %v1044
      %v1053 = vpack.c.b16 %v1047, %v1046
      %v1054 = vpack.c.b16 %v1049, %v1048
      %v1055 = vpack.c.b16 %v1051, %v1050
      %v1057 = vsel %vm236, %v1052, 0
      %v1060 = vsel %vm236, %v1053, 0
      %v1063 = vsel %vm236, %v1054, 0
      %v1066 = vsel %vm236, %v1055, 0
      %v1069 = vsel %vm249, %v1043, 0
      %1071 = vmatprep.subr.bf16.mxu0 0
      %1072 = vmatpush1.bf16.msra.mxu0 0
      %1073 = vmatprep.subr.bf16.mxu0 0
      %1074 = vmatpush1.bf16.msra.mxu0 0
      %1075 = vmatprep.subr.bf16.mxu0 0
      %1076 = vmatpush1.bf16.msra.mxu0 0
      %1077 = vmatprep.subr.bf16.mxu0 0
      %1078 = vmatpush1.bf16.msra.mxu0 0
      %1079 = vmatprep.subr.bf16.mxu0 0
      %1080 = vmatpush1.bf16.msra.mxu0 0
      %1081 = vmatprep.subr.bf16.mxu0 0
      %1082 = vmatpush1.bf16.msra.mxu0 0
      %1083 = vmatprep.subr.bf16.mxu0 0
      %1084 = vmatpush1.bf16.msra.mxu0 0
      %1085 = vmatprep.subr.bf16.mxu0 0
      %1086 = vmatpush1.bf16.msra.mxu0 %v1069
      %1087 = vmatprep.subr.bf16.mxu0 0
      %1088 = vmatpush2.bf16.msra.mxu0 0
      %1089 = vmatprep.subr.bf16.mxu0 0
      %1090 = vmatpush2.bf16.msra.mxu0 0
      %1091 = vmatprep.subr.bf16.mxu0 0
      %1092 = vmatpush2.bf16.msra.mxu0 0
      %1093 = vmatprep.subr.bf16.mxu0 0
      %1094 = vmatpush2.bf16.msra.mxu0 0
      %1095 = vmatprep.subr.bf16.mxu0 0
      %1096 = vmatpush2.bf16.msra.mxu0 0
      %1097 = vmatprep.subr.bf16.mxu0 0
      %1098 = vmatpush2.bf16.msra.mxu0 0
      %1099 = vmatprep.subr.bf16.mxu0 0
      %1100 = vmatpush2.bf16.msra.mxu0 0
      %1101 = vmatprep.subr.bf16.mxu0 0
      %1102 = vmatpush2.bf16.msra.mxu0 0
      %1103 = vmatprep.mubr.bf16.mxu0 0
      %1104 = vmatmul.mubr.bf16.gmra.mxu0 %v1057
      %v1105 = vpop.f32.mrf.mxu0
      %v1106 = vadd.f32 0.0, %v1105
      %v1107 = vpop.f32.mrf.mxu0
      %v1108 = vpop.f32.mrf.mxu0
      %v1109 = vadd.f32 0.0, %v1108
      %v1110 = vpop.f32.mrf.mxu0
      %1111 = vmatprep.mubr.bf16.mxu0 0
      %1112 = vmatmul.mubr.bf16.gmra.mxu0 %v1060
      %v1113 = vpop.f32.mrf.mxu0
      %v1114 = vadd.f32 0.0, %v1113
      %v1115 = vpop.f32.mrf.mxu0
      %v1116 = vpop.f32.mrf.mxu0
      %v1117 = vadd.f32 0.0, %v1116
      %v1118 = vpop.f32.mrf.mxu0
      %1119 = vmatprep.mubr.bf16.mxu0 0
      %1120 = vmatmul.mubr.bf16.gmra.mxu0 %v1063
      %v1121 = vpop.f32.mrf.mxu0
      %v1122 = vadd.f32 0.0, %v1121
      %v1123 = vpop.f32.mrf.mxu0
      %v1124 = vpop.f32.mrf.mxu0
      %v1125 = vadd.f32 0.0, %v1124
      %v1126 = vpop.f32.mrf.mxu0
      %1127 = vmatprep.mubr.bf16.mxu0 0
      %1128 = vmatmul.mubr.bf16.gmra.mxu0 %v1066
      %v1129 = vpop.f32.mrf.mxu0
      %v1130 = vadd.f32 0.0, %v1129
      %v1131 = vpop.f32.mrf.mxu0
      %v1132 = vpop.f32.mrf.mxu0
      %v1133 = vadd.f32 0.0, %v1132
      %v1134 = vpop.f32.mrf.mxu0
      %1135 = vdwg.mxu0
      %v1136 = vld [vmem:[#allocation2] sm:$0xff]
      %v1137 = vld [vmem:[#allocation2 + $0x8] sm:$0xff]
      %v1138 = vld [vmem:[#allocation2 + $0x10] sm:$0xff]
      %v1139 = vld [vmem:[#allocation2 + $0x18] sm:$0xff]
      %v1140 = vld [vmem:[#allocation2 + $0x20] sm:$0xff]
      %v1141 = vld [vmem:[#allocation2 + $0x28] sm:$0xff]
      %v1142 = vld [vmem:[#allocation2 + $0x30] sm:$0xff]
      %v1143 = vld [vmem:[#allocation2 + $0x38] sm:$0xff]
      %v1144 = vadd.f32 %v1136, %v1106
      %v1145 = vadd.f32 %v1137, %v1109
      %v1146 = vadd.f32 %v1138, %v1114
      %v1147 = vadd.f32 %v1139, %v1117
      %v1148 = vadd.f32 %v1140, %v1122
      %v1149 = vadd.f32 %v1141, %v1125
      %v1150 = vadd.f32 %v1142, %v1130
      %v1151 = vadd.f32 %v1143, %v1133
      %1152 = vst.msk [vmem:[#allocation2] sm:$0xff] %vm236, %v1144
      %1153 = vst.msk [vmem:[#allocation2 + $0x8] sm:$0xff] %vm236, %v1145
      %1154 = vst.msk [vmem:[#allocation2 + $0x10] sm:$0xff] %vm236, %v1146
      %1155 = vst.msk [vmem:[#allocation2 + $0x18] sm:$0xff] %vm236, %v1147
      %1156 = vst.msk [vmem:[#allocation2 + $0x20] sm:$0xff] %vm236, %v1148
      %1157 = vst.msk [vmem:[#allocation2 + $0x28] sm:$0xff] %vm236, %v1149
      %1158 = vst.msk [vmem:[#allocation2 + $0x30] sm:$0xff] %vm236, %v1150
      %1159 = vst.msk [vmem:[#allocation2 + $0x38] sm:$0xff] %vm236, %v1151
      %s1160 = scalar_lea.vmem %s192, 16
      %v1161 = vld [vmem:[%s1160] sm:$0xf]
      %v1162 = vld [vmem:[%s1160 + $0x4] sm:$0x1]
      %v1163 = vld [vmem:[%s1160 + $0x10] sm:$0xf]
      %v1164 = vld [vmem:[%s1160 + $0x14] sm:$0x1]
      %v1165 = vld [vmem:[%s1160 + $0x20] sm:$0xf]
      %v1166 = vld [vmem:[%s1160 + $0x24] sm:$0x1]
      %v1167 = vld [vmem:[%s1160 + $0x30] sm:$0xf]
      %v1168 = vld [vmem:[%s1160 + $0x34] sm:$0x1]
      %v1169 = vld [vmem:[%s1160 + $0x40] sm:$0xf]
      %v1170 = vld [vmem:[%s1160 + $0x44] sm:$0x1]
      %v1171 = vld [vmem:[%s1160 + $0x50] sm:$0xf]
      %v1172 = vld [vmem:[%s1160 + $0x54] sm:$0x1]
      %v1173 = vld [vmem:[%s1160 + $0x60] sm:$0xf]
      %v1174 = vld [vmem:[%s1160 + $0x64] sm:$0x1]
      %v1175 = vld [vmem:[%s1160 + $0x70] sm:$0xf]
      %v1176 = vld [vmem:[%s1160 + $0x74] sm:$0x1]
      %s1177 = scalar_lea.vmem %s1, 24
      %v1178 = vld [vmem:[%s1177] sm:$0xf]
      %v1187 = vunpack.c.l.b16 %v1161
      %v1188 = vunpack.c.l.b16 %v1163
      %v1189 = vunpack.c.l.b16 %v1165
      %v1190 = vunpack.c.l.b16 %v1167
      %v1191 = vunpack.c.l.b16 %v1169
      %v1192 = vunpack.c.l.b16 %v1171
      %v1193 = vunpack.c.l.b16 %v1173
      %v1194 = vunpack.c.l.b16 %v1175
      %v1195 = vpack.c.b16 %v1188, %v1187
      %v1196 = vpack.c.b16 %v1190, %v1189
      %v1197 = vpack.c.b16 %v1192, %v1191
      %v1198 = vpack.c.b16 %v1194, %v1193
      %v1200 = vsel %vm236, %v1195, 0
      %v1203 = vsel %vm236, %v1196, 0
      %v1206 = vsel %vm236, %v1197, 0
      %v1209 = vsel %vm236, %v1198, 0
      %v1212 = vsel %vm249, %v1178, 0
      %1214 = vmatprep.subr.bf16.mxu0 0
      %1215 = vmatpush1.bf16.msra.mxu0 0
      %1216 = vmatprep.subr.bf16.mxu0 0
      %1217 = vmatpush1.bf16.msra.mxu0 0
      %1218 = vmatprep.subr.bf16.mxu0 0
      %1219 = vmatpush1.bf16.msra.mxu0 0
      %1220 = vmatprep.subr.bf16.mxu0 0
      %1221 = vmatpush1.bf16.msra.mxu0 0
      %1222 = vmatprep.subr.bf16.mxu0 0
      %1223 = vmatpush1.bf16.msra.mxu0 0
      %1224 = vmatprep.subr.bf16.mxu0 0
      %1225 = vmatpush1.bf16.msra.mxu0 0
      %1226 = vmatprep.subr.bf16.mxu0 0
      %1227 = vmatpush1.bf16.msra.mxu0 0
      %1228 = vmatprep.subr.bf16.mxu0 0
      %1229 = vmatpush1.bf16.msra.mxu0 %v1212
      %1230 = vmatprep.subr.bf16.mxu0 0
      %1231 = vmatpush2.bf16.msra.mxu0 0
      %1232 = vmatprep.subr.bf16.mxu0 0
      %1233 = vmatpush2.bf16.msra.mxu0 0
      %1234 = vmatprep.subr.bf16.mxu0 0
      %1235 = vmatpush2.bf16.msra.mxu0 0
      %1236 = vmatprep.subr.bf16.mxu0 0
      %1237 = vmatpush2.bf16.msra.mxu0 0
      %1238 = vmatprep.subr.bf16.mxu0 0
      %1239 = vmatpush2.bf16.msra.mxu0 0
      %1240 = vmatprep.subr.bf16.mxu0 0
      %1241 = vmatpush2.bf16.msra.mxu0 0
      %1242 = vmatprep.subr.bf16.mxu0 0
      %1243 = vmatpush2.bf16.msra.mxu0 0
      %1244 = vmatprep.subr.bf16.mxu0 0
      %1245 = vmatpush2.bf16.msra.mxu0 0
      %1246 = vmatprep.mubr.bf16.mxu0 0
      %1247 = vmatmul.mubr.bf16.gmra.mxu0 %v1200
      %v1248 = vpop.f32.mrf.mxu0
      %v1249 = vadd.f32 0.0, %v1248
      %v1250 = vpop.f32.mrf.mxu0
      %v1251 = vpop.f32.mrf.mxu0
      %v1252 = vadd.f32 0.0, %v1251
      %v1253 = vpop.f32.mrf.mxu0
      %1254 = vmatprep.mubr.bf16.mxu0 0
      %1255 = vmatmul.mubr.bf16.gmra.mxu0 %v1203
      %v1256 = vpop.f32.mrf.mxu0
      %v1257 = vadd.f32 0.0, %v1256
      %v1258 = vpop.f32.mrf.mxu0
      %v1259 = vpop.f32.mrf.mxu0
      %v1260 = vadd.f32 0.0, %v1259
      %v1261 = vpop.f32.mrf.mxu0
      %1262 = vmatprep.mubr.bf16.mxu0 0
      %1263 = vmatmul.mubr.bf16.gmra.mxu0 %v1206
      %v1264 = vpop.f32.mrf.mxu0
      %v1265 = vadd.f32 0.0, %v1264
      %v1266 = vpop.f32.mrf.mxu0
      %v1267 = vpop.f32.mrf.mxu0
      %v1268 = vadd.f32 0.0, %v1267
      %v1269 = vpop.f32.mrf.mxu0
      %1270 = vmatprep.mubr.bf16.mxu0 0
      %1271 = vmatmul.mubr.bf16.gmra.mxu0 %v1209
      %v1272 = vpop.f32.mrf.mxu0
      %v1273 = vadd.f32 0.0, %v1272
      %v1274 = vpop.f32.mrf.mxu0
      %v1275 = vpop.f32.mrf.mxu0
      %v1276 = vadd.f32 0.0, %v1275
      %v1277 = vpop.f32.mrf.mxu0
      %1278 = vdwg.mxu0
      %v1279 = vld [vmem:[#allocation2] sm:$0xff]
      %v1280 = vld [vmem:[#allocation2 + $0x8] sm:$0xff]
      %v1281 = vld [vmem:[#allocation2 + $0x10] sm:$0xff]
      %v1282 = vld [vmem:[#allocation2 + $0x18] sm:$0xff]
      %v1283 = vld [vmem:[#allocation2 + $0x20] sm:$0xff]
      %v1284 = vld [vmem:[#allocation2 + $0x28] sm:$0xff]
      %v1285 = vld [vmem:[#allocation2 + $0x30] sm:$0xff]
      %v1286 = vld [vmem:[#allocation2 + $0x38] sm:$0xff]
      %v1287 = vadd.f32 %v1279, %v1249
      %v1288 = vadd.f32 %v1280, %v1252
      %v1289 = vadd.f32 %v1281, %v1257
      %v1290 = vadd.f32 %v1282, %v1260
      %v1291 = vadd.f32 %v1283, %v1265
      %v1292 = vadd.f32 %v1284, %v1268
      %v1293 = vadd.f32 %v1285, %v1273
      %v1294 = vadd.f32 %v1286, %v1276
      %1295 = vst.msk [vmem:[#allocation2] sm:$0xff] %vm236, %v1287
      %1296 = vst.msk [vmem:[#allocation2 + $0x8] sm:$0xff] %vm236, %v1288
      %1297 = vst.msk [vmem:[#allocation2 + $0x10] sm:$0xff] %vm236, %v1289
      %1298 = vst.msk [vmem:[#allocation2 + $0x18] sm:$0xff] %vm236, %v1290
      %1299 = vst.msk [vmem:[#allocation2 + $0x20] sm:$0xff] %vm236, %v1291
      %1300 = vst.msk [vmem:[#allocation2 + $0x28] sm:$0xff] %vm236, %v1292
      %1301 = vst.msk [vmem:[#allocation2 + $0x30] sm:$0xff] %vm236, %v1293
      %1302 = vst.msk [vmem:[#allocation2 + $0x38] sm:$0xff] %vm236, %v1294
      %s1303 = scalar_lea.vmem %s1, 28
      %v1304 = vld [vmem:[%s1303] sm:$0xf]
      %1305 = vrot.lane.b32.xlu0 %v1195, 120
      %v1306 = vpop.permute.xlu0 %1305
      %1307 = vrot.lane.b32.xlu0 %v1196, 120
      %v1308 = vpop.permute.xlu0 %1307
      %1309 = vrot.lane.b32.xlu0 %v1197, 120
      %v1310 = vpop.permute.xlu0 %1309
      %1311 = vrot.lane.b32.xlu0 %v1198, 120
      %v1312 = vpop.permute.xlu0 %1311
      %v1314 = vsel %vm236, %v1306, 0
      %v1317 = vsel %vm236, %v1308, 0
      %v1320 = vsel %vm236, %v1310, 0
      %v1323 = vsel %vm236, %v1312, 0
      %v1326 = vsel %vm249, %v1304, 0
      %1328 = vmatprep.subr.bf16.mxu0 0
      %1329 = vmatpush1.bf16.msra.mxu0 0
      %1330 = vmatprep.subr.bf16.mxu0 0
      %1331 = vmatpush1.bf16.msra.mxu0 0
      %1332 = vmatprep.subr.bf16.mxu0 0
      %1333 = vmatpush1.bf16.msra.mxu0 0
      %1334 = vmatprep.subr.bf16.mxu0 0
      %1335 = vmatpush1.bf16.msra.mxu0 0
      %1336 = vmatprep.subr.bf16.mxu0 0
      %1337 = vmatpush1.bf16.msra.mxu0 0
      %1338 = vmatprep.subr.bf16.mxu0 0
      %1339 = vmatpush1.bf16.msra.mxu0 0
      %1340 = vmatprep.subr.bf16.mxu0 0
      %1341 = vmatpush1.bf16.msra.mxu0 0
      %1342 = vmatprep.subr.bf16.mxu0 0
      %1343 = vmatpush1.bf16.msra.mxu0 %v1326
      %1344 = vmatprep.subr.bf16.mxu0 0
      %1345 = vmatpush2.bf16.msra.mxu0 0
      %1346 = vmatprep.subr.bf16.mxu0 0
      %1347 = vmatpush2.bf16.msra.mxu0 0
      %1348 = vmatprep.subr.bf16.mxu0 0
      %1349 = vmatpush2.bf16.msra.mxu0 0
      %1350 = vmatprep.subr.bf16.mxu0 0
      %1351 = vmatpush2.bf16.msra.mxu0 0
      %1352 = vmatprep.subr.bf16.mxu0 0
      %1353 = vmatpush2.bf16.msra.mxu0 0
      %1354 = vmatprep.subr.bf16.mxu0 0
      %1355 = vmatpush2.bf16.msra.mxu0 0
      %1356 = vmatprep.subr.bf16.mxu0 0
      %1357 = vmatpush2.bf16.msra.mxu0 0
      %1358 = vmatprep.subr.bf16.mxu0 0
      %1359 = vmatpush2.bf16.msra.mxu0 0
      %1360 = vmatprep.mubr.bf16.mxu0 0
      %1361 = vmatmul.mubr.bf16.gmra.mxu0 %v1314
      %v1362 = vpop.f32.mrf.mxu0
      %v1363 = vadd.f32 0.0, %v1362
      %v1364 = vpop.f32.mrf.mxu0
      %v1365 = vpop.f32.mrf.mxu0
      %v1366 = vadd.f32 0.0, %v1365
      %v1367 = vpop.f32.mrf.mxu0
      %1368 = vmatprep.mubr.bf16.mxu0 0
      %1369 = vmatmul.mubr.bf16.gmra.mxu0 %v1317
      %v1370 = vpop.f32.mrf.mxu0
      %v1371 = vadd.f32 0.0, %v1370
      %v1372 = vpop.f32.mrf.mxu0
      %v1373 = vpop.f32.mrf.mxu0
      %v1374 = vadd.f32 0.0, %v1373
      %v1375 = vpop.f32.mrf.mxu0
      %1376 = vmatprep.mubr.bf16.mxu0 0
      %1377 = vmatmul.mubr.bf16.gmra.mxu0 %v1320
      %v1378 = vpop.f32.mrf.mxu0
      %v1379 = vadd.f32 0.0, %v1378
      %v1380 = vpop.f32.mrf.mxu0
      %v1381 = vpop.f32.mrf.mxu0
      %v1382 = vadd.f32 0.0, %v1381
      %v1383 = vpop.f32.mrf.mxu0
      %1384 = vmatprep.mubr.bf16.mxu0 0
      %1385 = vmatmul.mubr.bf16.gmra.mxu0 %v1323
      %v1386 = vpop.f32.mrf.mxu0
      %v1387 = vadd.f32 0.0, %v1386
      %v1388 = vpop.f32.mrf.mxu0
      %v1389 = vpop.f32.mrf.mxu0
      %v1390 = vadd.f32 0.0, %v1389
      %v1391 = vpop.f32.mrf.mxu0
      %1392 = vdwg.mxu0
      %v1393 = vld [vmem:[#allocation2] sm:$0xff]
      %v1394 = vld [vmem:[#allocation2 + $0x8] sm:$0xff]
      %v1395 = vld [vmem:[#allocation2 + $0x10] sm:$0xff]
      %v1396 = vld [vmem:[#allocation2 + $0x18] sm:$0xff]
      %v1397 = vld [vmem:[#allocation2 + $0x20] sm:$0xff]
      %v1398 = vld [vmem:[#allocation2 + $0x28] sm:$0xff]
      %v1399 = vld [vmem:[#allocation2 + $0x30] sm:$0xff]
      %v1400 = vld [vmem:[#allocation2 + $0x38] sm:$0xff]
      %v1401 = vadd.f32 %v1393, %v1363
      %v1402 = vadd.f32 %v1394, %v1366
      %v1403 = vadd.f32 %v1395, %v1371
      %v1404 = vadd.f32 %v1396, %v1374
      %v1405 = vadd.f32 %v1397, %v1379
      %v1406 = vadd.f32 %v1398, %v1382
      %v1407 = vadd.f32 %v1399, %v1387
      %v1408 = vadd.f32 %v1400, %v1390
      %1409 = vst.msk [vmem:[#allocation2] sm:$0xff] %vm236, %v1401
      %1410 = vst.msk [vmem:[#allocation2 + $0x8] sm:$0xff] %vm236, %v1402
      %1411 = vst.msk [vmem:[#allocation2 + $0x10] sm:$0xff] %vm236, %v1403
      %1412 = vst.msk [vmem:[#allocation2 + $0x18] sm:$0xff] %vm236, %v1404
      %1413 = vst.msk [vmem:[#allocation2 + $0x20] sm:$0xff] %vm236, %v1405
      %1414 = vst.msk [vmem:[#allocation2 + $0x28] sm:$0xff] %vm236, %v1406
      %1415 = vst.msk [vmem:[#allocation2 + $0x30] sm:$0xff] %vm236, %v1407
      %1416 = vst.msk [vmem:[#allocation2 + $0x38] sm:$0xff] %vm236, %v1408
      %v1418 = vshrl.u32 %v1161, 16
      %v1420 = vrot.slane %v1418, 4
      %v1421 = vshll.u32 %v1161, 16
      %v1423 = vrot.slane %v1421, 5
      %v1424 = vor.u32 %v1420, %v1423
      %v1425 = vrot.slane %v1424, 4
      %v1427 = vshll.u32 %v1162, 16
      %v1429 = vrot.slane %v1427, 5
      %v1430 = vsel %vm442, %v1425, %v1429
      %v1432 = vshrl.u32 %v1163, 16
      %v1434 = vrot.slane %v1432, 4
      %v1435 = vshll.u32 %v1163, 16
      %v1437 = vrot.slane %v1435, 5
      %v1438 = vor.u32 %v1434, %v1437
      %v1439 = vrot.slane %v1438, 4
      %v1441 = vshll.u32 %v1164, 16
      %v1443 = vrot.slane %v1441, 5
      %v1444 = vsel %vm442, %v1439, %v1443
      %v1446 = vshrl.u32 %v1165, 16
      %v1448 = vrot.slane %v1446, 4
      %v1449 = vshll.u32 %v1165, 16
      %v1451 = vrot.slane %v1449, 5
      %v1452 = vor.u32 %v1448, %v1451
      %v1453 = vrot.slane %v1452, 4
      %v1455 = vshll.u32 %v1166, 16
      %v1457 = vrot.slane %v1455, 5
      %v1458 = vsel %vm442, %v1453, %v1457
      %v1460 = vshrl.u32 %v1167, 16
      %v1462 = vrot.slane %v1460, 4
      %v1463 = vshll.u32 %v1167, 16
      %v1465 = vrot.slane %v1463, 5
      %v1466 = vor.u32 %v1462, %v1465
      %v1467 = vrot.slane %v1466, 4
      %v1469 = vshll.u32 %v1168, 16
      %v1471 = vrot.slane %v1469, 5
      %v1472 = vsel %vm442, %v1467, %v1471
      %v1474 = vshrl.u32 %v1169, 16
      %v1476 = vrot.slane %v1474, 4
      %v1477 = vshll.u32 %v1169, 16
      %v1479 = vrot.slane %v1477, 5
      %v1480 = vor.u32 %v1476, %v1479
      %v1481 = vrot.slane %v1480, 4
      %v1483 = vshll.u32 %v1170, 16
      %v1485 = vrot.slane %v1483, 5
      %v1486 = vsel %vm442, %v1481, %v1485
      %v1488 = vshrl.u32 %v1171, 16
      %v1490 = vrot.slane %v1488, 4
      %v1491 = vshll.u32 %v1171, 16
      %v1493 = vrot.slane %v1491, 5
      %v1494 = vor.u32 %v1490, %v1493
      %v1495 = vrot.slane %v1494, 4
      %v1497 = vshll.u32 %v1172, 16
      %v1499 = vrot.slane %v1497, 5
      %v1500 = vsel %vm442, %v1495, %v1499
      %v1502 = vshrl.u32 %v1173, 16
      %v1504 = vrot.slane %v1502, 4
      %v1505 = vshll.u32 %v1173, 16
      %v1507 = vrot.slane %v1505, 5
      %v1508 = vor.u32 %v1504, %v1507
      %v1509 = vrot.slane %v1508, 4
      %v1511 = vshll.u32 %v1174, 16
      %v1513 = vrot.slane %v1511, 5
      %v1514 = vsel %vm442, %v1509, %v1513
      %v1516 = vshrl.u32 %v1175, 16
      %v1518 = vrot.slane %v1516, 4
      %v1519 = vshll.u32 %v1175, 16
      %v1521 = vrot.slane %v1519, 5
      %v1522 = vor.u32 %v1518, %v1521
      %v1523 = vrot.slane %v1522, 4
      %v1525 = vshll.u32 %v1176, 16
      %v1527 = vrot.slane %v1525, 5
      %v1528 = vsel %vm442, %v1523, %v1527
      %s1529 = scalar_lea.vmem %s1, 32
      %v1530 = vld [vmem:[%s1529] sm:$0xf]
      %v1531 = vunpack.c.l.b16 %v1430
      %v1532 = vunpack.c.l.b16 %v1444
      %v1533 = vunpack.c.l.b16 %v1458
      %v1534 = vunpack.c.l.b16 %v1472
      %v1535 = vunpack.c.l.b16 %v1486
      %v1536 = vunpack.c.l.b16 %v1500
      %v1537 = vunpack.c.l.b16 %v1514
      %v1538 = vunpack.c.l.b16 %v1528
      %v1539 = vpack.c.b16 %v1532, %v1531
      %v1540 = vpack.c.b16 %v1534, %v1533
      %v1541 = vpack.c.b16 %v1536, %v1535
      %v1542 = vpack.c.b16 %v1538, %v1537
      %v1544 = vsel %vm236, %v1539, 0
      %v1547 = vsel %vm236, %v1540, 0
      %v1550 = vsel %vm236, %v1541, 0
      %v1553 = vsel %vm236, %v1542, 0
      %v1556 = vsel %vm249, %v1530, 0
      %1558 = vmatprep.subr.bf16.mxu0 0
      %1559 = vmatpush1.bf16.msra.mxu0 0
      %1560 = vmatprep.subr.bf16.mxu0 0
      %1561 = vmatpush1.bf16.msra.mxu0 0
      %1562 = vmatprep.subr.bf16.mxu0 0
      %1563 = vmatpush1.bf16.msra.mxu0 0
      %1564 = vmatprep.subr.bf16.mxu0 0
      %1565 = vmatpush1.bf16.msra.mxu0 0
      %1566 = vmatprep.subr.bf16.mxu0 0
      %1567 = vmatpush1.bf16.msra.mxu0 0
      %1568 = vmatprep.subr.bf16.mxu0 0
      %1569 = vmatpush1.bf16.msra.mxu0 0
      %1570 = vmatprep.subr.bf16.mxu0 0
      %1571 = vmatpush1.bf16.msra.mxu0 0
      %1572 = vmatprep.subr.bf16.mxu0 0
      %1573 = vmatpush1.bf16.msra.mxu0 %v1556
      %1574 = vmatprep.subr.bf16.mxu0 0
      %1575 = vmatpush2.bf16.msra.mxu0 0
      %1576 = vmatprep.subr.bf16.mxu0 0
      %1577 = vmatpush2.bf16.msra.mxu0 0
      %1578 = vmatprep.subr.bf16.mxu0 0
      %1579 = vmatpush2.bf16.msra.mxu0 0
      %1580 = vmatprep.subr.bf16.mxu0 0
      %1581 = vmatpush2.bf16.msra.mxu0 0
      %1582 = vmatprep.subr.bf16.mxu0 0
      %1583 = vmatpush2.bf16.msra.mxu0 0
      %1584 = vmatprep.subr.bf16.mxu0 0
      %1585 = vmatpush2.bf16.msra.mxu0 0
      %1586 = vmatprep.subr.bf16.mxu0 0
      %1587 = vmatpush2.bf16.msra.mxu0 0
      %1588 = vmatprep.subr.bf16.mxu0 0
      %1589 = vmatpush2.bf16.msra.mxu0 0
      %1590 = vmatprep.mubr.bf16.mxu0 0
      %1591 = vmatmul.mubr.bf16.gmra.mxu0 %v1544
      %v1592 = vpop.f32.mrf.mxu0
      %v1593 = vadd.f32 0.0, %v1592
      %v1594 = vpop.f32.mrf.mxu0
      %v1595 = vpop.f32.mrf.mxu0
      %v1596 = vadd.f32 0.0, %v1595
      %v1597 = vpop.f32.mrf.mxu0
      %1598 = vmatprep.mubr.bf16.mxu0 0
      %1599 = vmatmul.mubr.bf16.gmra.mxu0 %v1547
      %v1600 = vpop.f32.mrf.mxu0
      %v1601 = vadd.f32 0.0, %v1600
      %v1602 = vpop.f32.mrf.mxu0
      %v1603 = vpop.f32.mrf.mxu0
      %v1604 = vadd.f32 0.0, %v1603
      %v1605 = vpop.f32.mrf.mxu0
      %1606 = vmatprep.mubr.bf16.mxu0 0
      %1607 = vmatmul.mubr.bf16.gmra.mxu0 %v1550
      %v1608 = vpop.f32.mrf.mxu0
      %v1609 = vadd.f32 0.0, %v1608
      %v1610 = vpop.f32.mrf.mxu0
      %v1611 = vpop.f32.mrf.mxu0
      %v1612 = vadd.f32 0.0, %v1611
      %v1613 = vpop.f32.mrf.mxu0
      %1614 = vmatprep.mubr.bf16.mxu0 0
      %1615 = vmatmul.mubr.bf16.gmra.mxu0 %v1553
      %v1616 = vpop.f32.mrf.mxu0
      %v1617 = vadd.f32 0.0, %v1616
      %v1618 = vpop.f32.mrf.mxu0
      %v1619 = vpop.f32.mrf.mxu0
      %v1620 = vadd.f32 0.0, %v1619
      %v1621 = vpop.f32.mrf.mxu0
      %1622 = vdwg.mxu0
      %v1623 = vld [vmem:[#allocation2] sm:$0xff]
      %v1624 = vld [vmem:[#allocation2 + $0x8] sm:$0xff]
      %v1625 = vld [vmem:[#allocation2 + $0x10] sm:$0xff]
      %v1626 = vld [vmem:[#allocation2 + $0x18] sm:$0xff]
      %v1627 = vld [vmem:[#allocation2 + $0x20] sm:$0xff]
      %v1628 = vld [vmem:[#allocation2 + $0x28] sm:$0xff]
      %v1629 = vld [vmem:[#allocation2 + $0x30] sm:$0xff]
      %v1630 = vld [vmem:[#allocation2 + $0x38] sm:$0xff]
      %v1631 = vadd.f32 %v1623, %v1593
      %v1632 = vadd.f32 %v1624, %v1596
      %v1633 = vadd.f32 %v1625, %v1601
      %v1634 = vadd.f32 %v1626, %v1604
      %v1635 = vadd.f32 %v1627, %v1609
      %v1636 = vadd.f32 %v1628, %v1612
      %v1637 = vadd.f32 %v1629, %v1617
      %v1638 = vadd.f32 %v1630, %v1620
      %1639 = vst.msk [vmem:[#allocation2] sm:$0xff] %vm236, %v1631
      %1640 = vst.msk [vmem:[#allocation2 + $0x8] sm:$0xff] %vm236, %v1632
      %1641 = vst.msk [vmem:[#allocation2 + $0x10] sm:$0xff] %vm236, %v1633
      %1642 = vst.msk [vmem:[#allocation2 + $0x18] sm:$0xff] %vm236, %v1634
      %1643 = vst.msk [vmem:[#allocation2 + $0x20] sm:$0xff] %vm236, %v1635
      %1644 = vst.msk [vmem:[#allocation2 + $0x28] sm:$0xff] %vm236, %v1636
      %1645 = vst.msk [vmem:[#allocation2 + $0x30] sm:$0xff] %vm236, %v1637
      %1646 = vst.msk [vmem:[#allocation2 + $0x38] sm:$0xff] %vm236, %v1638
      %v1647 = vld [vmem:[#allocation2] sm:$0xff]
      %v1648 = vld [vmem:[#allocation2 + $0x8] sm:$0xff]
      %v1649 = vld [vmem:[#allocation2 + $0x10] sm:$0xff]
      %v1650 = vld [vmem:[#allocation2 + $0x18] sm:$0xff]
      %v1651 = vld [vmem:[#allocation2 + $0x20] sm:$0xff]
      %v1652 = vld [vmem:[#allocation2 + $0x28] sm:$0xff]
      %v1653 = vld [vmem:[#allocation2 + $0x30] sm:$0xff]
      %v1654 = vld [vmem:[#allocation2 + $0x38] sm:$0xff]
      %v1655 = vld [vmem:[%s2] sm:$0x1]
      %v1657 = vlaneseq
      %v1658 = vshrl.u32 %v1657, 7
      %v1659 = vsub.s32 0, %v1658
      %v1660 = vrot.slane %v1655, %v1659
      %v1662 = vmul.f32 %v1647, %v1660
      %v1663 = vmul.f32 %v1648, %v1660
      %v1664 = vmul.f32 %v1649, %v1660
      %v1665 = vmul.f32 %v1650, %v1660
      %v1666 = vmul.f32 %v1651, %v1660
      %v1667 = vmul.f32 %v1652, %v1660
      %v1668 = vmul.f32 %v1653, %v1660
      %v1669 = vmul.f32 %v1654, %v1660
      %v1670 = vld [vmem:[%s3] sm:$0x1]
      %v1672 = vlaneseq
      %v1673 = vshrl.u32 %v1672, 7
      %v1674 = vsub.s32 0, %v1673
      %v1675 = vrot.slane %v1670, %v1674
      %v1677 = vadd.f32 %v1662, %v1675
      %v1678 = vadd.f32 %v1663, %v1675
      %v1679 = vadd.f32 %v1664, %v1675
      %v1680 = vadd.f32 %v1665, %v1675
      %v1681 = vadd.f32 %v1666, %v1675
      %v1682 = vadd.f32 %v1667, %v1675
      %v1683 = vadd.f32 %v1668, %v1675
      %v1684 = vadd.f32 %v1669, %v1675
      %v1685 = vmax.f32 %v1677, 0.0
      %v1686 = vmax.f32 %v1678, 0.0
      %v1687 = vmax.f32 %v1679, 0.0
      %v1688 = vmax.f32 %v1680, 0.0
      %v1689 = vmax.f32 %v1681, 0.0
      %v1690 = vmax.f32 %v1682, 0.0
      %v1691 = vmax.f32 %v1683, 0.0
      %v1692 = vmax.f32 %v1684, 0.0
      %v1693 = vpack.c.bf16 %v1685, %v1685
      %v1694 = vpack.c.bf16 %v1686, %v1686
      %v1695 = vpack.c.bf16 %v1687, %v1687
      %v1696 = vpack.c.bf16 %v1688, %v1688
      %v1697 = vpack.c.bf16 %v1689, %v1689
      %v1698 = vpack.c.bf16 %v1690, %v1690
      %v1699 = vpack.c.bf16 %v1691, %v1691
      %v1700 = vpack.c.bf16 %v1692, %v1692
      %vm1701 = vcmask 60416
      %1702 = vst.msk [vmem:[%s197] sm:$0xf] %vm1701, %v1693
      %1703 = vst.msk [vmem:[%s197 + $0x4] sm:$0xf] %vm1701, %v1694
      %1704 = vst.msk [vmem:[%s197 + $0x8] sm:$0xf] %vm1701, %v1695
      %1705 = vst.msk [vmem:[%s197 + $0xc] sm:$0xf] %vm1701, %v1696
      %1706 = vst.msk [vmem:[%s197 + $0x10] sm:$0xf] %vm1701, %v1697
      %1707 = vst.msk [vmem:[%s197 + $0x14] sm:$0xf] %vm1701, %v1698
      %1708 = vst.msk [vmem:[%s197 + $0x18] sm:$0xf] %vm1701, %v1699
      %1709 = vst.msk [vmem:[%s197 + $0x1c] sm:$0xf] %vm1701, %v1700
      %p1710 = scmp.lt.s32.totalorder %s15, 1
      %s1711 = scalar_select %p1710, %s15, 1
      %s1712 = smul.addr %s1711, 8
      %s1713 = smul.addr %s1712, 4
      %s1714 = scalar_lea.vmem %s4, %s1713
      // Predicated region
      $region37: #{preact_bottleneck.6} parent=35 // pred_check
        %p1715 = pneg %p122
      $region38: #{preact_bottleneck.6} parent=35 // pred_check_branch
        %1717 = sbr.rel (%p1715) target = $region40
      $region39: #{preact_bottleneck.6} parent=35 // pred_region
        _
      $region40: #{preact_bottleneck.6} parent=35 // pred_fallthru
        _
    $region36: #{preact_bottleneck.6} parent=5 // pred_fallthru
      _
    %p1718 = scmp.le.s32.totalorder 2, %s10
    // Predicated region
    $region41: #{preact_bottleneck.6} parent=5 // pred_check
      %p1719 = pneg %p1718
    $region42: #{preact_bottleneck.6} parent=5 // pred_check_branch
      %1721 = sbr.rel (%p1719) target = $region44
    $region43: #{preact_bottleneck.6} parent=5 // pred_region
      %s1722 = ssub.s32 %s10, 2
      // Predicated region
      $region45: #{preact_bottleneck.6} parent=43 // pred_check
        %p1723 = pneg %p128
      $region46: #{preact_bottleneck.6} parent=43 // pred_check_branch
        %1725 = sbr.rel (%p1723) target = $region48
      $region47: #{preact_bottleneck.6} parent=43 // pred_region
        %p1726 = scmp.lt.s32.totalorder %s16, 1
        %s1727 = scalar_select %p1726, %s16, 1
        %s1728 = smul.addr %s1727, 8
        %s1729 = smul.addr %s1728, 4
        %s1730 = scalar_lea.vmem %s4, %s1729
      $region48: #{preact_bottleneck.6} parent=43 // pred_fallthru
        _
    $region44: #{preact_bottleneck.6} parent=5 // pred_fallthru
      _
  $region6: #{preact_bottleneck.6} parent=0 // loop_footer
    %s14 = sadd.s32 1, %s10
  $region7: #{preact_bottleneck.6} parent=0 // loop_footer_branch
    %9 = sbr.rel target = $region3
  $region8: #{preact_bottleneck.6} parent=0 // loop_exit
    _

</llo_original>
